<compile_context>
chip_gen: v6e
topology: v6e:2x2x1
jax: 0.10.0
libtpu: 0.0.40
codegen_flags: <defaults>
</compile_context>

<pallas_src>
import functools
import numpy as np
import jax
import jax.numpy as jnp
from jax.experimental import pallas as pl
from jax.experimental.pallas import tpu as pltpu

LANES = 128


# ----------------------------- Pallas kernels ------------------------------ #

def _conv_bn_relu_kernel(p_ref, w_ref, g_ref, beta_ref, o_ref, *, eps):
    # p_ref: (M, K) bf16 im2col patches, w_ref: (K, 128) bf16, g/beta: (1, 128) f32.
    y = jnp.dot(p_ref[...], w_ref[...], preferred_element_type=jnp.float32)
    # Training-mode BatchNorm2d: batch statistics over the N*OH*OW rows, single pass.
    mean = jnp.mean(y, axis=0, keepdims=True)
    meansq = jnp.mean(y * y, axis=0, keepdims=True)
    var = jnp.maximum(meansq - mean * mean, 0.0)
    scale = g_ref[...] * jax.lax.rsqrt(var + eps)            # EUP rsqrt (free slot)
    shift = beta_ref[...] - mean * scale
    # Folded affine + ReLU in one elementwise pass. Zero-padded channels stay exactly 0
    # (zero weight columns -> y == 0, zero-padded gamma -> scale == 0, shift == 0).
    o_ref[...] = jnp.maximum(y * scale + shift, 0.0).astype(o_ref.dtype)


def _conv3_head_kernel(p_ref, w_ref, g_ref, beta_ref, wh_ref, bh_ref, o_ref, *,
                       eps, batch):
    # Fused conv3 + BN + ReLU + linear head. Patch rows are ordered (spatial_pos, n),
    # so rows [p*batch, (p+1)*batch) all belong to spatial position p.
    y = jnp.dot(p_ref[...], w_ref[...], preferred_element_type=jnp.float32)  # (P*B, 128)
    mean = jnp.mean(y, axis=0, keepdims=True)
    meansq = jnp.mean(y * y, axis=0, keepdims=True)
    var = jnp.maximum(meansq - mean * mean, 0.0)
    scale = g_ref[...] * jax.lax.rsqrt(var + eps)
    shift = beta_ref[...] - mean * scale
    a = jnp.maximum(y * scale + shift, 0.0).astype(jnp.bfloat16)             # (P*B, 128)

    n_pos = a.shape[0] // batch
    acc = jnp.zeros(o_ref.shape, jnp.float32)
    for p in range(n_pos):                        # static 4-iteration loop
        acc = acc + jnp.dot(a[p * batch:(p + 1) * batch, :], wh_ref[p],
                            preferred_element_type=jnp.float32)
    o_ref[...] = acc + bh_ref[...]


# ------------------------------ Pallas wrappers ---------------------------- #

def _full_spec(shape):
    nd = len(shape)
    return pl.BlockSpec(shape, lambda i, _nd=nd: (0,) * _nd)


def conv_bn_relu_matmul(patches, w_mat, gamma, beta, eps=1e-5):
    M, K = patches.shape
    OCp = w_mat.shape[1]
    kernel = functools.partial(_conv_bn_relu_kernel, eps=eps)
    return pl.pallas_call(
        kernel,
        out_shape=jax.ShapeDtypeStruct((M, OCp), jnp.bfloat16),   # bf16 activation out
        grid=(1,),
        in_specs=[_full_spec((M, K)), _full_spec((K, OCp)),
                  _full_spec((1, OCp)), _full_spec((1, OCp))],
        out_specs=_full_spec((M, OCp)),
        compiler_params=pltpu.CompilerParams(dimension_semantics=("arbitrary",)),
    )(patches, w_mat, gamma, beta)


def conv3_head_matmul(patches, w_mat, gamma, beta, wh, bh, *, batch, eps=1e-5):
    M, K = patches.shape
    OCp = w_mat.shape[1]
    P, _, Np = wh.shape
    kernel = functools.partial(_conv3_head_kernel, eps=eps, batch=batch)
    return pl.pallas_call(
        kernel,
        out_shape=jax.ShapeDtypeStruct((batch, Np), jnp.float32),
        grid=(1,),
        in_specs=[_full_spec((M, K)), _full_spec((K, OCp)),
                  _full_spec((1, OCp)), _full_spec((1, OCp)),
                  _full_spec((P, OCp, Np)), _full_spec((1, Np))],
        out_specs=_full_spec((batch, Np)),
        compiler_params=pltpu.CompilerParams(dimension_semantics=("arbitrary",)),
    )(patches, w_mat, gamma, beta, wh, bh)


# ------------------------------- glue (JAX) -------------------------------- #

def conv2d_size_out(size, kernel_size=5, stride=2):
    return (size - (kernel_size - 1) - 1) // stride + 1


def _pad_lanes(x):
    pad = (-x.shape[-1]) % LANES
    if pad:
        x = jnp.pad(x, [(0, 0)] * (x.ndim - 1) + [(0, pad)])
    return x


def _im2col_nhwc(x, kh, kw, stride, real_c=None):
    # x: (N, H, W, C) -> patches (N, OH*OW, KH*KW*real_c); column order (ki, kj, c).
    # Slices padded channels back to the true count BEFORE the gather so the next layer's
    # contraction is over real data only (K = 400 / 800 instead of 3200).
    n, h, w, c = x.shape
    if real_c is not None and real_c != c:
        x = x[..., :real_c]
        c = real_c
    oh = (h - kh) // stride + 1
    ow = (w - kw) // stride + 1
    oy, ox = np.meshgrid(np.arange(oh), np.arange(ow), indexing="ij")
    ky, kx = np.meshgrid(np.arange(kh), np.arange(kw), indexing="ij")
    rows = stride * oy.reshape(-1, 1) + ky.reshape(1, -1)        # (OH*OW, KH*KW)
    cols = stride * ox.reshape(-1, 1) + kx.reshape(1, -1)
    idx = (rows * w + cols).astype(np.int32)
    patches = x.reshape(n, h * w, c)[:, idx, :]                  # (N, OH*OW, KH*KW, C)
    return patches.reshape(n, oh * ow, kh * kw * c), oh, ow


def conv_bn_relu_layer(x_nhwc, w_packed, gamma, beta, real_ic):
    n = x_nhwc.shape[0]
    patches, oh, ow = _im2col_nhwc(x_nhwc, 5, 5, 2, real_c=real_ic)
    p = _pad_lanes(patches.reshape(n * oh * ow, patches.shape[-1]))
    a = conv_bn_relu_matmul(p, w_packed, gamma, beta)
    return a.reshape(n, oh, ow, LANES)          # NHWC bf16, zero-padded channels


def dqn_forward(packed, x_nchw, *, channels=(3, 16, 32), outputs=4):
    n = x_nchw.shape[0]
    x = jnp.transpose(x_nchw, (0, 2, 3, 1)).astype(jnp.bfloat16)   # NCHW -> NHWC, bf16 once
    x = conv_bn_relu_layer(x, packed["w1"], packed["g1"], packed["beta1"], channels[0])
    x = conv_bn_relu_layer(x, packed["w2"], packed["g2"], packed["beta2"], channels[1])

    # Fused conv3 + BN + ReLU + head: patch rows ordered (spatial position, batch) so the
    # head reduces to one small matmul per conv3 output pixel inside the kernel.
    patches, oh, ow = _im2col_nhwc(x, 5, 5, 2, real_c=channels[2])   # (n, P3, 800)
    p = jnp.transpose(patches, (1, 0, 2)).reshape(oh * ow * n, -1)
    p = _pad_lanes(p)
    out = conv3_head_matmul(p, packed["w3"], packed["g3"], packed["beta3"],
                            packed["wh"], packed["bh"], batch=n)
    return out[:, :outputs]


# --------------------------- one-time weight packing ------------------------ #

def _pack_conv(w_oihw):
    oc, ic, kh, kw = w_oihw.shape
    wt = jnp.transpose(w_oihw, (2, 3, 1, 0)).reshape(kh * kw * ic, oc)   # (ki,kj,c) rows
    k_pad = (-wt.shape[0]) % LANES
    wt = jnp.pad(wt, ((0, k_pad), (0, LANES - oc)))
    return wt.astype(jnp.bfloat16)


def pack_params(params, h, w, outputs):
    """Done once outside the jitted forward: transposes / pads / bf16 casts."""
    packed = {}
    for i, (wk, gk, bk) in enumerate(
            [("w1", "g1", "beta1"), ("w2", "g2", "beta2"), ("w3", "g3", "beta3")], 1):
        oc = params[wk].shape[0]
        packed[f"w{i}"] = _pack_conv(params[wk])
        packed[f"g{i}"] = jnp.pad(params[gk], (0, LANES - oc)).reshape(1, LANES).astype(jnp.float32)
        packed[f"beta{i}"] = jnp.pad(params[bk], (0, LANES - oc)).reshape(1, LANES).astype(jnp.float32)

    convw = conv2d_size_out(conv2d_size_out(conv2d_size_out(w)))
    convh = conv2d_size_out(conv2d_size_out(conv2d_size_out(h)))
    oc3 = params["w3"].shape[0]
    # PyTorch flattens NCHW as (C, H, W); re-group the head weight per spatial position p,
    # laid out (p, c_pad, out_pad) so the fused kernel can do one matmul per position.
    wh = params["wh"].reshape(outputs, oc3, convh, convw)
    wh = jnp.transpose(wh, (2, 3, 1, 0)).reshape(convh * convw, oc3, outputs)
    wh = jnp.pad(wh, ((0, 0), (0, LANES - oc3), (0, LANES - outputs)))
    packed["wh"] = wh.astype(jnp.bfloat16)
    packed["bh"] = jnp.pad(params["bh"], (0, LANES - outputs)).reshape(1, LANES).astype(jnp.float32)
    return packed


# --------------------------------- init ------------------------------------ #

def init_params(key, h, w, outputs):
    convw = conv2d_size_out(conv2d_size_out(conv2d_size_out(w)))
    convh = conv2d_size_out(conv2d_size_out(conv2d_size_out(h)))
    linear_in = convw * convh * 32

    def conv_init(k, oc, ic, ksz):
        bound = 1.0 / np.sqrt(ic * ksz * ksz)
        kw_, kb_ = jax.random.split(k)
        w_ = jax.random.uniform(kw_, (oc, ic, ksz, ksz), jnp.float32, -bound, bound)
        b_ = jax.random.uniform(kb_, (oc,), jnp.float32, -bound, bound)
        return w_, b_

    k1, k2, k3, k4 = jax.random.split(key, 4)
    w1, b1 = conv_init(k1, 16, 3, 5)
    w2, b2 = conv_init(k2, 32, 16, 5)
    w3, b3 = conv_init(k3, 32, 32, 5)
    bound = 1.0 / np.sqrt(linear_in)
    kh_, kb_ = jax.random.split(k4)
    wh = jax.random.uniform(kh_, (outputs, linear_in), jnp.float32, -bound, bound)
    bh = jax.random.uniform(kb_, (outputs,), jnp.float32, -bound, bound)
    return dict(
        w1=w1, b1=b1, g1=jnp.ones(16), beta1=jnp.zeros(16),
        w2=w2, b2=b2, g2=jnp.ones(32), beta2=jnp.zeros(32),
        w3=w3, b3=b3, g3=jnp.ones(32), beta3=jnp.zeros(32),
        wh=wh, bh=bh,
    )


# --------------------------- pure-JAX reference ---------------------------- #

def reference_forward(params, x, eps=1e-5):
    def conv(x, w, b):
        y = jax.lax.conv_general_dilated(
            x, w, window_strides=(2, 2), padding="VALID",
            dimension_numbers=("NCHW", "OIHW", "NCHW"),
            precision=jax.lax.Precision.HIGHEST)
        return y + b.reshape(1, -1, 1, 1)

    def bn_relu(y, g, beta):
        mean = y.mean(axis=(0, 2, 3), keepdims=True)
        var = jnp.square(y - mean).mean(axis=(0, 2, 3), keepdims=True)
        yn = (y - mean) * jax.lax.rsqrt(var + eps)
        return jax.nn.relu(yn * g.reshape(1, -1, 1, 1) + beta.reshape(1, -1, 1, 1))

    x = bn_relu(conv(x, params["w1"], params["b1"]), params["g1"], params["beta1"])
    x = bn_relu(conv(x, params["w2"], params["b2"]), params["g2"], params["beta2"])
    x = bn_relu(conv(x, params["w3"], params["b3"]), params["g3"], params["beta3"])
    flat = x.reshape(x.shape[0], -1)
    return jnp.dot(flat, params["wh"].T, precision=jax.lax.Precision.HIGHEST) + params["bh"]


# ---------------------------------- main ----------------------------------- #

if __name__ == "__main__":
    B, C, H, W = 2, 3, 40, 40
    OUTPUTS = 4

    key = jax.random.PRNGKey(0)
    kx, kp = jax.random.split(key)
    x = jax.random.normal(kx, (B, C, H, W), jnp.float32)
    params = init_params(kp, H, W, OUTPUTS)

    # Pack weights once (outside the jitted forward) so no transpose/pad/cast runs per call.
    packed = jax.block_until_ready(pack_params(params, H, W, OUTPUTS))

    fwd = jax.jit(functools.partial(dqn_forward, channels=(3, 16, 32), outputs=OUTPUTS))
    out = jax.block_until_ready(fwd(packed, x))
    ref = jax.block_until_ready(reference_forward(params, x))

    assert out.shape == (B, OUTPUTS), out.shape
    # Tolerance accounts for bf16 MXU operands (vs the f32 HIGHEST reference) whose
    # ~0.4% rounding is amplified by three training-mode BN normalizations; structural
    # bugs would produce errors orders of magnitude larger.
    np.testing.assert_allclose(np.asarray(out), np.asarray(ref), atol=5e-2, rtol=5e-2)
    print("KERNEL_OK")
</pallas_src>

<mosaic_0001>
module attributes {stable_mosaic.version = 11 : i64} {
  func.func @_conv_bn_relu_kernel(%arg0: i32, %arg1: memref<648x128xbf16, #tpu.memory_space<vmem>>, %arg2: memref<128x128xbf16, #tpu.memory_space<vmem>>, %arg3: memref<1x128xf32, #tpu.memory_space<vmem>>, %arg4: memref<1x128xf32, #tpu.memory_space<vmem>>, %arg5: memref<648x128xbf16, #tpu.memory_space<vmem>>) attributes {dimension_semantics = [#tpu.dimension_semantics<arbitrary>], iteration_bounds = array<i64: 1>, scalar_prefetch = 0 : i64, scratch_operands = 0 : i64, tpu.core_type = #tpu.core_type<tc>, window_params = [{pipeline_mode = #tpu.pipeline_mode<synchronous>, transform_indices = @transform_0, window_bounds = array<i64: 648, 128>}, {pipeline_mode = #tpu.pipeline_mode<synchronous>, transform_indices = @transform_1, window_bounds = array<i64: 128, 128>}, {pipeline_mode = #tpu.pipeline_mode<synchronous>, transform_indices = @transform_2, window_bounds = array<i64: 1, 128>}, {pipeline_mode = #tpu.pipeline_mode<synchronous>, transform_indices = @transform_3, window_bounds = array<i64: 1, 128>}, {pipeline_mode = #tpu.pipeline_mode<synchronous>, transform_indices = @transform_4, window_bounds = array<i64: 648, 128>}]} {
    %c0 = arith.constant 0 : index
    %c0_0 = arith.constant 0 : index
    %0 = vector.load %arg1[%c0, %c0_0] : memref<648x128xbf16, #tpu.memory_space<vmem>>, vector<648x128xbf16>
    %c0_1 = arith.constant 0 : index
    %c0_2 = arith.constant 0 : index
    %1 = vector.load %arg2[%c0_1, %c0_2] : memref<128x128xbf16, #tpu.memory_space<vmem>>, vector<128x128xbf16>
    %cst = arith.constant dense<0.000000e+00> : vector<648x128xf32>
    %2 = tpu.matmul %0, %1, %cst {dimension_numbers = #tpu.dot_dimension_numbers<[1], [0], [0], [1], [0, 0, 1, 1], [], []>} : vector<648x128xbf16>, vector<128x128xbf16>, vector<648x128xf32> -> vector<648x128xf32>
    %cst_3 = arith.constant dense<0.000000e+00> : vector<128xf32>
    %3 = vector.multi_reduction <add>, %2, %cst_3 [0] : vector<648x128xf32> to vector<128xf32>
    %4 = vector.shape_cast %3 : vector<128xf32> to vector<1x128xf32>
    %cst_4 = arith.constant 6.480000e+02 : f32
    %5 = vector.broadcast %cst_4 : f32 to vector<1x128xf32>
    %6 = arith.divf %4, %5 : vector<1x128xf32>
    %7 = arith.mulf %2, %2 : vector<648x128xf32>
    %cst_5 = arith.constant dense<0.000000e+00> : vector<128xf32>
    %8 = vector.multi_reduction <add>, %7, %cst_5 [0] : vector<648x128xf32> to vector<128xf32>
    %9 = vector.shape_cast %8 : vector<128xf32> to vector<1x128xf32>
    %cst_6 = arith.constant 6.480000e+02 : f32
    %10 = vector.broadcast %cst_6 : f32 to vector<1x128xf32>
    %11 = arith.divf %9, %10 : vector<1x128xf32>
    %12 = arith.mulf %6, %6 : vector<1x128xf32>
    %13 = arith.subf %11, %12 : vector<1x128xf32>
    %cst_7 = arith.constant 0.000000e+00 : f32
    %14 = vector.broadcast %cst_7 : f32 to vector<1x128xf32>
    %15 = arith.maximumf %13, %14 : vector<1x128xf32>
    %c0_8 = arith.constant 0 : index
    %c0_9 = arith.constant 0 : index
    %16 = vector.load %arg3[%c0_8, %c0_9] : memref<1x128xf32, #tpu.memory_space<vmem>>, vector<1x128xf32>
    %cst_10 = arith.constant 9.99999974E-6 : f32
    %17 = vector.broadcast %cst_10 : f32 to vector<1x128xf32>
    %18 = arith.addf %15, %17 : vector<1x128xf32>
    %19 = math.rsqrt %18 : vector<1x128xf32>
    %20 = arith.mulf %16, %19 : vector<1x128xf32>
    %c0_11 = arith.constant 0 : index
    %c0_12 = arith.constant 0 : index
    %21 = vector.load %arg4[%c0_11, %c0_12] : memref<1x128xf32, #tpu.memory_space<vmem>>, vector<1x128xf32>
    %22 = arith.mulf %6, %20 : vector<1x128xf32>
    %23 = arith.subf %21, %22 : vector<1x128xf32>
    %24 = vector.broadcast %20 : vector<1x128xf32> to vector<648x128xf32>
    %25 = arith.mulf %2, %24 : vector<648x128xf32>
    %26 = vector.broadcast %23 : vector<1x128xf32> to vector<648x128xf32>
    %27 = arith.addf %25, %26 : vector<648x128xf32>
    %cst_13 = arith.constant 0.000000e+00 : f32
    %28 = vector.broadcast %cst_13 : f32 to vector<648x128xf32>
    %29 = arith.maximumf %27, %28 : vector<648x128xf32>
    %30 = arith.truncf %29 : vector<648x128xf32> to vector<648x128xbf16>
    %c0_14 = arith.constant 0 : index
    %c0_15 = arith.constant 0 : index
    %31 = vector.load %arg5[%c0_14, %c0_15] : memref<648x128xbf16, #tpu.memory_space<vmem>>, vector<648x128xbf16>
    tpu.vector_store %arg5[%c0_14, %c0_15], %30 {strides = array<i32>} : memref<648x128xbf16, #tpu.memory_space<vmem>>, vector<648x128xbf16>,
    return
  }
  func.func @transform_0(%arg0: i32) -> (i32, i32) {
    %c0_i32 = arith.constant 0 : i32
    %c0_i32_0 = arith.constant 0 : i32
    %c0_i32_1 = arith.constant 0 : i32
    return %c0_i32, %c0_i32_0 : i32, i32
  }
  func.func @transform_1(%arg0: i32) -> (i32, i32) {
    %c0_i32 = arith.constant 0 : i32
    %c0_i32_0 = arith.constant 0 : i32
    %c0_i32_1 = arith.constant 0 : i32
    return %c0_i32, %c0_i32_0 : i32, i32
  }
  func.func @transform_2(%arg0: i32) -> (i32, i32) {
    %c0_i32 = arith.constant 0 : i32
    %c0_i32_0 = arith.constant 0 : i32
    %c0_i32_1 = arith.constant 0 : i32
    return %c0_i32, %c0_i32_0 : i32, i32
  }
  func.func @transform_3(%arg0: i32) -> (i32, i32) {
    %c0_i32 = arith.constant 0 : i32
    %c0_i32_0 = arith.constant 0 : i32
    %c0_i32_1 = arith.constant 0 : i32
    return %c0_i32, %c0_i32_0 : i32, i32
  }
  func.func @transform_4(%arg0: i32) -> (i32, i32) {
    %c0_i32 = arith.constant 0 : i32
    %c0_i32_0 = arith.constant 0 : i32
    %c0_i32_1 = arith.constant 0 : i32
    return %c0_i32, %c0_i32_0 : i32, i32
  }
}

module attributes {stable_mosaic.version = 11 : i64} {
  func.func @_conv_bn_relu_kernel(%arg0: i32, %arg1: memref<98x512xbf16, #tpu.memory_space<vmem>>, %arg2: memref<512x128xbf16, #tpu.memory_space<vmem>>, %arg3: memref<1x128xf32, #tpu.memory_space<vmem>>, %arg4: memref<1x128xf32, #tpu.memory_space<vmem>>, %arg5: memref<98x128xbf16, #tpu.memory_space<vmem>>) attributes {dimension_semantics = [#tpu.dimension_semantics<arbitrary>], iteration_bounds = array<i64: 1>, scalar_prefetch = 0 : i64, scratch_operands = 0 : i64, tpu.core_type = #tpu.core_type<tc>, window_params = [{pipeline_mode = #tpu.pipeline_mode<synchronous>, transform_indices = @transform_0, window_bounds = array<i64: 98, 512>}, {pipeline_mode = #tpu.pipeline_mode<synchronous>, transform_indices = @transform_1, window_bounds = array<i64: 512, 128>}, {pipeline_mode = #tpu.pipeline_mode<synchronous>, transform_indices = @transform_2, window_bounds = array<i64: 1, 128>}, {pipeline_mode = #tpu.pipeline_mode<synchronous>, transform_indices = @transform_3, window_bounds = array<i64: 1, 128>}, {pipeline_mode = #tpu.pipeline_mode<synchronous>, transform_indices = @transform_4, window_bounds = array<i64: 98, 128>}]} {
    %c0 = arith.constant 0 : index
    %c0_0 = arith.constant 0 : index
    %0 = vector.load %arg1[%c0, %c0_0] : memref<98x512xbf16, #tpu.memory_space<vmem>>, vector<98x512xbf16>
    %c0_1 = arith.constant 0 : index
    %c0_2 = arith.constant 0 : index
    %1 = vector.load %arg2[%c0_1, %c0_2] : memref<512x128xbf16, #tpu.memory_space<vmem>>, vector<512x128xbf16>
    %cst = arith.constant dense<0.000000e+00> : vector<98x128xf32>
    %2 = tpu.matmul %0, %1, %cst {dimension_numbers = #tpu.dot_dimension_numbers<[1], [0], [0], [1], [0, 0, 1, 1], [], []>} : vector<98x512xbf16>, vector<512x128xbf16>, vector<98x128xf32> -> vector<98x128xf32>
    %cst_3 = arith.constant dense<0.000000e+00> : vector<128xf32>
    %3 = vector.multi_reduction <add>, %2, %cst_3 [0] : vector<98x128xf32> to vector<128xf32>
    %4 = vector.shape_cast %3 : vector<128xf32> to vector<1x128xf32>
    %cst_4 = arith.constant 9.800000e+01 : f32
    %5 = vector.broadcast %cst_4 : f32 to vector<1x128xf32>
    %6 = arith.divf %4, %5 : vector<1x128xf32>
    %7 = arith.mulf %2, %2 : vector<98x128xf32>
    %cst_5 = arith.constant dense<0.000000e+00> : vector<128xf32>
    %8 = vector.multi_reduction <add>, %7, %cst_5 [0] : vector<98x128xf32> to vector<128xf32>
    %9 = vector.shape_cast %8 : vector<128xf32> to vector<1x128xf32>
    %cst_6 = arith.constant 9.800000e+01 : f32
    %10 = vector.broadcast %cst_6 : f32 to vector<1x128xf32>
    %11 = arith.divf %9, %10 : vector<1x128xf32>
    %12 = arith.mulf %6, %6 : vector<1x128xf32>
    %13 = arith.subf %11, %12 : vector<1x128xf32>
    %cst_7 = arith.constant 0.000000e+00 : f32
    %14 = vector.broadcast %cst_7 : f32 to vector<1x128xf32>
    %15 = arith.maximumf %13, %14 : vector<1x128xf32>
    %c0_8 = arith.constant 0 : index
    %c0_9 = arith.constant 0 : index
    %16 = vector.load %arg3[%c0_8, %c0_9] : memref<1x128xf32, #tpu.memory_space<vmem>>, vector<1x128xf32>
    %cst_10 = arith.constant 9.99999974E-6 : f32
    %17 = vector.broadcast %cst_10 : f32 to vector<1x128xf32>
    %18 = arith.addf %15, %17 : vector<1x128xf32>
    %19 = math.rsqrt %18 : vector<1x128xf32>
    %20 = arith.mulf %16, %19 : vector<1x128xf32>
    %c0_11 = arith.constant 0 : index
    %c0_12 = arith.constant 0 : index
    %21 = vector.load %arg4[%c0_11, %c0_12] : memref<1x128xf32, #tpu.memory_space<vmem>>, vector<1x128xf32>
    %22 = arith.mulf %6, %20 : vector<1x128xf32>
    %23 = arith.subf %21, %22 : vector<1x128xf32>
    %24 = vector.broadcast %20 : vector<1x128xf32> to vector<98x128xf32>
    %25 = arith.mulf %2, %24 : vector<98x128xf32>
    %26 = vector.broadcast %23 : vector<1x128xf32> to vector<98x128xf32>
    %27 = arith.addf %25, %26 : vector<98x128xf32>
    %cst_13 = arith.constant 0.000000e+00 : f32
    %28 = vector.broadcast %cst_13 : f32 to vector<98x128xf32>
    %29 = arith.maximumf %27, %28 : vector<98x128xf32>
    %30 = arith.truncf %29 : vector<98x128xf32> to vector<98x128xbf16>
    %c0_14 = arith.constant 0 : index
    %c0_15 = arith.constant 0 : index
    %31 = vector.load %arg5[%c0_14, %c0_15] : memref<98x128xbf16, #tpu.memory_space<vmem>>, vector<98x128xbf16>
    tpu.vector_store %arg5[%c0_14, %c0_15], %30 {strides = array<i32>} : memref<98x128xbf16, #tpu.memory_space<vmem>>, vector<98x128xbf16>,
    return
  }
  func.func @transform_0(%arg0: i32) -> (i32, i32) {
    %c0_i32 = arith.constant 0 : i32
    %c0_i32_0 = arith.constant 0 : i32
    %c0_i32_1 = arith.constant 0 : i32
    return %c0_i32, %c0_i32_0 : i32, i32
  }
  func.func @transform_1(%arg0: i32) -> (i32, i32) {
    %c0_i32 = arith.constant 0 : i32
    %c0_i32_0 = arith.constant 0 : i32
    %c0_i32_1 = arith.constant 0 : i32
    return %c0_i32, %c0_i32_0 : i32, i32
  }
  func.func @transform_2(%arg0: i32) -> (i32, i32) {
    %c0_i32 = arith.constant 0 : i32
    %c0_i32_0 = arith.constant 0 : i32
    %c0_i32_1 = arith.constant 0 : i32
    return %c0_i32, %c0_i32_0 : i32, i32
  }
  func.func @transform_3(%arg0: i32) -> (i32, i32) {
    %c0_i32 = arith.constant 0 : i32
    %c0_i32_0 = arith.constant 0 : i32
    %c0_i32_1 = arith.constant 0 : i32
    return %c0_i32, %c0_i32_0 : i32, i32
  }
  func.func @transform_4(%arg0: i32) -> (i32, i32) {
    %c0_i32 = arith.constant 0 : i32
    %c0_i32_0 = arith.constant 0 : i32
    %c0_i32_1 = arith.constant 0 : i32
    return %c0_i32, %c0_i32_0 : i32, i32
  }
}

module attributes {stable_mosaic.version = 11 : i64} {
  func.func @_conv3_head_kernel(%arg0: i32, %arg1: memref<8x896xbf16, #tpu.memory_space<vmem>>, %arg2: memref<896x128xbf16, #tpu.memory_space<vmem>>, %arg3: memref<1x128xf32, #tpu.memory_space<vmem>>, %arg4: memref<1x128xf32, #tpu.memory_space<vmem>>, %arg5: memref<4x128x128xbf16, #tpu.memory_space<vmem>>, %arg6: memref<1x128xf32, #tpu.memory_space<vmem>>, %arg7: memref<2x128xf32, #tpu.memory_space<vmem>>) attributes {dimension_semantics = [#tpu.dimension_semantics<arbitrary>], iteration_bounds = array<i64: 1>, scalar_prefetch = 0 : i64, scratch_operands = 0 : i64, tpu.core_type = #tpu.core_type<tc>, window_params = [{pipeline_mode = #tpu.pipeline_mode<synchronous>, transform_indices = @transform_0, window_bounds = array<i64: 8, 896>}, {pipeline_mode = #tpu.pipeline_mode<synchronous>, transform_indices = @transform_1, window_bounds = array<i64: 896, 128>}, {pipeline_mode = #tpu.pipeline_mode<synchronous>, transform_indices = @transform_2, window_bounds = array<i64: 1, 128>}, {pipeline_mode = #tpu.pipeline_mode<synchronous>, transform_indices = @transform_3, window_bounds = array<i64: 1, 128>}, {pipeline_mode = #tpu.pipeline_mode<synchronous>, transform_indices = @transform_4, window_bounds = array<i64: 4, 128, 128>}, {pipeline_mode = #tpu.pipeline_mode<synchronous>, transform_indices = @transform_5, window_bounds = array<i64: 1, 128>}, {pipeline_mode = #tpu.pipeline_mode<synchronous>, transform_indices = @transform_6, window_bounds = array<i64: 2, 128>}]} {
    %c0 = arith.constant 0 : index
    %c0_0 = arith.constant 0 : index
    %0 = vector.load %arg1[%c0, %c0_0] : memref<8x896xbf16, #tpu.memory_space<vmem>>, vector<8x896xbf16>
    %c0_1 = arith.constant 0 : index
    %c0_2 = arith.constant 0 : index
    %1 = vector.load %arg2[%c0_1, %c0_2] : memref<896x128xbf16, #tpu.memory_space<vmem>>, vector<896x128xbf16>
    %cst = arith.constant dense<0.000000e+00> : vector<8x128xf32>
    %2 = tpu.matmul %0, %1, %cst {dimension_numbers = #tpu.dot_dimension_numbers<[1], [0], [0], [1], [0, 0, 1, 1], [], []>} : vector<8x896xbf16>, vector<896x128xbf16>, vector<8x128xf32> -> vector<8x128xf32>
    %cst_3 = arith.constant dense<0.000000e+00> : vector<128xf32>
    %3 = vector.multi_reduction <add>, %2, %cst_3 [0] : vector<8x128xf32> to vector<128xf32>
    %4 = vector.shape_cast %3 : vector<128xf32> to vector<1x128xf32>
    %cst_4 = arith.constant 8.000000e+00 : f32
    %5 = vector.broadcast %cst_4 : f32 to vector<1x128xf32>
    %6 = arith.divf %4, %5 : vector<1x128xf32>
    %7 = arith.mulf %2, %2 : vector<8x128xf32>
    %cst_5 = arith.constant dense<0.000000e+00> : vector<128xf32>
    %8 = vector.multi_reduction <add>, %7, %cst_5 [0] : vector<8x128xf32> to vector<128xf32>
    %9 = vector.shape_cast %8 : vector<128xf32> to vector<1x128xf32>
    %cst_6 = arith.constant 8.000000e+00 : f32
    %10 = vector.broadcast %cst_6 : f32 to vector<1x128xf32>
    %11 = arith.divf %9, %10 : vector<1x128xf32>
    %12 = arith.mulf %6, %6 : vector<1x128xf32>
    %13 = arith.subf %11, %12 : vector<1x128xf32>
    %cst_7 = arith.constant 0.000000e+00 : f32
    %14 = vector.broadcast %cst_7 : f32 to vector<1x128xf32>
    %15 = arith.maximumf %13, %14 : vector<1x128xf32>
    %c0_8 = arith.constant 0 : index
    %c0_9 = arith.constant 0 : index
    %16 = vector.load %arg3[%c0_8, %c0_9] : memref<1x128xf32, #tpu.memory_space<vmem>>, vector<1x128xf32>
    %cst_10 = arith.constant 9.99999974E-6 : f32
    %17 = vector.broadcast %cst_10 : f32 to vector<1x128xf32>
    %18 = arith.addf %15, %17 : vector<1x128xf32>
    %19 = math.rsqrt %18 : vector<1x128xf32>
    %20 = arith.mulf %16, %19 : vector<1x128xf32>
    %c0_11 = arith.constant 0 : index
    %c0_12 = arith.constant 0 : index
    %21 = vector.load %arg4[%c0_11, %c0_12] : memref<1x128xf32, #tpu.memory_space<vmem>>, vector<1x128xf32>
    %22 = arith.mulf %6, %20 : vector<1x128xf32>
    %23 = arith.subf %21, %22 : vector<1x128xf32>
    %24 = vector.broadcast %20 : vector<1x128xf32> to vector<8x128xf32>
    %25 = arith.mulf %2, %24 : vector<8x128xf32>
    %26 = vector.broadcast %23 : vector<1x128xf32> to vector<8x128xf32>
    %27 = arith.addf %25, %26 : vector<8x128xf32>
    %cst_13 = arith.constant 0.000000e+00 : f32
    %28 = vector.broadcast %cst_13 : f32 to vector<8x128xf32>
    %29 = arith.maximumf %27, %28 : vector<8x128xf32>
    %30 = arith.truncf %29 : vector<8x128xf32> to vector<8x128xbf16>
    %cst_14 = arith.constant 0.000000e+00 : f32
    %31 = vector.broadcast %cst_14 : f32 to vector<2x128xf32>
    %32 = vector.extract_strided_slice %30 {offsets = [0, 0], sizes = [2, 128], strides = [1, 1]} : vector<8x128xbf16> to vector<2x128xbf16>
    %c0_15 = arith.constant 0 : index
    %c0_16 = arith.constant 0 : index
    %c0_17 = arith.constant 0 : index
    %33 = vector.load %arg5[%c0_15, %c0_16, %c0_17] : memref<4x128x128xbf16, #tpu.memory_space<vmem>>, vector<1x128x128xbf16>
    %34 = vector.shape_cast %33 : vector<1x128x128xbf16> to vector<128x128xbf16>
    %cst_18 = arith.constant dense<0.000000e+00> : vector<2x128xf32>
    %35 = tpu.matmul %32, %34, %cst_18 {dimension_numbers = #tpu.dot_dimension_numbers<[1], [0], [0], [1], [0, 0, 1, 1], [], []>} : vector<2x128xbf16>, vector<128x128xbf16>, vector<2x128xf32> -> vector<2x128xf32>
    %36 = arith.addf %31, %35 : vector<2x128xf32>
    %37 = vector.extract_strided_slice %30 {offsets = [2, 0], sizes = [2, 128], strides = [1, 1]} : vector<8x128xbf16> to vector<2x128xbf16>
    %c1 = arith.constant 1 : index
    %c0_19 = arith.constant 0 : index
    %c0_20 = arith.constant 0 : index
    %38 = vector.load %arg5[%c1, %c0_19, %c0_20] : memref<4x128x128xbf16, #tpu.memory_space<vmem>>, vector<1x128x128xbf16>
    %39 = vector.shape_cast %38 : vector<1x128x128xbf16> to vector<128x128xbf16>
    %cst_21 = arith.constant dense<0.000000e+00> : vector<2x128xf32>
    %40 = tpu.matmul %37, %39, %cst_21 {dimension_numbers = #tpu.dot_dimension_numbers<[1], [0], [0], [1], [0, 0, 1, 1], [], []>} : vector<2x128xbf16>, vector<128x128xbf16>, vector<2x128xf32> -> vector<2x128xf32>
    %41 = arith.addf %36, %40 : vector<2x128xf32>
    %42 = vector.extract_strided_slice %30 {offsets = [4, 0], sizes = [2, 128], strides = [1, 1]} : vector<8x128xbf16> to vector<2x128xbf16>
    %c2 = arith.constant 2 : index
    %c0_22 = arith.constant 0 : index
    %c0_23 = arith.constant 0 : index
    %43 = vector.load %arg5[%c2, %c0_22, %c0_23] : memref<4x128x128xbf16, #tpu.memory_space<vmem>>, vector<1x128x128xbf16>
    %44 = vector.shape_cast %43 : vector<1x128x128xbf16> to vector<128x128xbf16>
    %cst_24 = arith.constant dense<0.000000e+00> : vector<2x128xf32>
    %45 = tpu.matmul %42, %44, %cst_24 {dimension_numbers = #tpu.dot_dimension_numbers<[1], [0], [0], [1], [0, 0, 1, 1], [], []>} : vector<2x128xbf16>, vector<128x128xbf16>, vector<2x128xf32> -> vector<2x128xf32>
    %46 = arith.addf %41, %45 : vector<2x128xf32>
    %47 = vector.extract_strided_slice %30 {offsets = [6, 0], sizes = [2, 128], strides = [1, 1]} : vector<8x128xbf16> to vector<2x128xbf16>
    %c3 = arith.constant 3 : index
    %c0_25 = arith.constant 0 : index
    %c0_26 = arith.constant 0 : index
    %48 = vector.load %arg5[%c3, %c0_25, %c0_26] : memref<4x128x128xbf16, #tpu.memory_space<vmem>>, vector<1x128x128xbf16>
    %49 = vector.shape_cast %48 : vector<1x128x128xbf16> to vector<128x128xbf16>
    %cst_27 = arith.constant dense<0.000000e+00> : vector<2x128xf32>
    %50 = tpu.matmul %47, %49, %cst_27 {dimension_numbers = #tpu.dot_dimension_numbers<[1], [0], [0], [1], [0, 0, 1, 1], [], []>} : vector<2x128xbf16>, vector<128x128xbf16>, vector<2x128xf32> -> vector<2x128xf32>
    %51 = arith.addf %46, %50 : vector<2x128xf32>
    %c0_28 = arith.constant 0 : index
    %c0_29 = arith.constant 0 : index
    %52 = vector.load %arg6[%c0_28, %c0_29] : memref<1x128xf32, #tpu.memory_space<vmem>>, vector<1x128xf32>
    %53 = vector.broadcast %52 : vector<1x128xf32> to vector<2x128xf32>
    %54 = arith.addf %51, %53 : vector<2x128xf32>
    %c0_30 = arith.constant 0 : index
    %c0_31 = arith.constant 0 : index
    %55 = vector.load %arg7[%c0_30, %c0_31] : memref<2x128xf32, #tpu.memory_space<vmem>>, vector<2x128xf32>
    tpu.vector_store %arg7[%c0_30, %c0_31], %54 {strides = array<i32>} : memref<2x128xf32, #tpu.memory_space<vmem>>, vector<2x128xf32>,
    return
  }
  func.func @transform_0(%arg0: i32) -> (i32, i32) {
    %c0_i32 = arith.constant 0 : i32
    %c0_i32_0 = arith.constant 0 : i32
    %c0_i32_1 = arith.constant 0 : i32
    return %c0_i32, %c0_i32_0 : i32, i32
  }
  func.func @transform_1(%arg0: i32) -> (i32, i32) {
    %c0_i32 = arith.constant 0 : i32
    %c0_i32_0 = arith.constant 0 : i32
    %c0_i32_1 = arith.constant 0 : i32
    return %c0_i32, %c0_i32_0 : i32, i32
  }
  func.func @transform_2(%arg0: i32) -> (i32, i32) {
    %c0_i32 = arith.constant 0 : i32
    %c0_i32_0 = arith.constant 0 : i32
    %c0_i32_1 = arith.constant 0 : i32
    return %c0_i32, %c0_i32_0 : i32, i32
  }
  func.func @transform_3(%arg0: i32) -> (i32, i32) {
    %c0_i32 = arith.constant 0 : i32
    %c0_i32_0 = arith.constant 0 : i32
    %c0_i32_1 = arith.constant 0 : i32
    return %c0_i32, %c0_i32_0 : i32, i32
  }
  func.func @transform_4(%arg0: i32) -> (i32, i32, i32) {
    %c0_i32 = arith.constant 0 : i32
    %c0_i32_0 = arith.constant 0 : i32
    %c0_i32_1 = arith.constant 0 : i32
    %c0_i32_2 = arith.constant 0 : i32
    return %c0_i32, %c0_i32_0, %c0_i32_1 : i32, i32, i32
  }
  func.func @transform_5(%arg0: i32) -> (i32, i32) {
    %c0_i32 = arith.constant 0 : i32
    %c0_i32_0 = arith.constant 0 : i32
    %c0_i32_1 = arith.constant 0 : i32
    return %c0_i32, %c0_i32_0 : i32, i32
  }
  func.func @transform_6(%arg0: i32) -> (i32, i32) {
    %c0_i32 = arith.constant 0 : i32
    %c0_i32_0 = arith.constant 0 : i32
    %c0_i32_1 = arith.constant 0 : i32
    return %c0_i32, %c0_i32_0 : i32, i32
  }
}

</mosaic_0001>

<llo_original>
// kernel: dqn_forward.3
$region0: #{dqn_forward.3}
  #allocation0 [shape = 'u32[]', space=smem, size = 0x4, offset = 0x4, fixed_abs, tag = 'smem constant byte address 0x4 - core index']
  #allocation1 [shape = 'u32[144,128]{1,0:T(1,128)}', space=vmem, size = 0x12000, scoped, tag = 'internal scratch']
  %s0 = inlined_call_operand.vmem [shape: bf16[648,128], index: 0, kind: input, shape index: {}]
  %s1 = inlined_call_operand.vmem [shape: bf16[128,128], index: 1, kind: input, shape index: {}]
  %s2 = inlined_call_operand.vmem [shape: f32[1,128], index: 2, kind: input, shape index: {}]
  %s3 = inlined_call_operand.vmem [shape: f32[1,128], index: 3, kind: input, shape index: {}]
  %s4 = inlined_call_operand.vmem [shape: bf16[648,128], index: 4, kind: output, shape index: {}]
  %s5 = sld [smem:[#allocation0]]
  $region26: #{dqn_forward.3} parent=0
    _
  %s7 = ssub.s32 1, %s5
  %s8 = scalar_select 0, %s7, %s5
  // Predicated region
  $region2: #{dqn_forward.3} parent=0 // pred_check
    _
  $region3: #{dqn_forward.3} parent=0 // pred_check_branch
    %10 = sbr.rel (0) target = $region5
  $region4: #{dqn_forward.3} parent=0 // pred_region
    _
  $region5: #{dqn_forward.3} parent=0 // pred_fallthru
    _
  // Predicated region
  $region6: #{dqn_forward.3} parent=0 // pred_check
    _
  $region7: #{dqn_forward.3} parent=0 // pred_check_branch
    %12 = sbr.rel (0) target = $region9
  $region8: #{dqn_forward.3} parent=0 // pred_region
    _
  $region9: #{dqn_forward.3} parent=0 // pred_fallthru
    _
  // Predicated region
  $region10: #{dqn_forward.3} parent=0 // pred_check
    _
  $region11: #{dqn_forward.3} parent=0 // pred_check_branch
    %14 = sbr.rel (0) target = $region13
  $region12: #{dqn_forward.3} parent=0 // pred_region
    _
  $region13: #{dqn_forward.3} parent=0 // pred_fallthru
    _
  // Predicated region
  $region14: #{dqn_forward.3} parent=0 // pred_check
    _
  $region15: #{dqn_forward.3} parent=0 // pred_check_branch
    %16 = sbr.rel (0) target = $region17
  $region16: #{dqn_forward.3} parent=0 // pred_region
    _
  $region17: #{dqn_forward.3} parent=0 // pred_fallthru
    _
  %v18 = vld [vmem:[%s0] sm:$0xf]
  %v19 = vld [vmem:[%s0 + $0x4] sm:$0xf]
  %v20 = vld [vmem:[%s0 + $0x8] sm:$0xf]
  %v21 = vld [vmem:[%s0 + $0xc] sm:$0xf]
  %v22 = vld [vmem:[%s0 + $0x10] sm:$0xf]
  %v23 = vld [vmem:[%s0 + $0x14] sm:$0xf]
  %v24 = vld [vmem:[%s0 + $0x18] sm:$0xf]
  %v25 = vld [vmem:[%s0 + $0x1c] sm:$0xf]
  %v26 = vld [vmem:[%s0 + $0x20] sm:$0xf]
  %v27 = vld [vmem:[%s0 + $0x24] sm:$0xf]
  %v28 = vld [vmem:[%s0 + $0x28] sm:$0xf]
  %v29 = vld [vmem:[%s0 + $0x2c] sm:$0xf]
  %v30 = vld [vmem:[%s0 + $0x30] sm:$0xf]
  %v31 = vld [vmem:[%s0 + $0x34] sm:$0xf]
  %v32 = vld [vmem:[%s0 + $0x38] sm:$0xf]
  %v33 = vld [vmem:[%s0 + $0x3c] sm:$0xf]
  %v34 = vld [vmem:[%s0 + $0x40] sm:$0xf]
  %v35 = vld [vmem:[%s0 + $0x44] sm:$0xf]
  %v36 = vld [vmem:[%s0 + $0x48] sm:$0xf]
  %v37 = vld [vmem:[%s0 + $0x4c] sm:$0xf]
  %v38 = vld [vmem:[%s0 + $0x50] sm:$0xf]
  %v39 = vld [vmem:[%s0 + $0x54] sm:$0xf]
  %v40 = vld [vmem:[%s0 + $0x58] sm:$0xf]
  %v41 = vld [vmem:[%s0 + $0x5c] sm:$0xf]
  %v42 = vld [vmem:[%s0 + $0x60] sm:$0xf]
  %v43 = vld [vmem:[%s0 + $0x64] sm:$0xf]
  %v44 = vld [vmem:[%s0 + $0x68] sm:$0xf]
  %v45 = vld [vmem:[%s0 + $0x6c] sm:$0xf]
  %v46 = vld [vmem:[%s0 + $0x70] sm:$0xf]
  %v47 = vld [vmem:[%s0 + $0x74] sm:$0xf]
  %v48 = vld [vmem:[%s0 + $0x78] sm:$0xf]
  %v49 = vld [vmem:[%s0 + $0x7c] sm:$0xf]
  %v50 = vld [vmem:[%s0 + $0x80] sm:$0xf]
  %v51 = vld [vmem:[%s0 + $0x84] sm:$0xf]
  %v52 = vld [vmem:[%s0 + $0x88] sm:$0xf]
  %v53 = vld [vmem:[%s0 + $0x8c] sm:$0xf]
  %v54 = vld [vmem:[%s0 + $0x90] sm:$0xf]
  %v55 = vld [vmem:[%s0 + $0x94] sm:$0xf]
  %v56 = vld [vmem:[%s0 + $0x98] sm:$0xf]
  %v57 = vld [vmem:[%s0 + $0x9c] sm:$0xf]
  %v58 = vld [vmem:[%s0 + $0xa0] sm:$0xf]
  %v59 = vld [vmem:[%s0 + $0xa4] sm:$0xf]
  %v60 = vld [vmem:[%s0 + $0xa8] sm:$0xf]
  %v61 = vld [vmem:[%s0 + $0xac] sm:$0xf]
  %v62 = vld [vmem:[%s0 + $0xb0] sm:$0xf]
  %v63 = vld [vmem:[%s0 + $0xb4] sm:$0xf]
  %v64 = vld [vmem:[%s0 + $0xb8] sm:$0xf]
  %v65 = vld [vmem:[%s0 + $0xbc] sm:$0xf]
  %v66 = vld [vmem:[%s0 + $0xc0] sm:$0xf]
  %v67 = vld [vmem:[%s0 + $0xc4] sm:$0xf]
  %v68 = vld [vmem:[%s0 + $0xc8] sm:$0xf]
  %v69 = vld [vmem:[%s0 + $0xcc] sm:$0xf]
  %v70 = vld [vmem:[%s0 + $0xd0] sm:$0xf]
  %v71 = vld [vmem:[%s0 + $0xd4] sm:$0xf]
  %v72 = vld [vmem:[%s0 + $0xd8] sm:$0xf]
  %v73 = vld [vmem:[%s0 + $0xdc] sm:$0xf]
  %v74 = vld [vmem:[%s0 + $0xe0] sm:$0xf]
  %v75 = vld [vmem:[%s0 + $0xe4] sm:$0xf]
  %v76 = vld [vmem:[%s0 + $0xe8] sm:$0xf]
  %v77 = vld [vmem:[%s0 + $0xec] sm:$0xf]
  %v78 = vld [vmem:[%s0 + $0xf0] sm:$0xf]
  %v79 = vld [vmem:[%s0 + $0xf4] sm:$0xf]
  %v80 = vld [vmem:[%s0 + $0xf8] sm:$0xf]
  %v81 = vld [vmem:[%s0 + $0xfc] sm:$0xf]
  %v82 = vld [vmem:[%s0 + $0x100] sm:$0xf]
  %v83 = vld [vmem:[%s0 + $0x104] sm:$0xf]
  %v84 = vld [vmem:[%s0 + $0x108] sm:$0xf]
  %v85 = vld [vmem:[%s0 + $0x10c] sm:$0xf]
  %v86 = vld [vmem:[%s0 + $0x110] sm:$0xf]
  %v87 = vld [vmem:[%s0 + $0x114] sm:$0xf]
  %v88 = vld [vmem:[%s0 + $0x118] sm:$0xf]
  %v89 = vld [vmem:[%s0 + $0x11c] sm:$0xf]
  %v90 = vld [vmem:[%s0 + $0x120] sm:$0xf]
  %v91 = vld [vmem:[%s0 + $0x124] sm:$0xf]
  %v92 = vld [vmem:[%s0 + $0x128] sm:$0xf]
  %v93 = vld [vmem:[%s0 + $0x12c] sm:$0xf]
  %v94 = vld [vmem:[%s0 + $0x130] sm:$0xf]
  %v95 = vld [vmem:[%s0 + $0x134] sm:$0xf]
  %v96 = vld [vmem:[%s0 + $0x138] sm:$0xf]
  %v97 = vld [vmem:[%s0 + $0x13c] sm:$0xf]
  %v98 = vld [vmem:[%s0 + $0x140] sm:$0xf]
  %v99 = vld [vmem:[%s1] sm:$0xf]
  %v100 = vld [vmem:[%s1 + $0x4] sm:$0xf]
  %v101 = vld [vmem:[%s1 + $0x8] sm:$0xf]
  %v102 = vld [vmem:[%s1 + $0xc] sm:$0xf]
  %v103 = vld [vmem:[%s1 + $0x10] sm:$0xf]
  %v104 = vld [vmem:[%s1 + $0x14] sm:$0xf]
  %v105 = vld [vmem:[%s1 + $0x18] sm:$0xf]
  %v106 = vld [vmem:[%s1 + $0x1c] sm:$0xf]
  %v107 = vld [vmem:[%s1 + $0x20] sm:$0xf]
  %v108 = vld [vmem:[%s1 + $0x24] sm:$0xf]
  %v109 = vld [vmem:[%s1 + $0x28] sm:$0xf]
  %v110 = vld [vmem:[%s1 + $0x2c] sm:$0xf]
  %v111 = vld [vmem:[%s1 + $0x30] sm:$0xf]
  %v112 = vld [vmem:[%s1 + $0x34] sm:$0xf]
  %v113 = vld [vmem:[%s1 + $0x38] sm:$0xf]
  %v114 = vld [vmem:[%s1 + $0x3c] sm:$0xf]
  %v196 = vunpack.c.l.b16 %v18
  %v197 = vunpack.c.l.b16 %v19
  %v198 = vunpack.c.l.b16 %v20
  %v199 = vunpack.c.l.b16 %v21
  %v200 = vunpack.c.l.b16 %v22
  %v201 = vunpack.c.l.b16 %v23
  %v202 = vunpack.c.l.b16 %v24
  %v203 = vunpack.c.l.b16 %v25
  %v204 = vunpack.c.l.b16 %v26
  %v205 = vunpack.c.l.b16 %v27
  %v206 = vunpack.c.l.b16 %v28
  %v207 = vunpack.c.l.b16 %v29
  %v208 = vunpack.c.l.b16 %v30
  %v209 = vunpack.c.l.b16 %v31
  %v210 = vunpack.c.l.b16 %v32
  %v211 = vunpack.c.l.b16 %v33
  %v212 = vunpack.c.l.b16 %v34
  %v213 = vunpack.c.l.b16 %v35
  %v214 = vunpack.c.l.b16 %v36
  %v215 = vunpack.c.l.b16 %v37
  %v216 = vunpack.c.l.b16 %v38
  %v217 = vunpack.c.l.b16 %v39
  %v218 = vunpack.c.l.b16 %v40
  %v219 = vunpack.c.l.b16 %v41
  %v220 = vunpack.c.l.b16 %v42
  %v221 = vunpack.c.l.b16 %v43
  %v222 = vunpack.c.l.b16 %v44
  %v223 = vunpack.c.l.b16 %v45
  %v224 = vunpack.c.l.b16 %v46
  %v225 = vunpack.c.l.b16 %v47
  %v226 = vunpack.c.l.b16 %v48
  %v227 = vunpack.c.l.b16 %v49
  %v228 = vunpack.c.l.b16 %v50
  %v229 = vunpack.c.l.b16 %v51
  %v230 = vunpack.c.l.b16 %v52
  %v231 = vunpack.c.l.b16 %v53
  %v232 = vunpack.c.l.b16 %v54
  %v233 = vunpack.c.l.b16 %v55
  %v234 = vunpack.c.l.b16 %v56
  %v235 = vunpack.c.l.b16 %v57
  %v236 = vunpack.c.l.b16 %v58
  %v237 = vunpack.c.l.b16 %v59
  %v238 = vunpack.c.l.b16 %v60
  %v239 = vunpack.c.l.b16 %v61
  %v240 = vunpack.c.l.b16 %v62
  %v241 = vunpack.c.l.b16 %v63
  %v242 = vunpack.c.l.b16 %v64
  %v243 = vunpack.c.l.b16 %v65
  %v244 = vunpack.c.l.b16 %v66
  %v245 = vunpack.c.l.b16 %v67
  %v246 = vunpack.c.l.b16 %v68
  %v247 = vunpack.c.l.b16 %v69
  %v248 = vunpack.c.l.b16 %v70
  %v249 = vunpack.c.l.b16 %v71
  %v250 = vunpack.c.l.b16 %v72
  %v251 = vunpack.c.l.b16 %v73
  %v252 = vunpack.c.l.b16 %v74
  %v253 = vunpack.c.l.b16 %v75
  %v254 = vunpack.c.l.b16 %v76
  %v255 = vunpack.c.l.b16 %v77
  %v256 = vunpack.c.l.b16 %v78
  %v257 = vunpack.c.l.b16 %v79
  %v258 = vunpack.c.l.b16 %v80
  %v259 = vunpack.c.l.b16 %v81
  %v260 = vunpack.c.l.b16 %v82
  %v261 = vunpack.c.l.b16 %v83
  %v262 = vunpack.c.l.b16 %v84
  %v263 = vunpack.c.l.b16 %v85
  %v264 = vunpack.c.l.b16 %v86
  %v265 = vunpack.c.l.b16 %v87
  %v266 = vunpack.c.l.b16 %v88
  %v267 = vunpack.c.l.b16 %v89
  %v268 = vunpack.c.l.b16 %v90
  %v269 = vunpack.c.l.b16 %v91
  %v270 = vunpack.c.l.b16 %v92
  %v271 = vunpack.c.l.b16 %v93
  %v272 = vunpack.c.l.b16 %v94
  %v273 = vunpack.c.l.b16 %v95
  %v274 = vunpack.c.l.b16 %v96
  %v275 = vunpack.c.l.b16 %v97
  %v276 = vunpack.c.l.b16 %v98
  %v277 = vpack.c.b16 %v197, %v196
  %v278 = vpack.c.b16 %v199, %v198
  %v279 = vpack.c.b16 %v201, %v200
  %v280 = vpack.c.b16 %v203, %v202
  %v281 = vpack.c.b16 %v205, %v204
  %v282 = vpack.c.b16 %v207, %v206
  %v283 = vpack.c.b16 %v209, %v208
  %v284 = vpack.c.b16 %v211, %v210
  %v285 = vpack.c.b16 %v213, %v212
  %v286 = vpack.c.b16 %v215, %v214
  %v287 = vpack.c.b16 %v217, %v216
  %v288 = vpack.c.b16 %v219, %v218
  %v289 = vpack.c.b16 %v221, %v220
  %v290 = vpack.c.b16 %v223, %v222
  %v291 = vpack.c.b16 %v225, %v224
  %v292 = vpack.c.b16 %v227, %v226
  %v293 = vpack.c.b16 %v229, %v228
  %v294 = vpack.c.b16 %v231, %v230
  %v295 = vpack.c.b16 %v233, %v232
  %v296 = vpack.c.b16 %v235, %v234
  %v297 = vpack.c.b16 %v237, %v236
  %v298 = vpack.c.b16 %v239, %v238
  %v299 = vpack.c.b16 %v241, %v240
  %v300 = vpack.c.b16 %v243, %v242
  %v301 = vpack.c.b16 %v245, %v244
  %v302 = vpack.c.b16 %v247, %v246
  %v303 = vpack.c.b16 %v249, %v248
  %v304 = vpack.c.b16 %v251, %v250
  %v305 = vpack.c.b16 %v253, %v252
  %v306 = vpack.c.b16 %v255, %v254
  %v307 = vpack.c.b16 %v257, %v256
  %v308 = vpack.c.b16 %v259, %v258
  %v309 = vpack.c.b16 %v261, %v260
  %v310 = vpack.c.b16 %v263, %v262
  %v311 = vpack.c.b16 %v265, %v264
  %v312 = vpack.c.b16 %v267, %v266
  %v313 = vpack.c.b16 %v269, %v268
  %v314 = vpack.c.b16 %v271, %v270
  %v315 = vpack.c.b16 %v273, %v272
  %v316 = vpack.c.b16 %v275, %v274
  %v317 = vpack.c.b16 %v276, %v276
  %v375 = vunpack.c.l.b16 %v99
  %v376 = vunpack.c.l.b16 %v100
  %v377 = vunpack.c.l.b16 %v101
  %v378 = vunpack.c.l.b16 %v102
  %v379 = vunpack.c.l.b16 %v103
  %v380 = vunpack.c.l.b16 %v104
  %v381 = vunpack.c.l.b16 %v105
  %v382 = vunpack.c.l.b16 %v106
  %v383 = vunpack.c.l.b16 %v107
  %v384 = vunpack.c.l.b16 %v108
  %v385 = vunpack.c.l.b16 %v109
  %v386 = vunpack.c.l.b16 %v110
  %v387 = vunpack.c.l.b16 %v111
  %v388 = vunpack.c.l.b16 %v112
  %v389 = vunpack.c.l.b16 %v113
  %v390 = vunpack.c.l.b16 %v114
  %v391 = vpack.c.b16 %v376, %v375
  %v392 = vpack.c.b16 %v378, %v377
  %v393 = vpack.c.b16 %v380, %v379
  %v394 = vpack.c.b16 %v382, %v381
  %v395 = vpack.c.b16 %v384, %v383
  %v396 = vpack.c.b16 %v386, %v385
  %v397 = vpack.c.b16 %v388, %v387
  %v398 = vpack.c.b16 %v390, %v389
  %407 = vmatprep.subr.bf16.mxu0 0
  %408 = vmatpush1.bf16.msra.mxu0 %v398
  %409 = vmatprep.subr.bf16.mxu0 0
  %410 = vmatpush1.bf16.msra.mxu0 %v397
  %411 = vmatprep.subr.bf16.mxu0 0
  %412 = vmatpush1.bf16.msra.mxu0 %v396
  %413 = vmatprep.subr.bf16.mxu0 0
  %414 = vmatpush1.bf16.msra.mxu0 %v395
  %415 = vmatprep.subr.bf16.mxu0 0
  %416 = vmatpush1.bf16.msra.mxu0 %v394
  %417 = vmatprep.subr.bf16.mxu0 0
  %418 = vmatpush1.bf16.msra.mxu0 %v393
  %419 = vmatprep.subr.bf16.mxu0 0
  %420 = vmatpush1.bf16.msra.mxu0 %v392
  %421 = vmatprep.subr.bf16.mxu0 0
  %422 = vmatpush1.bf16.msra.mxu0 %v391
  %423 = vmatprep.subr.bf16.mxu0 0
  %424 = vmatpush2.bf16.msra.mxu0 0
  %425 = vmatprep.subr.bf16.mxu0 0
  %426 = vmatpush2.bf16.msra.mxu0 0
  %427 = vmatprep.subr.bf16.mxu0 0
  %428 = vmatpush2.bf16.msra.mxu0 0
  %429 = vmatprep.subr.bf16.mxu0 0
  %430 = vmatpush2.bf16.msra.mxu0 0
  %431 = vmatprep.subr.bf16.mxu0 0
  %432 = vmatpush2.bf16.msra.mxu0 0
  %433 = vmatprep.subr.bf16.mxu0 0
  %434 = vmatpush2.bf16.msra.mxu0 0
  %435 = vmatprep.subr.bf16.mxu0 0
  %436 = vmatpush2.bf16.msra.mxu0 0
  %437 = vmatprep.subr.bf16.mxu0 0
  %438 = vmatpush2.bf16.msra.mxu0 0
  %439 = vmatprep.mubr.bf16.mxu0 0
  %440 = vmatmul.mubr.bf16.gmra.mxu0 %v277
  %v441 = vpop.f32.mrf.mxu0
  %v442 = vadd.f32 0.0, %v441
  %v443 = vpop.f32.mrf.mxu0
  %v444 = vpop.f32.mrf.mxu0
  %v445 = vadd.f32 0.0, %v444
  %v446 = vpop.f32.mrf.mxu0
  %447 = vmatprep.mubr.bf16.mxu0 0
  %448 = vmatmul.mubr.bf16.gmra.mxu0 %v278
  %v449 = vpop.f32.mrf.mxu0
  %v450 = vadd.f32 0.0, %v449
  %v451 = vpop.f32.mrf.mxu0
  %v452 = vpop.f32.mrf.mxu0
  %v453 = vadd.f32 0.0, %v452
  %v454 = vpop.f32.mrf.mxu0
  %455 = vmatprep.mubr.bf16.mxu0 0
  %456 = vmatmul.mubr.bf16.gmra.mxu0 %v279
  %v457 = vpop.f32.mrf.mxu0
  %v458 = vadd.f32 0.0, %v457
  %v459 = vpop.f32.mrf.mxu0
  %v460 = vpop.f32.mrf.mxu0
  %v461 = vadd.f32 0.0, %v460
  %v462 = vpop.f32.mrf.mxu0
  %463 = vmatprep.mubr.bf16.mxu0 0
  %464 = vmatmul.mubr.bf16.gmra.mxu0 %v280
  %v465 = vpop.f32.mrf.mxu0
  %v466 = vadd.f32 0.0, %v465
  %v467 = vpop.f32.mrf.mxu0
  %v468 = vpop.f32.mrf.mxu0
  %v469 = vadd.f32 0.0, %v468
  %v470 = vpop.f32.mrf.mxu0
  %471 = vmatprep.mubr.bf16.mxu0 0
  %472 = vmatmul.mubr.bf16.gmra.mxu0 %v281
  %v473 = vpop.f32.mrf.mxu0
  %v474 = vadd.f32 0.0, %v473
  %v475 = vpop.f32.mrf.mxu0
  %v476 = vpop.f32.mrf.mxu0
  %v477 = vadd.f32 0.0, %v476
  %v478 = vpop.f32.mrf.mxu0
  %479 = vmatprep.mubr.bf16.mxu0 0
  %480 = vmatmul.mubr.bf16.gmra.mxu0 %v282
  %v481 = vpop.f32.mrf.mxu0
  %v482 = vadd.f32 0.0, %v481
  %v483 = vpop.f32.mrf.mxu0
  %v484 = vpop.f32.mrf.mxu0
  %v485 = vadd.f32 0.0, %v484
  %v486 = vpop.f32.mrf.mxu0
  %487 = vmatprep.mubr.bf16.mxu0 0
  %488 = vmatmul.mubr.bf16.gmra.mxu0 %v283
  %v489 = vpop.f32.mrf.mxu0
  %v490 = vadd.f32 0.0, %v489
  %v491 = vpop.f32.mrf.mxu0
  %v492 = vpop.f32.mrf.mxu0
  %v493 = vadd.f32 0.0, %v492
  %v494 = vpop.f32.mrf.mxu0
  %495 = vmatprep.mubr.bf16.mxu0 0
  %496 = vmatmul.mubr.bf16.gmra.mxu0 %v284
  %v497 = vpop.f32.mrf.mxu0
  %v498 = vadd.f32 0.0, %v497
  %v499 = vpop.f32.mrf.mxu0
  %v500 = vpop.f32.mrf.mxu0
  %v501 = vadd.f32 0.0, %v500
  %v502 = vpop.f32.mrf.mxu0
  %503 = vmatprep.mubr.bf16.mxu0 0
  %504 = vmatmul.mubr.bf16.gmra.mxu0 %v285
  %v505 = vpop.f32.mrf.mxu0
  %v506 = vadd.f32 0.0, %v505
  %v507 = vpop.f32.mrf.mxu0
  %v508 = vpop.f32.mrf.mxu0
  %v509 = vadd.f32 0.0, %v508
  %v510 = vpop.f32.mrf.mxu0
  %511 = vmatprep.mubr.bf16.mxu0 0
  %512 = vmatmul.mubr.bf16.gmra.mxu0 %v286
  %v513 = vpop.f32.mrf.mxu0
  %v514 = vadd.f32 0.0, %v513
  %v515 = vpop.f32.mrf.mxu0
  %v516 = vpop.f32.mrf.mxu0
  %v517 = vadd.f32 0.0, %v516
  %v518 = vpop.f32.mrf.mxu0
  %519 = vmatprep.mubr.bf16.mxu0 0
  %520 = vmatmul.mubr.bf16.gmra.mxu0 %v287
  %v521 = vpop.f32.mrf.mxu0
  %v522 = vadd.f32 0.0, %v521
  %v523 = vpop.f32.mrf.mxu0
  %v524 = vpop.f32.mrf.mxu0
  %v525 = vadd.f32 0.0, %v524
  %v526 = vpop.f32.mrf.mxu0
  %527 = vmatprep.mubr.bf16.mxu0 0
  %528 = vmatmul.mubr.bf16.gmra.mxu0 %v288
  %v529 = vpop.f32.mrf.mxu0
  %v530 = vadd.f32 0.0, %v529
  %v531 = vpop.f32.mrf.mxu0
  %v532 = vpop.f32.mrf.mxu0
  %v533 = vadd.f32 0.0, %v532
  %v534 = vpop.f32.mrf.mxu0
  %535 = vmatprep.mubr.bf16.mxu0 0
  %536 = vmatmul.mubr.bf16.gmra.mxu0 %v289
  %v537 = vpop.f32.mrf.mxu0
  %v538 = vadd.f32 0.0, %v537
  %v539 = vpop.f32.mrf.mxu0
  %v540 = vpop.f32.mrf.mxu0
  %v541 = vadd.f32 0.0, %v540
  %v542 = vpop.f32.mrf.mxu0
  %543 = vmatprep.mubr.bf16.mxu0 0
  %544 = vmatmul.mubr.bf16.gmra.mxu0 %v290
  %v545 = vpop.f32.mrf.mxu0
  %v546 = vadd.f32 0.0, %v545
  %v547 = vpop.f32.mrf.mxu0
  %v548 = vpop.f32.mrf.mxu0
  %v549 = vadd.f32 0.0, %v548
  %v550 = vpop.f32.mrf.mxu0
  %551 = vmatprep.mubr.bf16.mxu0 0
  %552 = vmatmul.mubr.bf16.gmra.mxu0 %v291
  %v553 = vpop.f32.mrf.mxu0
  %v554 = vadd.f32 0.0, %v553
  %v555 = vpop.f32.mrf.mxu0
  %v556 = vpop.f32.mrf.mxu0
  %v557 = vadd.f32 0.0, %v556
  %v558 = vpop.f32.mrf.mxu0
  %559 = vmatprep.mubr.bf16.mxu0 0
  %560 = vmatmul.mubr.bf16.gmra.mxu0 %v292
  %v561 = vpop.f32.mrf.mxu0
  %v562 = vadd.f32 0.0, %v561
  %v563 = vpop.f32.mrf.mxu0
  %v564 = vpop.f32.mrf.mxu0
  %v565 = vadd.f32 0.0, %v564
  %v566 = vpop.f32.mrf.mxu0
  %567 = vmatprep.mubr.bf16.mxu0 0
  %568 = vmatmul.mubr.bf16.gmra.mxu0 %v293
  %v569 = vpop.f32.mrf.mxu0
  %v570 = vadd.f32 0.0, %v569
  %v571 = vpop.f32.mrf.mxu0
  %v572 = vpop.f32.mrf.mxu0
  %v573 = vadd.f32 0.0, %v572
  %v574 = vpop.f32.mrf.mxu0
  %575 = vmatprep.mubr.bf16.mxu0 0
  %576 = vmatmul.mubr.bf16.gmra.mxu0 %v294
  %v577 = vpop.f32.mrf.mxu0
  %v578 = vadd.f32 0.0, %v577
  %v579 = vpop.f32.mrf.mxu0
  %v580 = vpop.f32.mrf.mxu0
  %v581 = vadd.f32 0.0, %v580
  %v582 = vpop.f32.mrf.mxu0
  %583 = vmatprep.mubr.bf16.mxu0 0
  %584 = vmatmul.mubr.bf16.gmra.mxu0 %v295
  %v585 = vpop.f32.mrf.mxu0
  %v586 = vadd.f32 0.0, %v585
  %v587 = vpop.f32.mrf.mxu0
  %v588 = vpop.f32.mrf.mxu0
  %v589 = vadd.f32 0.0, %v588
  %v590 = vpop.f32.mrf.mxu0
  %591 = vmatprep.mubr.bf16.mxu0 0
  %592 = vmatmul.mubr.bf16.gmra.mxu0 %v296
  %v593 = vpop.f32.mrf.mxu0
  %v594 = vadd.f32 0.0, %v593
  %v595 = vpop.f32.mrf.mxu0
  %v596 = vpop.f32.mrf.mxu0
  %v597 = vadd.f32 0.0, %v596
  %v598 = vpop.f32.mrf.mxu0
  %599 = vmatprep.mubr.bf16.mxu0 0
  %600 = vmatmul.mubr.bf16.gmra.mxu0 %v297
  %v601 = vpop.f32.mrf.mxu0
  %v602 = vadd.f32 0.0, %v601
  %v603 = vpop.f32.mrf.mxu0
  %v604 = vpop.f32.mrf.mxu0
  %v605 = vadd.f32 0.0, %v604
  %v606 = vpop.f32.mrf.mxu0
  %607 = vmatprep.mubr.bf16.mxu0 0
  %608 = vmatmul.mubr.bf16.gmra.mxu0 %v298
  %v609 = vpop.f32.mrf.mxu0
  %v610 = vadd.f32 0.0, %v609
  %v611 = vpop.f32.mrf.mxu0
  %v612 = vpop.f32.mrf.mxu0
  %v613 = vadd.f32 0.0, %v612
  %v614 = vpop.f32.mrf.mxu0
  %615 = vmatprep.mubr.bf16.mxu0 0
  %616 = vmatmul.mubr.bf16.gmra.mxu0 %v299
  %v617 = vpop.f32.mrf.mxu0
  %v618 = vadd.f32 0.0, %v617
  %v619 = vpop.f32.mrf.mxu0
  %v620 = vpop.f32.mrf.mxu0
  %v621 = vadd.f32 0.0, %v620
  %v622 = vpop.f32.mrf.mxu0
  %623 = vmatprep.mubr.bf16.mxu0 0
  %624 = vmatmul.mubr.bf16.gmra.mxu0 %v300
  %v625 = vpop.f32.mrf.mxu0
  %v626 = vadd.f32 0.0, %v625
  %v627 = vpop.f32.mrf.mxu0
  %v628 = vpop.f32.mrf.mxu0
  %v629 = vadd.f32 0.0, %v628
  %v630 = vpop.f32.mrf.mxu0
  %631 = vmatprep.mubr.bf16.mxu0 0
  %632 = vmatmul.mubr.bf16.gmra.mxu0 %v301
  %v633 = vpop.f32.mrf.mxu0
  %v634 = vadd.f32 0.0, %v633
  %v635 = vpop.f32.mrf.mxu0
  %v636 = vpop.f32.mrf.mxu0
  %v637 = vadd.f32 0.0, %v636
  %v638 = vpop.f32.mrf.mxu0
  %639 = vmatprep.mubr.bf16.mxu0 0
  %640 = vmatmul.mubr.bf16.gmra.mxu0 %v302
  %v641 = vpop.f32.mrf.mxu0
  %v642 = vadd.f32 0.0, %v641
  %v643 = vpop.f32.mrf.mxu0
  %v644 = vpop.f32.mrf.mxu0
  %v645 = vadd.f32 0.0, %v644
  %v646 = vpop.f32.mrf.mxu0
  %647 = vmatprep.mubr.bf16.mxu0 0
  %648 = vmatmul.mubr.bf16.gmra.mxu0 %v303
  %v649 = vpop.f32.mrf.mxu0
  %v650 = vadd.f32 0.0, %v649
  %v651 = vpop.f32.mrf.mxu0
  %v652 = vpop.f32.mrf.mxu0
  %v653 = vadd.f32 0.0, %v652
  %v654 = vpop.f32.mrf.mxu0
  %655 = vmatprep.mubr.bf16.mxu0 0
  %656 = vmatmul.mubr.bf16.gmra.mxu0 %v304
  %v657 = vpop.f32.mrf.mxu0
  %v658 = vadd.f32 0.0, %v657
  %v659 = vpop.f32.mrf.mxu0
  %v660 = vpop.f32.mrf.mxu0
  %v661 = vadd.f32 0.0, %v660
  %v662 = vpop.f32.mrf.mxu0
  %663 = vmatprep.mubr.bf16.mxu0 0
  %664 = vmatmul.mubr.bf16.gmra.mxu0 %v305
  %v665 = vpop.f32.mrf.mxu0
  %v666 = vadd.f32 0.0, %v665
  %v667 = vpop.f32.mrf.mxu0
  %v668 = vpop.f32.mrf.mxu0
  %v669 = vadd.f32 0.0, %v668
  %v670 = vpop.f32.mrf.mxu0
  %671 = vmatprep.mubr.bf16.mxu0 0
  %672 = vmatmul.mubr.bf16.gmra.mxu0 %v306
  %v673 = vpop.f32.mrf.mxu0
  %v674 = vadd.f32 0.0, %v673
  %v675 = vpop.f32.mrf.mxu0
  %v676 = vpop.f32.mrf.mxu0
  %v677 = vadd.f32 0.0, %v676
  %v678 = vpop.f32.mrf.mxu0
  %679 = vmatprep.mubr.bf16.mxu0 0
  %680 = vmatmul.mubr.bf16.gmra.mxu0 %v307
  %v681 = vpop.f32.mrf.mxu0
  %v682 = vadd.f32 0.0, %v681
  %v683 = vpop.f32.mrf.mxu0
  %v684 = vpop.f32.mrf.mxu0
  %v685 = vadd.f32 0.0, %v684
  %v686 = vpop.f32.mrf.mxu0
  %687 = vmatprep.mubr.bf16.mxu0 0
  %688 = vmatmul.mubr.bf16.gmra.mxu0 %v308
  %v689 = vpop.f32.mrf.mxu0
  %v690 = vadd.f32 0.0, %v689
  %v691 = vpop.f32.mrf.mxu0
  %v692 = vpop.f32.mrf.mxu0
  %v693 = vadd.f32 0.0, %v692
  %v694 = vpop.f32.mrf.mxu0
  %695 = vmatprep.mubr.bf16.mxu0 0
  %696 = vmatmul.mubr.bf16.gmra.mxu0 %v309
  %v697 = vpop.f32.mrf.mxu0
  %v698 = vadd.f32 0.0, %v697
  %v699 = vpop.f32.mrf.mxu0
  %v700 = vpop.f32.mrf.mxu0
  %v701 = vadd.f32 0.0, %v700
  %v702 = vpop.f32.mrf.mxu0
  %703 = vmatprep.mubr.bf16.mxu0 0
  %704 = vmatmul.mubr.bf16.gmra.mxu0 %v310
  %v705 = vpop.f32.mrf.mxu0
  %v706 = vadd.f32 0.0, %v705
  %v707 = vpop.f32.mrf.mxu0
  %v708 = vpop.f32.mrf.mxu0
  %v709 = vadd.f32 0.0, %v708
  %v710 = vpop.f32.mrf.mxu0
  %711 = vmatprep.mubr.bf16.mxu0 0
  %712 = vmatmul.mubr.bf16.gmra.mxu0 %v311
  %v713 = vpop.f32.mrf.mxu0
  %v714 = vadd.f32 0.0, %v713
  %v715 = vpop.f32.mrf.mxu0
  %v716 = vpop.f32.mrf.mxu0
  %v717 = vadd.f32 0.0, %v716
  %v718 = vpop.f32.mrf.mxu0
  %719 = vmatprep.mubr.bf16.mxu0 0
  %720 = vmatmul.mubr.bf16.gmra.mxu0 %v312
  %v721 = vpop.f32.mrf.mxu0
  %v722 = vadd.f32 0.0, %v721
  %v723 = vpop.f32.mrf.mxu0
  %v724 = vpop.f32.mrf.mxu0
  %v725 = vadd.f32 0.0, %v724
  %v726 = vpop.f32.mrf.mxu0
  %727 = vmatprep.mubr.bf16.mxu0 0
  %728 = vmatmul.mubr.bf16.gmra.mxu0 %v313
  %v729 = vpop.f32.mrf.mxu0
  %v730 = vadd.f32 0.0, %v729
  %v731 = vpop.f32.mrf.mxu0
  %v732 = vpop.f32.mrf.mxu0
  %v733 = vadd.f32 0.0, %v732
  %v734 = vpop.f32.mrf.mxu0
  %735 = vmatprep.mubr.bf16.mxu0 0
  %736 = vmatmul.mubr.bf16.gmra.mxu0 %v314
  %v737 = vpop.f32.mrf.mxu0
  %v738 = vadd.f32 0.0, %v737
  %v739 = vpop.f32.mrf.mxu0
  %v740 = vpop.f32.mrf.mxu0
  %v741 = vadd.f32 0.0, %v740
  %v742 = vpop.f32.mrf.mxu0
  %743 = vmatprep.mubr.bf16.mxu0 0
  %744 = vmatmul.mubr.bf16.gmra.mxu0 %v315
  %v745 = vpop.f32.mrf.mxu0
  %v746 = vadd.f32 0.0, %v745
  %v747 = vpop.f32.mrf.mxu0
  %v748 = vpop.f32.mrf.mxu0
  %v749 = vadd.f32 0.0, %v748
  %v750 = vpop.f32.mrf.mxu0
  %751 = vmatprep.mubr.bf16.mxu0 0
  %752 = vmatmul.mubr.bf16.gmra.mxu0 %v316
  %v753 = vpop.f32.mrf.mxu0
  %v754 = vadd.f32 0.0, %v753
  %v755 = vpop.f32.mrf.mxu0
  %v756 = vpop.f32.mrf.mxu0
  %v757 = vadd.f32 0.0, %v756
  %v758 = vpop.f32.mrf.mxu0
  %759 = vmatprep.mubr.bf16.mxu0 0
  %760 = vmatmul.mubr.bf16.gmra.mxu0 %v317
  %v761 = vpop.f32.mrf.mxu0
  %v762 = vadd.f32 0.0, %v761
  %v763 = vpop.f32.mrf.mxu0
  %v764 = vpop.f32.mrf.mxu0
  %v765 = vpop.f32.mrf.mxu0
  %766 = vdwg.mxu0
  %v767 = vadd.f32 %v442, %v445
  %v768 = vadd.f32 %v767, %v450
  %v769 = vadd.f32 %v768, %v453
  %v770 = vadd.f32 %v769, %v458
  %v771 = vadd.f32 %v770, %v461
  %v772 = vadd.f32 %v771, %v466
  %v773 = vadd.f32 %v772, %v469
  %v774 = vadd.f32 %v773, %v474
  %v775 = vadd.f32 %v774, %v477
  %v776 = vadd.f32 %v775, %v482
  %v777 = vadd.f32 %v776, %v485
  %v778 = vadd.f32 %v777, %v490
  %v779 = vadd.f32 %v778, %v493
  %v780 = vadd.f32 %v779, %v498
  %v781 = vadd.f32 %v780, %v501
  %v782 = vadd.f32 %v781, %v506
  %v783 = vadd.f32 %v782, %v509
  %v784 = vadd.f32 %v783, %v514
  %v785 = vadd.f32 %v784, %v517
  %v786 = vadd.f32 %v785, %v522
  %v787 = vadd.f32 %v786, %v525
  %v788 = vadd.f32 %v787, %v530
  %v789 = vadd.f32 %v788, %v533
  %v790 = vadd.f32 %v789, %v538
  %v791 = vadd.f32 %v790, %v541
  %v792 = vadd.f32 %v791, %v546
  %v793 = vadd.f32 %v792, %v549
  %v794 = vadd.f32 %v793, %v554
  %v795 = vadd.f32 %v794, %v557
  %v796 = vadd.f32 %v795, %v562
  %v797 = vadd.f32 %v796, %v565
  %v798 = vadd.f32 %v797, %v570
  %v799 = vadd.f32 %v798, %v573
  %v800 = vadd.f32 %v799, %v578
  %v801 = vadd.f32 %v800, %v581
  %v802 = vadd.f32 %v801, %v586
  %v803 = vadd.f32 %v802, %v589
  %v804 = vadd.f32 %v803, %v594
  %v805 = vadd.f32 %v804, %v597
  %v806 = vadd.f32 %v805, %v602
  %v807 = vadd.f32 %v806, %v605
  %v808 = vadd.f32 %v807, %v610
  %v809 = vadd.f32 %v808, %v613
  %v810 = vadd.f32 %v809, %v618
  %v811 = vadd.f32 %v810, %v621
  %v812 = vadd.f32 %v811, %v626
  %v813 = vadd.f32 %v812, %v629
  %v814 = vadd.f32 %v813, %v634
  %v815 = vadd.f32 %v814, %v637
  %v816 = vadd.f32 %v815, %v642
  %v817 = vadd.f32 %v816, %v645
  %v818 = vadd.f32 %v817, %v650
  %v819 = vadd.f32 %v818, %v653
  %v820 = vadd.f32 %v819, %v658
  %v821 = vadd.f32 %v820, %v661
  %v822 = vadd.f32 %v821, %v666
  %v823 = vadd.f32 %v822, %v669
  %v824 = vadd.f32 %v823, %v674
  %v825 = vadd.f32 %v824, %v677
  %v826 = vadd.f32 %v825, %v682
  %v827 = vadd.f32 %v826, %v685
  %v828 = vadd.f32 %v827, %v690
  %v829 = vadd.f32 %v828, %v693
  %v830 = vadd.f32 %v829, %v698
  %v831 = vadd.f32 %v830, %v701
  %v832 = vadd.f32 %v831, %v706
  %v833 = vadd.f32 %v832, %v709
  %v834 = vadd.f32 %v833, %v714
  %v835 = vadd.f32 %v834, %v717
  %v836 = vadd.f32 %v835, %v722
  %v837 = vadd.f32 %v836, %v725
  %v838 = vadd.f32 %v837, %v730
  %v839 = vadd.f32 %v838, %v733
  %v840 = vadd.f32 %v839, %v738
  %v841 = vadd.f32 %v840, %v741
  %v842 = vadd.f32 %v841, %v746
  %v843 = vadd.f32 %v842, %v749
  %v844 = vadd.f32 %v843, %v754
  %v845 = vadd.f32 %v844, %v757
  %v846 = vadd.f32 %v845, %v762
  %v847 = vrot.slane %v846, 4
  %v848 = vadd.f32 %v846, %v847
  %v849 = vrot.slane %v848, 2
  %v850 = vadd.f32 %v848, %v849
  %v851 = vrot.slane %v850, 1
  %v852 = vadd.f32 %v850, %v851
  %v853 = vrcp.pop 648.0
  %v854 = vmul.f32 %v852, %v853
  %v855 = vmul.f32 %v442, %v442
  %v856 = vmul.f32 %v445, %v445
  %v857 = vmul.f32 %v450, %v450
  %v858 = vmul.f32 %v453, %v453
  %v859 = vmul.f32 %v458, %v458
  %v860 = vmul.f32 %v461, %v461
  %v861 = vmul.f32 %v466, %v466
  %v862 = vmul.f32 %v469, %v469
  %v863 = vmul.f32 %v474, %v474
  %v864 = vmul.f32 %v477, %v477
  %v865 = vmul.f32 %v482, %v482
  %v866 = vmul.f32 %v485, %v485
  %v867 = vmul.f32 %v490, %v490
  %v868 = vmul.f32 %v493, %v493
  %v869 = vmul.f32 %v498, %v498
  %v870 = vmul.f32 %v501, %v501
  %v871 = vmul.f32 %v506, %v506
  %v872 = vmul.f32 %v509, %v509
  %v873 = vmul.f32 %v514, %v514
  %v874 = vmul.f32 %v517, %v517
  %v875 = vmul.f32 %v522, %v522
  %v876 = vmul.f32 %v525, %v525
  %v877 = vmul.f32 %v530, %v530
  %v878 = vmul.f32 %v533, %v533
  %v879 = vmul.f32 %v538, %v538
  %v880 = vmul.f32 %v541, %v541
  %v881 = vmul.f32 %v546, %v546
  %v882 = vmul.f32 %v549, %v549
  %v883 = vmul.f32 %v554, %v554
  %v884 = vmul.f32 %v557, %v557
  %v885 = vmul.f32 %v562, %v562
  %v886 = vmul.f32 %v565, %v565
  %v887 = vmul.f32 %v570, %v570
  %v888 = vmul.f32 %v573, %v573
  %v889 = vmul.f32 %v578, %v578
  %v890 = vmul.f32 %v581, %v581
  %v891 = vmul.f32 %v586, %v586
  %v892 = vmul.f32 %v589, %v589
  %v893 = vmul.f32 %v594, %v594
  %v894 = vmul.f32 %v597, %v597
  %v895 = vmul.f32 %v602, %v602
  %v896 = vmul.f32 %v605, %v605
  %v897 = vmul.f32 %v610, %v610
  %v898 = vmul.f32 %v613, %v613
  %v899 = vmul.f32 %v618, %v618
  %v900 = vmul.f32 %v621, %v621
  %v901 = vmul.f32 %v626, %v626
  %v902 = vmul.f32 %v629, %v629
  %v903 = vmul.f32 %v634, %v634
  %v904 = vmul.f32 %v637, %v637
  %v905 = vmul.f32 %v642, %v642
  %v906 = vmul.f32 %v645, %v645
  %v907 = vmul.f32 %v650, %v650
  %v908 = vmul.f32 %v653, %v653
  %v909 = vmul.f32 %v658, %v658
  %v910 = vmul.f32 %v661, %v661
  %v911 = vmul.f32 %v666, %v666
  %v912 = vmul.f32 %v669, %v669
  %v913 = vmul.f32 %v674, %v674
  %v914 = vmul.f32 %v677, %v677
  %v915 = vmul.f32 %v682, %v682
  %v916 = vmul.f32 %v685, %v685
  %v917 = vmul.f32 %v690, %v690
  %v918 = vmul.f32 %v693, %v693
  %v919 = vmul.f32 %v698, %v698
  %v920 = vmul.f32 %v701, %v701
  %v921 = vmul.f32 %v706, %v706
  %v922 = vmul.f32 %v709, %v709
  %v923 = vmul.f32 %v714, %v714
  %v924 = vmul.f32 %v717, %v717
  %v925 = vmul.f32 %v722, %v722
  %v926 = vmul.f32 %v725, %v725
  %v927 = vmul.f32 %v730, %v730
  %v928 = vmul.f32 %v733, %v733
  %v929 = vmul.f32 %v738, %v738
  %v930 = vmul.f32 %v741, %v741
  %v931 = vmul.f32 %v746, %v746
  %v932 = vmul.f32 %v749, %v749
  %v933 = vmul.f32 %v754, %v754
  %v934 = vmul.f32 %v757, %v757
  %v935 = vmul.f32 %v762, %v762
  %v936 = vadd.f32 %v855, %v856
  %v937 = vadd.f32 %v936, %v857
  %v938 = vadd.f32 %v937, %v858
  %v939 = vadd.f32 %v938, %v859
  %v940 = vadd.f32 %v939, %v860
  %v941 = vadd.f32 %v940, %v861
  %v942 = vadd.f32 %v941, %v862
  %v943 = vadd.f32 %v942, %v863
  %v944 = vadd.f32 %v943, %v864
  %v945 = vadd.f32 %v944, %v865
  %v946 = vadd.f32 %v945, %v866
  %v947 = vadd.f32 %v946, %v867
  %v948 = vadd.f32 %v947, %v868
  %v949 = vadd.f32 %v948, %v869
  %v950 = vadd.f32 %v949, %v870
  %v951 = vadd.f32 %v950, %v871
  %v952 = vadd.f32 %v951, %v872
  %v953 = vadd.f32 %v952, %v873
  %v954 = vadd.f32 %v953, %v874
  %v955 = vadd.f32 %v954, %v875
  %v956 = vadd.f32 %v955, %v876
  %v957 = vadd.f32 %v956, %v877
  %v958 = vadd.f32 %v957, %v878
  %v959 = vadd.f32 %v958, %v879
  %v960 = vadd.f32 %v959, %v880
  %v961 = vadd.f32 %v960, %v881
  %v962 = vadd.f32 %v961, %v882
  %v963 = vadd.f32 %v962, %v883
  %v964 = vadd.f32 %v963, %v884
  %v965 = vadd.f32 %v964, %v885
  %v966 = vadd.f32 %v965, %v886
  %v967 = vadd.f32 %v966, %v887
  %v968 = vadd.f32 %v967, %v888
  %v969 = vadd.f32 %v968, %v889
  %v970 = vadd.f32 %v969, %v890
  %v971 = vadd.f32 %v970, %v891
  %v972 = vadd.f32 %v971, %v892
  %v973 = vadd.f32 %v972, %v893
  %v974 = vadd.f32 %v973, %v894
  %v975 = vadd.f32 %v974, %v895
  %v976 = vadd.f32 %v975, %v896
  %v977 = vadd.f32 %v976, %v897
  %v978 = vadd.f32 %v977, %v898
  %v979 = vadd.f32 %v978, %v899
  %v980 = vadd.f32 %v979, %v900
  %v981 = vadd.f32 %v980, %v901
  %v982 = vadd.f32 %v981, %v902
  %v983 = vadd.f32 %v982, %v903
  %v984 = vadd.f32 %v983, %v904
  %v985 = vadd.f32 %v984, %v905
  %v986 = vadd.f32 %v985, %v906
  %v987 = vadd.f32 %v986, %v907
  %v988 = vadd.f32 %v987, %v908
  %v989 = vadd.f32 %v988, %v909
  %v990 = vadd.f32 %v989, %v910
  %v991 = vadd.f32 %v990, %v911
  %v992 = vadd.f32 %v991, %v912
  %v993 = vadd.f32 %v992, %v913
  %v994 = vadd.f32 %v993, %v914
  %v995 = vadd.f32 %v994, %v915
  %v996 = vadd.f32 %v995, %v916
  %v997 = vadd.f32 %v996, %v917
  %v998 = vadd.f32 %v997, %v918
  %v999 = vadd.f32 %v998, %v919
  %v1000 = vadd.f32 %v999, %v920
  %v1001 = vadd.f32 %v1000, %v921
  %v1002 = vadd.f32 %v1001, %v922
  %v1003 = vadd.f32 %v1002, %v923
  %v1004 = vadd.f32 %v1003, %v924
  %v1005 = vadd.f32 %v1004, %v925
  %v1006 = vadd.f32 %v1005, %v926
  %v1007 = vadd.f32 %v1006, %v927
  %v1008 = vadd.f32 %v1007, %v928
  %v1009 = vadd.f32 %v1008, %v929
  %v1010 = vadd.f32 %v1009, %v930
  %v1011 = vadd.f32 %v1010, %v931
  %v1012 = vadd.f32 %v1011, %v932
  %v1013 = vadd.f32 %v1012, %v933
  %v1014 = vadd.f32 %v1013, %v934
  %v1015 = vadd.f32 %v1014, %v935
  %v1016 = vrot.slane %v1015, 4
  %v1017 = vadd.f32 %v1015, %v1016
  %v1018 = vrot.slane %v1017, 2
  %v1019 = vadd.f32 %v1017, %v1018
  %v1020 = vrot.slane %v1019, 1
  %v1021 = vadd.f32 %v1019, %v1020
  %v1022 = vmul.f32 %v1021, %v853
  %v1023 = vmul.f32 %v854, %v854
  %v1024 = vsub.f32 %v1022, %v1023
  %v1025 = vmax.f32 %v1024, 0.0
  %v1026 = vld [vmem:[%s2] sm:$0x1]
  %v1027 = vadd.f32 %v1025, 1e-05
  %v1028 = vrsqrt.pop %v1027
  %v1029 = vmul.f32 %v1026, %v1028
  %v1030 = vld [vmem:[%s3] sm:$0x1]
  %v1031 = vmul.f32 %v854, %v1029
  %v1032 = vsub.f32 %v1030, %v1031
  %v1034 = vlaneseq
  %v1035 = vshrl.u32 %v1034, 7
  %v1036 = vsub.s32 0, %v1035
  %v1037 = vrot.slane %v1029, %v1036
  %v1039 = vmul.f32 %v442, %v1037
  %v1040 = vmul.f32 %v445, %v1037
  %v1041 = vmul.f32 %v450, %v1037
  %v1042 = vmul.f32 %v453, %v1037
  %v1043 = vmul.f32 %v458, %v1037
  %v1044 = vmul.f32 %v461, %v1037
  %v1045 = vmul.f32 %v466, %v1037
  %v1046 = vmul.f32 %v469, %v1037
  %v1047 = vmul.f32 %v474, %v1037
  %v1048 = vmul.f32 %v477, %v1037
  %v1049 = vmul.f32 %v482, %v1037
  %v1050 = vmul.f32 %v485, %v1037
  %v1051 = vmul.f32 %v490, %v1037
  %v1052 = vmul.f32 %v493, %v1037
  %v1053 = vmul.f32 %v498, %v1037
  %v1054 = vmul.f32 %v501, %v1037
  %v1055 = vmul.f32 %v506, %v1037
  %v1056 = vmul.f32 %v509, %v1037
  %v1057 = vmul.f32 %v514, %v1037
  %v1058 = vmul.f32 %v517, %v1037
  %v1059 = vmul.f32 %v522, %v1037
  %v1060 = vmul.f32 %v525, %v1037
  %v1061 = vmul.f32 %v530, %v1037
  %v1062 = vmul.f32 %v533, %v1037
  %v1063 = vmul.f32 %v538, %v1037
  %v1064 = vmul.f32 %v541, %v1037
  %v1065 = vmul.f32 %v546, %v1037
  %v1066 = vmul.f32 %v549, %v1037
  %v1067 = vmul.f32 %v554, %v1037
  %v1068 = vmul.f32 %v557, %v1037
  %v1069 = vmul.f32 %v562, %v1037
  %v1070 = vmul.f32 %v565, %v1037
  %v1071 = vmul.f32 %v570, %v1037
  %v1072 = vmul.f32 %v573, %v1037
  %v1073 = vmul.f32 %v578, %v1037
  %v1074 = vmul.f32 %v581, %v1037
  %v1075 = vmul.f32 %v586, %v1037
  %v1076 = vmul.f32 %v589, %v1037
  %v1077 = vmul.f32 %v594, %v1037
  %v1078 = vmul.f32 %v597, %v1037
  %v1079 = vmul.f32 %v602, %v1037
  %v1080 = vmul.f32 %v605, %v1037
  %v1081 = vmul.f32 %v610, %v1037
  %v1082 = vmul.f32 %v613, %v1037
  %v1083 = vmul.f32 %v618, %v1037
  %v1084 = vmul.f32 %v621, %v1037
  %v1085 = vmul.f32 %v626, %v1037
  %v1086 = vmul.f32 %v629, %v1037
  %v1087 = vmul.f32 %v634, %v1037
  %v1088 = vmul.f32 %v637, %v1037
  %v1089 = vmul.f32 %v642, %v1037
  %v1090 = vmul.f32 %v645, %v1037
  %v1091 = vmul.f32 %v650, %v1037
  %v1092 = vmul.f32 %v653, %v1037
  %v1093 = vmul.f32 %v658, %v1037
  %v1094 = vmul.f32 %v661, %v1037
  %v1095 = vmul.f32 %v666, %v1037
  %v1096 = vmul.f32 %v669, %v1037
  %v1097 = vmul.f32 %v674, %v1037
  %v1098 = vmul.f32 %v677, %v1037
  %v1099 = vmul.f32 %v682, %v1037
  %v1100 = vmul.f32 %v685, %v1037
  %v1101 = vmul.f32 %v690, %v1037
  %v1102 = vmul.f32 %v693, %v1037
  %v1103 = vmul.f32 %v698, %v1037
  %v1104 = vmul.f32 %v701, %v1037
  %v1105 = vmul.f32 %v706, %v1037
  %v1106 = vmul.f32 %v709, %v1037
  %v1107 = vmul.f32 %v714, %v1037
  %v1108 = vmul.f32 %v717, %v1037
  %v1109 = vmul.f32 %v722, %v1037
  %v1110 = vmul.f32 %v725, %v1037
  %v1111 = vmul.f32 %v730, %v1037
  %v1112 = vmul.f32 %v733, %v1037
  %v1113 = vmul.f32 %v738, %v1037
  %v1114 = vmul.f32 %v741, %v1037
  %v1115 = vmul.f32 %v746, %v1037
  %v1116 = vmul.f32 %v749, %v1037
  %v1117 = vmul.f32 %v754, %v1037
  %v1118 = vmul.f32 %v757, %v1037
  %v1119 = vmul.f32 %v762, %v1037
  %v1121 = vlaneseq
  %v1122 = vshrl.u32 %v1121, 7
  %v1123 = vsub.s32 0, %v1122
  %v1124 = vrot.slane %v1032, %v1123
  %v1126 = vadd.f32 %v1039, %v1124
  %v1127 = vadd.f32 %v1040, %v1124
  %v1128 = vadd.f32 %v1041, %v1124
  %v1129 = vadd.f32 %v1042, %v1124
  %v1130 = vadd.f32 %v1043, %v1124
  %v1131 = vadd.f32 %v1044, %v1124
  %v1132 = vadd.f32 %v1045, %v1124
  %v1133 = vadd.f32 %v1046, %v1124
  %v1134 = vadd.f32 %v1047, %v1124
  %v1135 = vadd.f32 %v1048, %v1124
  %v1136 = vadd.f32 %v1049, %v1124
  %v1137 = vadd.f32 %v1050, %v1124
  %v1138 = vadd.f32 %v1051, %v1124
  %v1139 = vadd.f32 %v1052, %v1124
  %v1140 = vadd.f32 %v1053, %v1124
  %v1141 = vadd.f32 %v1054, %v1124
  %v1142 = vadd.f32 %v1055, %v1124
  %v1143 = vadd.f32 %v1056, %v1124
  %v1144 = vadd.f32 %v1057, %v1124
  %v1145 = vadd.f32 %v1058, %v1124
  %v1146 = vadd.f32 %v1059, %v1124
  %v1147 = vadd.f32 %v1060, %v1124
  %v1148 = vadd.f32 %v1061, %v1124
  %v1149 = vadd.f32 %v1062, %v1124
  %v1150 = vadd.f32 %v1063, %v1124
  %v1151 = vadd.f32 %v1064, %v1124
  %v1152 = vadd.f32 %v1065, %v1124
  %v1153 = vadd.f32 %v1066, %v1124
  %v1154 = vadd.f32 %v1067, %v1124
  %v1155 = vadd.f32 %v1068, %v1124
  %v1156 = vadd.f32 %v1069, %v1124
  %v1157 = vadd.f32 %v1070, %v1124
  %v1158 = vadd.f32 %v1071, %v1124
  %v1159 = vadd.f32 %v1072, %v1124
  %v1160 = vadd.f32 %v1073, %v1124
  %v1161 = vadd.f32 %v1074, %v1124
  %v1162 = vadd.f32 %v1075, %v1124
  %v1163 = vadd.f32 %v1076, %v1124
  %v1164 = vadd.f32 %v1077, %v1124
  %v1165 = vadd.f32 %v1078, %v1124
  %v1166 = vadd.f32 %v1079, %v1124
  %v1167 = vadd.f32 %v1080, %v1124
  %v1168 = vadd.f32 %v1081, %v1124
  %v1169 = vadd.f32 %v1082, %v1124
  %v1170 = vadd.f32 %v1083, %v1124
  %v1171 = vadd.f32 %v1084, %v1124
  %v1172 = vadd.f32 %v1085, %v1124
  %v1173 = vadd.f32 %v1086, %v1124
  %v1174 = vadd.f32 %v1087, %v1124
  %v1175 = vadd.f32 %v1088, %v1124
  %v1176 = vadd.f32 %v1089, %v1124
  %v1177 = vadd.f32 %v1090, %v1124
  %v1178 = vadd.f32 %v1091, %v1124
  %v1179 = vadd.f32 %v1092, %v1124
  %v1180 = vadd.f32 %v1093, %v1124
  %v1181 = vadd.f32 %v1094, %v1124
  %v1182 = vadd.f32 %v1095, %v1124
  %v1183 = vadd.f32 %v1096, %v1124
  %v1184 = vadd.f32 %v1097, %v1124
  %v1185 = vadd.f32 %v1098, %v1124
  %v1186 = vadd.f32 %v1099, %v1124
  %v1187 = vadd.f32 %v1100, %v1124
  %v1188 = vadd.f32 %v1101, %v1124
  %v1189 = vadd.f32 %v1102, %v1124
  %v1190 = vadd.f32 %v1103, %v1124
  %v1191 = vadd.f32 %v1104, %v1124
  %v1192 = vadd.f32 %v1105, %v1124
  %v1193 = vadd.f32 %v1106, %v1124
  %v1194 = vadd.f32 %v1107, %v1124
  %v1195 = vadd.f32 %v1108, %v1124
  %v1196 = vadd.f32 %v1109, %v1124
  %v1197 = vadd.f32 %v1110, %v1124
  %v1198 = vadd.f32 %v1111, %v1124
  %v1199 = vadd.f32 %v1112, %v1124
  %v1200 = vadd.f32 %v1113, %v1124
  %v1201 = vadd.f32 %v1114, %v1124
  %v1202 = vadd.f32 %v1115, %v1124
  %v1203 = vadd.f32 %v1116, %v1124
  %v1204 = vadd.f32 %v1117, %v1124
  %v1205 = vadd.f32 %v1118, %v1124
  %v1206 = vadd.f32 %v1119, %v1124
  %v1207 = vmax.f32 %v1126, 0.0
  %v1208 = vmax.f32 %v1127, 0.0
  %v1209 = vmax.f32 %v1128, 0.0
  %v1210 = vmax.f32 %v1129, 0.0
  %v1211 = vmax.f32 %v1130, 0.0
  %v1212 = vmax.f32 %v1131, 0.0
  %v1213 = vmax.f32 %v1132, 0.0
  %v1214 = vmax.f32 %v1133, 0.0
  %v1215 = vmax.f32 %v1134, 0.0
  %v1216 = vmax.f32 %v1135, 0.0
  %v1217 = vmax.f32 %v1136, 0.0
  %v1218 = vmax.f32 %v1137, 0.0
  %v1219 = vmax.f32 %v1138, 0.0
  %v1220 = vmax.f32 %v1139, 0.0
  %v1221 = vmax.f32 %v1140, 0.0
  %v1222 = vmax.f32 %v1141, 0.0
  %v1223 = vmax.f32 %v1142, 0.0
  %v1224 = vmax.f32 %v1143, 0.0
  %v1225 = vmax.f32 %v1144, 0.0
  %v1226 = vmax.f32 %v1145, 0.0
  %v1227 = vmax.f32 %v1146, 0.0
  %v1228 = vmax.f32 %v1147, 0.0
  %v1229 = vmax.f32 %v1148, 0.0
  %v1230 = vmax.f32 %v1149, 0.0
  %v1231 = vmax.f32 %v1150, 0.0
  %v1232 = vmax.f32 %v1151, 0.0
  %v1233 = vmax.f32 %v1152, 0.0
  %v1234 = vmax.f32 %v1153, 0.0
  %v1235 = vmax.f32 %v1154, 0.0
  %v1236 = vmax.f32 %v1155, 0.0
  %v1237 = vmax.f32 %v1156, 0.0
  %v1238 = vmax.f32 %v1157, 0.0
  %v1239 = vmax.f32 %v1158, 0.0
  %v1240 = vmax.f32 %v1159, 0.0
  %v1241 = vmax.f32 %v1160, 0.0
  %v1242 = vmax.f32 %v1161, 0.0
  %v1243 = vmax.f32 %v1162, 0.0
  %v1244 = vmax.f32 %v1163, 0.0
  %v1245 = vmax.f32 %v1164, 0.0
  %v1246 = vmax.f32 %v1165, 0.0
  %v1247 = vmax.f32 %v1166, 0.0
  %v1248 = vmax.f32 %v1167, 0.0
  %v1249 = vmax.f32 %v1168, 0.0
  %v1250 = vmax.f32 %v1169, 0.0
  %v1251 = vmax.f32 %v1170, 0.0
  %v1252 = vmax.f32 %v1171, 0.0
  %v1253 = vmax.f32 %v1172, 0.0
  %v1254 = vmax.f32 %v1173, 0.0
  %v1255 = vmax.f32 %v1174, 0.0
  %v1256 = vmax.f32 %v1175, 0.0
  %v1257 = vmax.f32 %v1176, 0.0
  %v1258 = vmax.f32 %v1177, 0.0
  %v1259 = vmax.f32 %v1178, 0.0
  %v1260 = vmax.f32 %v1179, 0.0
  %v1261 = vmax.f32 %v1180, 0.0
  %v1262 = vmax.f32 %v1181, 0.0
  %v1263 = vmax.f32 %v1182, 0.0
  %v1264 = vmax.f32 %v1183, 0.0
  %v1265 = vmax.f32 %v1184, 0.0
  %v1266 = vmax.f32 %v1185, 0.0
  %v1267 = vmax.f32 %v1186, 0.0
  %v1268 = vmax.f32 %v1187, 0.0
  %v1269 = vmax.f32 %v1188, 0.0
  %v1270 = vmax.f32 %v1189, 0.0
  %v1271 = vmax.f32 %v1190, 0.0
  %v1272 = vmax.f32 %v1191, 0.0
  %v1273 = vmax.f32 %v1192, 0.0
  %v1274 = vmax.f32 %v1193, 0.0
  %v1275 = vmax.f32 %v1194, 0.0
  %v1276 = vmax.f32 %v1195, 0.0
  %v1277 = vmax.f32 %v1196, 0.0
  %v1278 = vmax.f32 %v1197, 0.0
  %v1279 = vmax.f32 %v1198, 0.0
  %v1280 = vmax.f32 %v1199, 0.0
  %v1281 = vmax.f32 %v1200, 0.0
  %v1282 = vmax.f32 %v1201, 0.0
  %v1283 = vmax.f32 %v1202, 0.0
  %v1284 = vmax.f32 %v1203, 0.0
  %v1285 = vmax.f32 %v1204, 0.0
  %v1286 = vmax.f32 %v1205, 0.0
  %v1287 = vmax.f32 %v1206, 0.0
  %v1288 = vpack.c.bf16 %v1208, %v1207
  %v1289 = vpack.c.bf16 %v1210, %v1209
  %v1290 = vpack.c.bf16 %v1212, %v1211
  %v1291 = vpack.c.bf16 %v1214, %v1213
  %v1292 = vpack.c.bf16 %v1216, %v1215
  %v1293 = vpack.c.bf16 %v1218, %v1217
  %v1294 = vpack.c.bf16 %v1220, %v1219
  %v1295 = vpack.c.bf16 %v1222, %v1221
  %v1296 = vpack.c.bf16 %v1224, %v1223
  %v1297 = vpack.c.bf16 %v1226, %v1225
  %v1298 = vpack.c.bf16 %v1228, %v1227
  %v1299 = vpack.c.bf16 %v1230, %v1229
  %v1300 = vpack.c.bf16 %v1232, %v1231
  %v1301 = vpack.c.bf16 %v1234, %v1233
  %v1302 = vpack.c.bf16 %v1236, %v1235
  %v1303 = vpack.c.bf16 %v1238, %v1237
  %v1304 = vpack.c.bf16 %v1240, %v1239
  %v1305 = vpack.c.bf16 %v1242, %v1241
  %v1306 = vpack.c.bf16 %v1244, %v1243
  %v1307 = vpack.c.bf16 %v1246, %v1245
  %v1308 = vpack.c.bf16 %v1248, %v1247
  %v1309 = vpack.c.bf16 %v1250, %v1249
  %v1310 = vpack.c.bf16 %v1252, %v1251
  %v1311 = vpack.c.bf16 %v1254, %v1253
  %v1312 = vpack.c.bf16 %v1256, %v1255
  %v1313 = vpack.c.bf16 %v1258, %v1257
  %v1314 = vpack.c.bf16 %v1260, %v1259
  %v1315 = vpack.c.bf16 %v1262, %v1261
  %v1316 = vpack.c.bf16 %v1264, %v1263
  %v1317 = vpack.c.bf16 %v1266, %v1265
  %v1318 = vpack.c.bf16 %v1268, %v1267
  %v1319 = vpack.c.bf16 %v1270, %v1269
  %v1320 = vpack.c.bf16 %v1272, %v1271
  %v1321 = vpack.c.bf16 %v1274, %v1273
  %v1322 = vpack.c.bf16 %v1276, %v1275
  %v1323 = vpack.c.bf16 %v1278, %v1277
  %v1324 = vpack.c.bf16 %v1280, %v1279
  %v1325 = vpack.c.bf16 %v1282, %v1281
  %v1326 = vpack.c.bf16 %v1284, %v1283
  %v1327 = vpack.c.bf16 %v1286, %v1285
  %v1328 = vpack.c.bf16 %v1287, %v1287
  %v1370 = vunpack.c.l.b16 %v1288
  %v1371 = vunpack.c.h.b16 %v1288
  %v1372 = vunpack.c.l.b16 %v1289
  %v1373 = vunpack.c.h.b16 %v1289
  %v1374 = vunpack.c.l.b16 %v1290
  %v1375 = vunpack.c.h.b16 %v1290
  %v1376 = vunpack.c.l.b16 %v1291
  %v1377 = vunpack.c.h.b16 %v1291
  %v1378 = vunpack.c.l.b16 %v1292
  %v1379 = vunpack.c.h.b16 %v1292
  %v1380 = vunpack.c.l.b16 %v1293
  %v1381 = vunpack.c.h.b16 %v1293
  %v1382 = vunpack.c.l.b16 %v1294
  %v1383 = vunpack.c.h.b16 %v1294
  %v1384 = vunpack.c.l.b16 %v1295
  %v1385 = vunpack.c.h.b16 %v1295
  %v1386 = vunpack.c.l.b16 %v1296
  %v1387 = vunpack.c.h.b16 %v1296
  %v1388 = vunpack.c.l.b16 %v1297
  %v1389 = vunpack.c.h.b16 %v1297
  %v1390 = vunpack.c.l.b16 %v1298
  %v1391 = vunpack.c.h.b16 %v1298
  %v1392 = vunpack.c.l.b16 %v1299
  %v1393 = vunpack.c.h.b16 %v1299
  %v1394 = vunpack.c.l.b16 %v1300
  %v1395 = vunpack.c.h.b16 %v1300
  %v1396 = vunpack.c.l.b16 %v1301
  %v1397 = vunpack.c.h.b16 %v1301
  %v1398 = vunpack.c.l.b16 %v1302
  %v1399 = vunpack.c.h.b16 %v1302
  %v1400 = vunpack.c.l.b16 %v1303
  %v1401 = vunpack.c.h.b16 %v1303
  %v1402 = vunpack.c.l.b16 %v1304
  %v1403 = vunpack.c.h.b16 %v1304
  %v1404 = vunpack.c.l.b16 %v1305
  %v1405 = vunpack.c.h.b16 %v1305
  %v1406 = vunpack.c.l.b16 %v1306
  %v1407 = vunpack.c.h.b16 %v1306
  %v1408 = vunpack.c.l.b16 %v1307
  %v1409 = vunpack.c.h.b16 %v1307
  %v1410 = vunpack.c.l.b16 %v1308
  %v1411 = vunpack.c.h.b16 %v1308
  %v1412 = vunpack.c.l.b16 %v1309
  %v1413 = vunpack.c.h.b16 %v1309
  %v1414 = vunpack.c.l.b16 %v1310
  %v1415 = vunpack.c.h.b16 %v1310
  %v1416 = vunpack.c.l.b16 %v1311
  %v1417 = vunpack.c.h.b16 %v1311
  %v1418 = vunpack.c.l.b16 %v1312
  %v1419 = vunpack.c.h.b16 %v1312
  %v1420 = vunpack.c.l.b16 %v1313
  %v1421 = vunpack.c.h.b16 %v1313
  %v1422 = vunpack.c.l.b16 %v1314
  %v1423 = vunpack.c.h.b16 %v1314
  %v1424 = vunpack.c.l.b16 %v1315
  %v1425 = vunpack.c.h.b16 %v1315
  %v1426 = vunpack.c.l.b16 %v1316
  %v1427 = vunpack.c.h.b16 %v1316
  %v1428 = vunpack.c.l.b16 %v1317
  %v1429 = vunpack.c.h.b16 %v1317
  %v1430 = vunpack.c.l.b16 %v1318
  %v1431 = vunpack.c.h.b16 %v1318
  %v1432 = vunpack.c.l.b16 %v1319
  %v1433 = vunpack.c.h.b16 %v1319
  %v1434 = vunpack.c.l.b16 %v1320
  %v1435 = vunpack.c.h.b16 %v1320
  %v1436 = vunpack.c.l.b16 %v1321
  %v1437 = vunpack.c.h.b16 %v1321
  %v1438 = vunpack.c.l.b16 %v1322
  %v1439 = vunpack.c.h.b16 %v1322
  %v1440 = vunpack.c.l.b16 %v1323
  %v1441 = vunpack.c.h.b16 %v1323
  %v1442 = vunpack.c.l.b16 %v1324
  %v1443 = vunpack.c.h.b16 %v1324
  %v1444 = vunpack.c.l.b16 %v1325
  %v1445 = vunpack.c.h.b16 %v1325
  %v1446 = vunpack.c.l.b16 %v1326
  %v1447 = vunpack.c.h.b16 %v1326
  %v1448 = vunpack.c.l.b16 %v1327
  %v1449 = vunpack.c.h.b16 %v1327
  %v1450 = vunpack.c.l.b16 %v1328
  %v1451 = vpack.c.b16 %v1370, %v1370
  %v1452 = vpack.c.b16 %v1371, %v1371
  %v1453 = vpack.c.b16 %v1372, %v1372
  %v1454 = vpack.c.b16 %v1373, %v1373
  %v1455 = vpack.c.b16 %v1374, %v1374
  %v1456 = vpack.c.b16 %v1375, %v1375
  %v1457 = vpack.c.b16 %v1376, %v1376
  %v1458 = vpack.c.b16 %v1377, %v1377
  %v1459 = vpack.c.b16 %v1378, %v1378
  %v1460 = vpack.c.b16 %v1379, %v1379
  %v1461 = vpack.c.b16 %v1380, %v1380
  %v1462 = vpack.c.b16 %v1381, %v1381
  %v1463 = vpack.c.b16 %v1382, %v1382
  %v1464 = vpack.c.b16 %v1383, %v1383
  %v1465 = vpack.c.b16 %v1384, %v1384
  %v1466 = vpack.c.b16 %v1385, %v1385
  %v1467 = vpack.c.b16 %v1386, %v1386
  %v1468 = vpack.c.b16 %v1387, %v1387
  %v1469 = vpack.c.b16 %v1388, %v1388
  %v1470 = vpack.c.b16 %v1389, %v1389
  %v1471 = vpack.c.b16 %v1390, %v1390
  %v1472 = vpack.c.b16 %v1391, %v1391
  %v1473 = vpack.c.b16 %v1392, %v1392
  %v1474 = vpack.c.b16 %v1393, %v1393
  %v1475 = vpack.c.b16 %v1394, %v1394
  %v1476 = vpack.c.b16 %v1395, %v1395
  %v1477 = vpack.c.b16 %v1396, %v1396
  %v1478 = vpack.c.b16 %v1397, %v1397
  %v1479 = vpack.c.b16 %v1398, %v1398
  %v1480 = vpack.c.b16 %v1399, %v1399
  %v1481 = vpack.c.b16 %v1400, %v1400
  %v1482 = vpack.c.b16 %v1401, %v1401
  %v1483 = vpack.c.b16 %v1402, %v1402
  %v1484 = vpack.c.b16 %v1403, %v1403
  %v1485 = vpack.c.b16 %v1404, %v1404
  %v1486 = vpack.c.b16 %v1405, %v1405
  %v1487 = vpack.c.b16 %v1406, %v1406
  %v1488 = vpack.c.b16 %v1407, %v1407
  %v1489 = vpack.c.b16 %v1408, %v1408
  %v1490 = vpack.c.b16 %v1409, %v1409
  %v1491 = vpack.c.b16 %v1410, %v1410
  %v1492 = vpack.c.b16 %v1411, %v1411
  %v1493 = vpack.c.b16 %v1412, %v1412
  %v1494 = vpack.c.b16 %v1413, %v1413
  %v1495 = vpack.c.b16 %v1414, %v1414
  %v1496 = vpack.c.b16 %v1415, %v1415
  %v1497 = vpack.c.b16 %v1416, %v1416
  %v1498 = vpack.c.b16 %v1417, %v1417
  %v1499 = vpack.c.b16 %v1418, %v1418
  %v1500 = vpack.c.b16 %v1419, %v1419
  %v1501 = vpack.c.b16 %v1420, %v1420
  %v1502 = vpack.c.b16 %v1421, %v1421
  %v1503 = vpack.c.b16 %v1422, %v1422
  %v1504 = vpack.c.b16 %v1423, %v1423
  %v1505 = vpack.c.b16 %v1424, %v1424
  %v1506 = vpack.c.b16 %v1425, %v1425
  %v1507 = vpack.c.b16 %v1426, %v1426
  %v1508 = vpack.c.b16 %v1427, %v1427
  %v1509 = vpack.c.b16 %v1428, %v1428
  %v1510 = vpack.c.b16 %v1429, %v1429
  %v1511 = vpack.c.b16 %v1430, %v1430
  %v1512 = vpack.c.b16 %v1431, %v1431
  %v1513 = vpack.c.b16 %v1432, %v1432
  %v1514 = vpack.c.b16 %v1433, %v1433
  %v1515 = vpack.c.b16 %v1434, %v1434
  %v1516 = vpack.c.b16 %v1435, %v1435
  %v1517 = vpack.c.b16 %v1436, %v1436
  %v1518 = vpack.c.b16 %v1437, %v1437
  %v1519 = vpack.c.b16 %v1438, %v1438
  %v1520 = vpack.c.b16 %v1439, %v1439
  %v1521 = vpack.c.b16 %v1440, %v1440
  %v1522 = vpack.c.b16 %v1441, %v1441
  %v1523 = vpack.c.b16 %v1442, %v1442
  %v1524 = vpack.c.b16 %v1443, %v1443
  %v1525 = vpack.c.b16 %v1444, %v1444
  %v1526 = vpack.c.b16 %v1445, %v1445
  %v1527 = vpack.c.b16 %v1446, %v1446
  %v1528 = vpack.c.b16 %v1447, %v1447
  %v1529 = vpack.c.b16 %v1448, %v1448
  %v1530 = vpack.c.b16 %v1449, %v1449
  %v1531 = vpack.c.b16 %v1450, %v1450
  %1613 = vst [vmem:[%s4] sm:$0xf] %v1451
  %1614 = vst [vmem:[%s4 + $0x4] sm:$0xf] %v1452
  %1615 = vst [vmem:[%s4 + $0x8] sm:$0xf] %v1453
  %1616 = vst [vmem:[%s4 + $0xc] sm:$0xf] %v1454
  %1617 = vst [vmem:[%s4 + $0x10] sm:$0xf] %v1455
  %1618 = vst [vmem:[%s4 + $0x14] sm:$0xf] %v1456
  %1619 = vst [vmem:[%s4 + $0x18] sm:$0xf] %v1457
  %1620 = vst [vmem:[%s4 + $0x1c] sm:$0xf] %v1458
  %1621 = vst [vmem:[%s4 + $0x20] sm:$0xf] %v1459
  %1622 = vst [vmem:[%s4 + $0x24] sm:$0xf] %v1460
  %1623 = vst [vmem:[%s4 + $0x28] sm:$0xf] %v1461
  %1624 = vst [vmem:[%s4 + $0x2c] sm:$0xf] %v1462
  %1625 = vst [vmem:[%s4 + $0x30] sm:$0xf] %v1463
  %1626 = vst [vmem:[%s4 + $0x34] sm:$0xf] %v1464
  %1627 = vst [vmem:[%s4 + $0x38] sm:$0xf] %v1465
  %1628 = vst [vmem:[%s4 + $0x3c] sm:$0xf] %v1466
  %1629 = vst [vmem:[%s4 + $0x40] sm:$0xf] %v1467
  %1630 = vst [vmem:[%s4 + $0x44] sm:$0xf] %v1468
  %1631 = vst [vmem:[%s4 + $0x48] sm:$0xf] %v1469
  %1632 = vst [vmem:[%s4 + $0x4c] sm:$0xf] %v1470
  %1633 = vst [vmem:[%s4 + $0x50] sm:$0xf] %v1471
  %1634 = vst [vmem:[%s4 + $0x54] sm:$0xf] %v1472
  %1635 = vst [vmem:[%s4 + $0x58] sm:$0xf] %v1473
  %1636 = vst [vmem:[%s4 + $0x5c] sm:$0xf] %v1474
  %1637 = vst [vmem:[%s4 + $0x60] sm:$0xf] %v1475
  %1638 = vst [vmem:[%s4 + $0x64] sm:$0xf] %v1476
  %1639 = vst [vmem:[%s4 + $0x68] sm:$0xf] %v1477
  %1640 = vst [vmem:[%s4 + $0x6c] sm:$0xf] %v1478
  %1641 = vst [vmem:[%s4 + $0x70] sm:$0xf] %v1479
  %1642 = vst [vmem:[%s4 + $0x74] sm:$0xf] %v1480
  %1643 = vst [vmem:[%s4 + $0x78] sm:$0xf] %v1481
  %1644 = vst [vmem:[%s4 + $0x7c] sm:$0xf] %v1482
  %1645 = vst [vmem:[%s4 + $0x80] sm:$0xf] %v1483
  %1646 = vst [vmem:[%s4 + $0x84] sm:$0xf] %v1484
  %1647 = vst [vmem:[%s4 + $0x88] sm:$0xf] %v1485
  %1648 = vst [vmem:[%s4 + $0x8c] sm:$0xf] %v1486
  %1649 = vst [vmem:[%s4 + $0x90] sm:$0xf] %v1487
  %1650 = vst [vmem:[%s4 + $0x94] sm:$0xf] %v1488
  %1651 = vst [vmem:[%s4 + $0x98] sm:$0xf] %v1489
  %1652 = vst [vmem:[%s4 + $0x9c] sm:$0xf] %v1490
  %1653 = vst [vmem:[%s4 + $0xa0] sm:$0xf] %v1491
  %1654 = vst [vmem:[%s4 + $0xa4] sm:$0xf] %v1492
  %1655 = vst [vmem:[%s4 + $0xa8] sm:$0xf] %v1493
  %1656 = vst [vmem:[%s4 + $0xac] sm:$0xf] %v1494
  %1657 = vst [vmem:[%s4 + $0xb0] sm:$0xf] %v1495
  %1658 = vst [vmem:[%s4 + $0xb4] sm:$0xf] %v1496
  %1659 = vst [vmem:[%s4 + $0xb8] sm:$0xf] %v1497
  %1660 = vst [vmem:[%s4 + $0xbc] sm:$0xf] %v1498
  %1661 = vst [vmem:[%s4 + $0xc0] sm:$0xf] %v1499
  %1662 = vst [vmem:[%s4 + $0xc4] sm:$0xf] %v1500
  %1663 = vst [vmem:[%s4 + $0xc8] sm:$0xf] %v1501
  %1664 = vst [vmem:[%s4 + $0xcc] sm:$0xf] %v1502
  %1665 = vst [vmem:[%s4 + $0xd0] sm:$0xf] %v1503
  %1666 = vst [vmem:[%s4 + $0xd4] sm:$0xf] %v1504
  %1667 = vst [vmem:[%s4 + $0xd8] sm:$0xf] %v1505
  %1668 = vst [vmem:[%s4 + $0xdc] sm:$0xf] %v1506
  %1669 = vst [vmem:[%s4 + $0xe0] sm:$0xf] %v1507
  %1670 = vst [vmem:[%s4 + $0xe4] sm:$0xf] %v1508
  %1671 = vst [vmem:[%s4 + $0xe8] sm:$0xf] %v1509
  %1672 = vst [vmem:[%s4 + $0xec] sm:$0xf] %v1510
  %1673 = vst [vmem:[%s4 + $0xf0] sm:$0xf] %v1511
  %1674 = vst [vmem:[%s4 + $0xf4] sm:$0xf] %v1512
  %1675 = vst [vmem:[%s4 + $0xf8] sm:$0xf] %v1513
  %1676 = vst [vmem:[%s4 + $0xfc] sm:$0xf] %v1514
  %1677 = vst [vmem:[%s4 + $0x100] sm:$0xf] %v1515
  %1678 = vst [vmem:[%s4 + $0x104] sm:$0xf] %v1516
  %1679 = vst [vmem:[%s4 + $0x108] sm:$0xf] %v1517
  %1680 = vst [vmem:[%s4 + $0x10c] sm:$0xf] %v1518
  %1681 = vst [vmem:[%s4 + $0x110] sm:$0xf] %v1519
  %1682 = vst [vmem:[%s4 + $0x114] sm:$0xf] %v1520
  %1683 = vst [vmem:[%s4 + $0x118] sm:$0xf] %v1521
  %1684 = vst [vmem:[%s4 + $0x11c] sm:$0xf] %v1522
  %1685 = vst [vmem:[%s4 + $0x120] sm:$0xf] %v1523
  %1686 = vst [vmem:[%s4 + $0x124] sm:$0xf] %v1524
  %1687 = vst [vmem:[%s4 + $0x128] sm:$0xf] %v1525
  %1688 = vst [vmem:[%s4 + $0x12c] sm:$0xf] %v1526
  %1689 = vst [vmem:[%s4 + $0x130] sm:$0xf] %v1527
  %1690 = vst [vmem:[%s4 + $0x134] sm:$0xf] %v1528
  %1691 = vst [vmem:[%s4 + $0x138] sm:$0xf] %v1529
  %1692 = vst [vmem:[%s4 + $0x13c] sm:$0xf] %v1530
  %1693 = vst [vmem:[%s4 + $0x140] sm:$0xf] %v1531
  // Predicated region
  $region18: #{dqn_forward.3} parent=0 // pred_check
    _
  $region19: #{dqn_forward.3} parent=0 // pred_check_branch
    %1695 = sbr.rel (0) target = $region21
  $region20: #{dqn_forward.3} parent=0 // pred_region
    _
  $region21: #{dqn_forward.3} parent=0 // pred_fallthru
    _
  // Predicated region
  $region22: #{dqn_forward.3} parent=0 // pred_check
    _
  $region23: #{dqn_forward.3} parent=0 // pred_check_branch
    %1697 = sbr.rel (0) target = $region25
  $region24: #{dqn_forward.3} parent=0 // pred_region
    _
  $region25: #{dqn_forward.3} parent=0 // pred_fallthru
    _

// kernel: dqn_forward.4
$region0: #{dqn_forward.4}
  #allocation0 [shape = 'u32[]', space=smem, size = 0x4, offset = 0x4, fixed_abs, tag = 'smem constant byte address 0x4 - core index']
  #allocation1 [shape = 'u32[144,128]{1,0:T(1,128)}', space=vmem, size = 0x12000, scoped, tag = 'internal scratch']
  %s0 = inlined_call_operand.vmem [shape: bf16[98,512], index: 0, kind: input, shape index: {}]
  %s1 = inlined_call_operand.vmem [shape: bf16[512,128], index: 1, kind: input, shape index: {}]
  %s2 = inlined_call_operand.vmem [shape: f32[1,128], index: 2, kind: input, shape index: {}]
  %s3 = inlined_call_operand.vmem [shape: f32[1,128], index: 3, kind: input, shape index: {}]
  %s4 = inlined_call_operand.vmem [shape: bf16[98,128], index: 4, kind: output, shape index: {}]
  %s5 = sld [smem:[#allocation0]]
  $region26: #{dqn_forward.4} parent=0
    _
  %s7 = ssub.s32 1, %s5
  %s8 = scalar_select 0, %s7, %s5
  // Predicated region
  $region2: #{dqn_forward.4} parent=0 // pred_check
    _
  $region3: #{dqn_forward.4} parent=0 // pred_check_branch
    %10 = sbr.rel (0) target = $region5
  $region4: #{dqn_forward.4} parent=0 // pred_region
    _
  $region5: #{dqn_forward.4} parent=0 // pred_fallthru
    _
  // Predicated region
  $region6: #{dqn_forward.4} parent=0 // pred_check
    _
  $region7: #{dqn_forward.4} parent=0 // pred_check_branch
    %12 = sbr.rel (0) target = $region9
  $region8: #{dqn_forward.4} parent=0 // pred_region
    _
  $region9: #{dqn_forward.4} parent=0 // pred_fallthru
    _
  // Predicated region
  $region10: #{dqn_forward.4} parent=0 // pred_check
    _
  $region11: #{dqn_forward.4} parent=0 // pred_check_branch
    %14 = sbr.rel (0) target = $region13
  $region12: #{dqn_forward.4} parent=0 // pred_region
    _
  $region13: #{dqn_forward.4} parent=0 // pred_fallthru
    _
  // Predicated region
  $region14: #{dqn_forward.4} parent=0 // pred_check
    _
  $region15: #{dqn_forward.4} parent=0 // pred_check_branch
    %16 = sbr.rel (0) target = $region17
  $region16: #{dqn_forward.4} parent=0 // pred_region
    _
  $region17: #{dqn_forward.4} parent=0 // pred_fallthru
    _
  %v18 = vld [vmem:[%s0] sm:$0xff]
  %v19 = vld [vmem:[%s0 + $0x8] sm:$0xff]
  %v20 = vld [vmem:[%s0 + $0x10] sm:$0xff]
  %v21 = vld [vmem:[%s0 + $0x18] sm:$0xff]
  %v22 = vld [vmem:[%s0 + $0x20] sm:$0xff]
  %v23 = vld [vmem:[%s0 + $0x28] sm:$0xff]
  %v24 = vld [vmem:[%s0 + $0x30] sm:$0xff]
  %v25 = vld [vmem:[%s0 + $0x38] sm:$0xff]
  %v26 = vld [vmem:[%s0 + $0x40] sm:$0xff]
  %v27 = vld [vmem:[%s0 + $0x48] sm:$0xff]
  %v28 = vld [vmem:[%s0 + $0x50] sm:$0xff]
  %v29 = vld [vmem:[%s0 + $0x58] sm:$0xff]
  %v30 = vld [vmem:[%s0 + $0x60] sm:$0xff]
  %v31 = vld [vmem:[%s0 + $0x68] sm:$0xff]
  %v32 = vld [vmem:[%s0 + $0x70] sm:$0xff]
  %v33 = vld [vmem:[%s0 + $0x78] sm:$0xff]
  %v34 = vld [vmem:[%s0 + $0x80] sm:$0xff]
  %v35 = vld [vmem:[%s0 + $0x88] sm:$0xff]
  %v36 = vld [vmem:[%s0 + $0x90] sm:$0xff]
  %v37 = vld [vmem:[%s0 + $0x98] sm:$0xff]
  %v38 = vld [vmem:[%s0 + $0xa0] sm:$0xff]
  %v39 = vld [vmem:[%s0 + $0xa8] sm:$0xff]
  %v40 = vld [vmem:[%s0 + $0xb0] sm:$0xff]
  %v41 = vld [vmem:[%s0 + $0xb8] sm:$0xff]
  %v42 = vld [vmem:[%s0 + $0xc0] sm:$0x11]
  %v43 = vld [vmem:[%s0 + $0xc8] sm:$0x11]
  %v44 = vld [vmem:[%s1] sm:$0xf]
  %v45 = vld [vmem:[%s1 + $0x4] sm:$0xf]
  %v46 = vld [vmem:[%s1 + $0x8] sm:$0xf]
  %v47 = vld [vmem:[%s1 + $0xc] sm:$0xf]
  %v48 = vld [vmem:[%s1 + $0x10] sm:$0xf]
  %v49 = vld [vmem:[%s1 + $0x14] sm:$0xf]
  %v50 = vld [vmem:[%s1 + $0x18] sm:$0xf]
  %v51 = vld [vmem:[%s1 + $0x1c] sm:$0xf]
  %v52 = vld [vmem:[%s1 + $0x20] sm:$0xf]
  %v53 = vld [vmem:[%s1 + $0x24] sm:$0xf]
  %v54 = vld [vmem:[%s1 + $0x28] sm:$0xf]
  %v55 = vld [vmem:[%s1 + $0x2c] sm:$0xf]
  %v56 = vld [vmem:[%s1 + $0x30] sm:$0xf]
  %v57 = vld [vmem:[%s1 + $0x34] sm:$0xf]
  %v58 = vld [vmem:[%s1 + $0x38] sm:$0xf]
  %v59 = vld [vmem:[%s1 + $0x3c] sm:$0xf]
  %v60 = vld [vmem:[%s1 + $0x40] sm:$0xf]
  %v61 = vld [vmem:[%s1 + $0x44] sm:$0xf]
  %v62 = vld [vmem:[%s1 + $0x48] sm:$0xf]
  %v63 = vld [vmem:[%s1 + $0x4c] sm:$0xf]
  %v64 = vld [vmem:[%s1 + $0x50] sm:$0xf]
  %v65 = vld [vmem:[%s1 + $0x54] sm:$0xf]
  %v66 = vld [vmem:[%s1 + $0x58] sm:$0xf]
  %v67 = vld [vmem:[%s1 + $0x5c] sm:$0xf]
  %v68 = vld [vmem:[%s1 + $0x60] sm:$0xf]
  %v69 = vld [vmem:[%s1 + $0x64] sm:$0xf]
  %v70 = vld [vmem:[%s1 + $0x68] sm:$0xf]
  %v71 = vld [vmem:[%s1 + $0x6c] sm:$0xf]
  %v72 = vld [vmem:[%s1 + $0x70] sm:$0xf]
  %v73 = vld [vmem:[%s1 + $0x74] sm:$0xf]
  %v74 = vld [vmem:[%s1 + $0x78] sm:$0xf]
  %v75 = vld [vmem:[%s1 + $0x7c] sm:$0xf]
  %v76 = vld [vmem:[%s1 + $0x80] sm:$0xf]
  %v77 = vld [vmem:[%s1 + $0x84] sm:$0xf]
  %v78 = vld [vmem:[%s1 + $0x88] sm:$0xf]
  %v79 = vld [vmem:[%s1 + $0x8c] sm:$0xf]
  %v80 = vld [vmem:[%s1 + $0x90] sm:$0xf]
  %v81 = vld [vmem:[%s1 + $0x94] sm:$0xf]
  %v82 = vld [vmem:[%s1 + $0x98] sm:$0xf]
  %v83 = vld [vmem:[%s1 + $0x9c] sm:$0xf]
  %v84 = vld [vmem:[%s1 + $0xa0] sm:$0xf]
  %v85 = vld [vmem:[%s1 + $0xa4] sm:$0xf]
  %v86 = vld [vmem:[%s1 + $0xa8] sm:$0xf]
  %v87 = vld [vmem:[%s1 + $0xac] sm:$0xf]
  %v88 = vld [vmem:[%s1 + $0xb0] sm:$0xf]
  %v89 = vld [vmem:[%s1 + $0xb4] sm:$0xf]
  %v90 = vld [vmem:[%s1 + $0xb8] sm:$0xf]
  %v91 = vld [vmem:[%s1 + $0xbc] sm:$0xf]
  %v92 = vld [vmem:[%s1 + $0xc0] sm:$0xf]
  %v93 = vld [vmem:[%s1 + $0xc4] sm:$0xf]
  %v94 = vld [vmem:[%s1 + $0xc8] sm:$0xf]
  %v95 = vld [vmem:[%s1 + $0xcc] sm:$0xf]
  %v96 = vld [vmem:[%s1 + $0xd0] sm:$0xf]
  %v97 = vld [vmem:[%s1 + $0xd4] sm:$0xf]
  %v98 = vld [vmem:[%s1 + $0xd8] sm:$0xf]
  %v99 = vld [vmem:[%s1 + $0xdc] sm:$0xf]
  %v100 = vld [vmem:[%s1 + $0xe0] sm:$0xf]
  %v101 = vld [vmem:[%s1 + $0xe4] sm:$0xf]
  %v102 = vld [vmem:[%s1 + $0xe8] sm:$0xf]
  %v103 = vld [vmem:[%s1 + $0xec] sm:$0xf]
  %v104 = vld [vmem:[%s1 + $0xf0] sm:$0xf]
  %v105 = vld [vmem:[%s1 + $0xf4] sm:$0xf]
  %v106 = vld [vmem:[%s1 + $0xf8] sm:$0xf]
  %v107 = vld [vmem:[%s1 + $0xfc] sm:$0xf]
  %v134 = vunpack.c.l.b16 %v18
  %v135 = vunpack.c.h.b16 %v18
  %v136 = vunpack.c.l.b16 %v19
  %v137 = vunpack.c.h.b16 %v19
  %v138 = vunpack.c.l.b16 %v20
  %v139 = vunpack.c.h.b16 %v20
  %v140 = vunpack.c.l.b16 %v21
  %v141 = vunpack.c.h.b16 %v21
  %v142 = vunpack.c.l.b16 %v22
  %v143 = vunpack.c.h.b16 %v22
  %v144 = vunpack.c.l.b16 %v23
  %v145 = vunpack.c.h.b16 %v23
  %v146 = vunpack.c.l.b16 %v24
  %v147 = vunpack.c.h.b16 %v24
  %v148 = vunpack.c.l.b16 %v25
  %v149 = vunpack.c.h.b16 %v25
  %v150 = vunpack.c.l.b16 %v26
  %v151 = vunpack.c.h.b16 %v26
  %v152 = vunpack.c.l.b16 %v27
  %v153 = vunpack.c.h.b16 %v27
  %v154 = vunpack.c.l.b16 %v28
  %v155 = vunpack.c.h.b16 %v28
  %v156 = vunpack.c.l.b16 %v29
  %v157 = vunpack.c.h.b16 %v29
  %v158 = vunpack.c.l.b16 %v30
  %v159 = vunpack.c.h.b16 %v30
  %v160 = vunpack.c.l.b16 %v31
  %v161 = vunpack.c.h.b16 %v31
  %v162 = vunpack.c.l.b16 %v32
  %v163 = vunpack.c.h.b16 %v32
  %v164 = vunpack.c.l.b16 %v33
  %v165 = vunpack.c.h.b16 %v33
  %v166 = vunpack.c.l.b16 %v34
  %v167 = vunpack.c.h.b16 %v34
  %v168 = vunpack.c.l.b16 %v35
  %v169 = vunpack.c.h.b16 %v35
  %v170 = vunpack.c.l.b16 %v36
  %v171 = vunpack.c.h.b16 %v36
  %v172 = vunpack.c.l.b16 %v37
  %v173 = vunpack.c.h.b16 %v37
  %v174 = vunpack.c.l.b16 %v38
  %v175 = vunpack.c.h.b16 %v38
  %v176 = vunpack.c.l.b16 %v39
  %v177 = vunpack.c.h.b16 %v39
  %v178 = vunpack.c.l.b16 %v40
  %v179 = vunpack.c.h.b16 %v40
  %v180 = vunpack.c.l.b16 %v41
  %v181 = vunpack.c.h.b16 %v41
  %v182 = vunpack.c.l.b16 %v42
  %v183 = vunpack.c.h.b16 %v42
  %v184 = vunpack.c.l.b16 %v43
  %v185 = vunpack.c.h.b16 %v43
  %v186 = vpack.c.b16 %v138, %v134
  %v187 = vpack.c.b16 %v139, %v135
  %v188 = vpack.c.b16 %v140, %v136
  %v189 = vpack.c.b16 %v141, %v137
  %v190 = vpack.c.b16 %v146, %v142
  %v191 = vpack.c.b16 %v147, %v143
  %v192 = vpack.c.b16 %v148, %v144
  %v193 = vpack.c.b16 %v149, %v145
  %v194 = vpack.c.b16 %v154, %v150
  %v195 = vpack.c.b16 %v155, %v151
  %v196 = vpack.c.b16 %v156, %v152
  %v197 = vpack.c.b16 %v157, %v153
  %v198 = vpack.c.b16 %v162, %v158
  %v199 = vpack.c.b16 %v163, %v159
  %v200 = vpack.c.b16 %v164, %v160
  %v201 = vpack.c.b16 %v165, %v161
  %v202 = vpack.c.b16 %v170, %v166
  %v203 = vpack.c.b16 %v171, %v167
  %v204 = vpack.c.b16 %v172, %v168
  %v205 = vpack.c.b16 %v173, %v169
  %v206 = vpack.c.b16 %v178, %v174
  %v207 = vpack.c.b16 %v179, %v175
  %v208 = vpack.c.b16 %v180, %v176
  %v209 = vpack.c.b16 %v181, %v177
  %v210 = vpack.c.b16 %v182, %v182
  %v211 = vpack.c.b16 %v183, %v183
  %v212 = vpack.c.b16 %v184, %v184
  %v213 = vpack.c.b16 %v185, %v185
  %v306 = vunpack.c.l.b16 %v44
  %v307 = vunpack.c.l.b16 %v45
  %v308 = vunpack.c.l.b16 %v46
  %v309 = vunpack.c.l.b16 %v47
  %v310 = vunpack.c.l.b16 %v48
  %v311 = vunpack.c.l.b16 %v49
  %v312 = vunpack.c.l.b16 %v50
  %v313 = vunpack.c.l.b16 %v51
  %v314 = vunpack.c.l.b16 %v52
  %v315 = vunpack.c.l.b16 %v53
  %v316 = vunpack.c.l.b16 %v54
  %v317 = vunpack.c.l.b16 %v55
  %v318 = vunpack.c.l.b16 %v56
  %v319 = vunpack.c.l.b16 %v57
  %v320 = vunpack.c.l.b16 %v58
  %v321 = vunpack.c.l.b16 %v59
  %v322 = vunpack.c.l.b16 %v60
  %v323 = vunpack.c.l.b16 %v61
  %v324 = vunpack.c.l.b16 %v62
  %v325 = vunpack.c.l.b16 %v63
  %v326 = vunpack.c.l.b16 %v64
  %v327 = vunpack.c.l.b16 %v65
  %v328 = vunpack.c.l.b16 %v66
  %v329 = vunpack.c.l.b16 %v67
  %v330 = vunpack.c.l.b16 %v68
  %v331 = vunpack.c.l.b16 %v69
  %v332 = vunpack.c.l.b16 %v70
  %v333 = vunpack.c.l.b16 %v71
  %v334 = vunpack.c.l.b16 %v72
  %v335 = vunpack.c.l.b16 %v73
  %v336 = vunpack.c.l.b16 %v74
  %v337 = vunpack.c.l.b16 %v75
  %v338 = vunpack.c.l.b16 %v76
  %v339 = vunpack.c.l.b16 %v77
  %v340 = vunpack.c.l.b16 %v78
  %v341 = vunpack.c.l.b16 %v79
  %v342 = vunpack.c.l.b16 %v80
  %v343 = vunpack.c.l.b16 %v81
  %v344 = vunpack.c.l.b16 %v82
  %v345 = vunpack.c.l.b16 %v83
  %v346 = vunpack.c.l.b16 %v84
  %v347 = vunpack.c.l.b16 %v85
  %v348 = vunpack.c.l.b16 %v86
  %v349 = vunpack.c.l.b16 %v87
  %v350 = vunpack.c.l.b16 %v88
  %v351 = vunpack.c.l.b16 %v89
  %v352 = vunpack.c.l.b16 %v90
  %v353 = vunpack.c.l.b16 %v91
  %v354 = vunpack.c.l.b16 %v92
  %v355 = vunpack.c.l.b16 %v93
  %v356 = vunpack.c.l.b16 %v94
  %v357 = vunpack.c.l.b16 %v95
  %v358 = vunpack.c.l.b16 %v96
  %v359 = vunpack.c.l.b16 %v97
  %v360 = vunpack.c.l.b16 %v98
  %v361 = vunpack.c.l.b16 %v99
  %v362 = vunpack.c.l.b16 %v100
  %v363 = vunpack.c.l.b16 %v101
  %v364 = vunpack.c.l.b16 %v102
  %v365 = vunpack.c.l.b16 %v103
  %v366 = vunpack.c.l.b16 %v104
  %v367 = vunpack.c.l.b16 %v105
  %v368 = vunpack.c.l.b16 %v106
  %v369 = vunpack.c.l.b16 %v107
  %v370 = vpack.c.b16 %v307, %v306
  %v371 = vpack.c.b16 %v309, %v308
  %v372 = vpack.c.b16 %v311, %v310
  %v373 = vpack.c.b16 %v313, %v312
  %v374 = vpack.c.b16 %v315, %v314
  %v375 = vpack.c.b16 %v317, %v316
  %v376 = vpack.c.b16 %v319, %v318
  %v377 = vpack.c.b16 %v321, %v320
  %v378 = vpack.c.b16 %v323, %v322
  %v379 = vpack.c.b16 %v325, %v324
  %v380 = vpack.c.b16 %v327, %v326
  %v381 = vpack.c.b16 %v329, %v328
  %v382 = vpack.c.b16 %v331, %v330
  %v383 = vpack.c.b16 %v333, %v332
  %v384 = vpack.c.b16 %v335, %v334
  %v385 = vpack.c.b16 %v337, %v336
  %v386 = vpack.c.b16 %v339, %v338
  %v387 = vpack.c.b16 %v341, %v340
  %v388 = vpack.c.b16 %v343, %v342
  %v389 = vpack.c.b16 %v345, %v344
  %v390 = vpack.c.b16 %v347, %v346
  %v391 = vpack.c.b16 %v349, %v348
  %v392 = vpack.c.b16 %v351, %v350
  %v393 = vpack.c.b16 %v353, %v352
  %v394 = vpack.c.b16 %v355, %v354
  %v395 = vpack.c.b16 %v357, %v356
  %v396 = vpack.c.b16 %v359, %v358
  %v397 = vpack.c.b16 %v361, %v360
  %v398 = vpack.c.b16 %v363, %v362
  %v399 = vpack.c.b16 %v365, %v364
  %v400 = vpack.c.b16 %v367, %v366
  %v401 = vpack.c.b16 %v369, %v368
  %434 = vmatprep.subr.bf16.mxu0 0
  %435 = vmatpush1.bf16.msra.mxu0 %v377
  %436 = vmatprep.subr.bf16.mxu0 0
  %437 = vmatpush1.bf16.msra.mxu0 %v376
  %438 = vmatprep.subr.bf16.mxu0 0
  %439 = vmatpush1.bf16.msra.mxu0 %v375
  %440 = vmatprep.subr.bf16.mxu0 0
  %441 = vmatpush1.bf16.msra.mxu0 %v374
  %442 = vmatprep.subr.bf16.mxu0 0
  %443 = vmatpush1.bf16.msra.mxu0 %v373
  %444 = vmatprep.subr.bf16.mxu0 0
  %445 = vmatpush1.bf16.msra.mxu0 %v372
  %446 = vmatprep.subr.bf16.mxu0 0
  %447 = vmatpush1.bf16.msra.mxu0 %v371
  %448 = vmatprep.subr.bf16.mxu0 0
  %449 = vmatpush1.bf16.msra.mxu0 %v370
  %450 = vmatprep.subr.bf16.mxu0 0
  %451 = vmatpush2.bf16.msra.mxu0 %v385
  %452 = vmatprep.subr.bf16.mxu0 0
  %453 = vmatpush2.bf16.msra.mxu0 %v384
  %454 = vmatprep.subr.bf16.mxu0 0
  %455 = vmatpush2.bf16.msra.mxu0 %v383
  %456 = vmatprep.subr.bf16.mxu0 0
  %457 = vmatpush2.bf16.msra.mxu0 %v382
  %458 = vmatprep.subr.bf16.mxu0 0
  %459 = vmatpush2.bf16.msra.mxu0 %v381
  %460 = vmatprep.subr.bf16.mxu0 0
  %461 = vmatpush2.bf16.msra.mxu0 %v380
  %462 = vmatprep.subr.bf16.mxu0 0
  %463 = vmatpush2.bf16.msra.mxu0 %v379
  %464 = vmatprep.subr.bf16.mxu0 0
  %465 = vmatpush2.bf16.msra.mxu0 %v378
  %466 = vmatprep.mubr.bf16.mxu0 %v187
  %467 = vmatmul.mubr.bf16.gmra.mxu0 %v186
  %v468 = vpop.f32.mrf.mxu0
  %v469 = vadd.f32 0.0, %v468
  %v470 = vpop.f32.mrf.mxu0
  %v471 = vpop.f32.mrf.mxu0
  %v472 = vadd.f32 0.0, %v471
  %v473 = vpop.f32.mrf.mxu0
  %474 = vmatprep.mubr.bf16.mxu0 %v191
  %475 = vmatmul.mubr.bf16.gmra.mxu0 %v190
  %v476 = vpop.f32.mrf.mxu0
  %v477 = vadd.f32 0.0, %v476
  %v478 = vpop.f32.mrf.mxu0
  %v479 = vpop.f32.mrf.mxu0
  %v480 = vadd.f32 0.0, %v479
  %v481 = vpop.f32.mrf.mxu0
  %482 = vmatprep.mubr.bf16.mxu0 %v195
  %483 = vmatmul.mubr.bf16.gmra.mxu0 %v194
  %v484 = vpop.f32.mrf.mxu0
  %v485 = vadd.f32 0.0, %v484
  %v486 = vpop.f32.mrf.mxu0
  %v487 = vpop.f32.mrf.mxu0
  %v488 = vadd.f32 0.0, %v487
  %v489 = vpop.f32.mrf.mxu0
  %490 = vmatprep.mubr.bf16.mxu0 %v199
  %491 = vmatmul.mubr.bf16.gmra.mxu0 %v198
  %v492 = vpop.f32.mrf.mxu0
  %v493 = vadd.f32 0.0, %v492
  %v494 = vpop.f32.mrf.mxu0
  %v495 = vpop.f32.mrf.mxu0
  %v496 = vadd.f32 0.0, %v495
  %v497 = vpop.f32.mrf.mxu0
  %498 = vmatprep.mubr.bf16.mxu0 %v203
  %499 = vmatmul.mubr.bf16.gmra.mxu0 %v202
  %v500 = vpop.f32.mrf.mxu0
  %v501 = vadd.f32 0.0, %v500
  %v502 = vpop.f32.mrf.mxu0
  %v503 = vpop.f32.mrf.mxu0
  %v504 = vadd.f32 0.0, %v503
  %v505 = vpop.f32.mrf.mxu0
  %506 = vmatprep.mubr.bf16.mxu0 %v207
  %507 = vmatmul.mubr.bf16.gmra.mxu0 %v206
  %v508 = vpop.f32.mrf.mxu0
  %v509 = vadd.f32 0.0, %v508
  %v510 = vpop.f32.mrf.mxu0
  %v511 = vpop.f32.mrf.mxu0
  %v512 = vadd.f32 0.0, %v511
  %v513 = vpop.f32.mrf.mxu0
  %514 = vmatprep.mubr.bf16.mxu0 %v211
  %515 = vmatmul.mubr.bf16.gmra.mxu0 %v210
  %v516 = vpop.f32.mrf.mxu0
  %v517 = vadd.f32 0.0, %v516
  %v518 = vpop.f32.mrf.mxu0
  %v519 = vpop.f32.mrf.mxu0
  %v520 = vpop.f32.mrf.mxu0
  %521 = vdwg.mxu0
  %522 = vmatprep.subr.bf16.mxu0 0
  %523 = vmatpush1.bf16.msra.mxu0 %v393
  %524 = vmatprep.subr.bf16.mxu0 0
  %525 = vmatpush1.bf16.msra.mxu0 %v392
  %526 = vmatprep.subr.bf16.mxu0 0
  %527 = vmatpush1.bf16.msra.mxu0 %v391
  %528 = vmatprep.subr.bf16.mxu0 0
  %529 = vmatpush1.bf16.msra.mxu0 %v390
  %530 = vmatprep.subr.bf16.mxu0 0
  %531 = vmatpush1.bf16.msra.mxu0 %v389
  %532 = vmatprep.subr.bf16.mxu0 0
  %533 = vmatpush1.bf16.msra.mxu0 %v388
  %534 = vmatprep.subr.bf16.mxu0 0
  %535 = vmatpush1.bf16.msra.mxu0 %v387
  %536 = vmatprep.subr.bf16.mxu0 0
  %537 = vmatpush1.bf16.msra.mxu0 %v386
  %538 = vmatprep.subr.bf16.mxu0 0
  %539 = vmatpush2.bf16.msra.mxu0 %v401
  %540 = vmatprep.subr.bf16.mxu0 0
  %541 = vmatpush2.bf16.msra.mxu0 %v400
  %542 = vmatprep.subr.bf16.mxu0 0
  %543 = vmatpush2.bf16.msra.mxu0 %v399
  %544 = vmatprep.subr.bf16.mxu0 0
  %545 = vmatpush2.bf16.msra.mxu0 %v398
  %546 = vmatprep.subr.bf16.mxu0 0
  %547 = vmatpush2.bf16.msra.mxu0 %v397
  %548 = vmatprep.subr.bf16.mxu0 0
  %549 = vmatpush2.bf16.msra.mxu0 %v396
  %550 = vmatprep.subr.bf16.mxu0 0
  %551 = vmatpush2.bf16.msra.mxu0 %v395
  %552 = vmatprep.subr.bf16.mxu0 0
  %553 = vmatpush2.bf16.msra.mxu0 %v394
  %554 = vmatprep.mubr.bf16.mxu0 %v189
  %555 = vmatmul.mubr.bf16.gmra.mxu0 %v188
  %v556 = vpop.f32.mrf.mxu0
  %v557 = vadd.f32 %v469, %v556
  %v558 = vpop.f32.mrf.mxu0
  %v559 = vpop.f32.mrf.mxu0
  %v560 = vadd.f32 %v472, %v559
  %v561 = vpop.f32.mrf.mxu0
  %562 = vmatprep.mubr.bf16.mxu0 %v193
  %563 = vmatmul.mubr.bf16.gmra.mxu0 %v192
  %v564 = vpop.f32.mrf.mxu0
  %v565 = vadd.f32 %v477, %v564
  %v566 = vpop.f32.mrf.mxu0
  %v567 = vpop.f32.mrf.mxu0
  %v568 = vadd.f32 %v480, %v567
  %v569 = vpop.f32.mrf.mxu0
  %570 = vmatprep.mubr.bf16.mxu0 %v197
  %571 = vmatmul.mubr.bf16.gmra.mxu0 %v196
  %v572 = vpop.f32.mrf.mxu0
  %v573 = vadd.f32 %v485, %v572
  %v574 = vpop.f32.mrf.mxu0
  %v575 = vpop.f32.mrf.mxu0
  %v576 = vadd.f32 %v488, %v575
  %v577 = vpop.f32.mrf.mxu0
  %578 = vmatprep.mubr.bf16.mxu0 %v201
  %579 = vmatmul.mubr.bf16.gmra.mxu0 %v200
  %v580 = vpop.f32.mrf.mxu0
  %v581 = vadd.f32 %v493, %v580
  %v582 = vpop.f32.mrf.mxu0
  %v583 = vpop.f32.mrf.mxu0
  %v584 = vadd.f32 %v496, %v583
  %v585 = vpop.f32.mrf.mxu0
  %586 = vmatprep.mubr.bf16.mxu0 %v205
  %587 = vmatmul.mubr.bf16.gmra.mxu0 %v204
  %v588 = vpop.f32.mrf.mxu0
  %v589 = vadd.f32 %v501, %v588
  %v590 = vpop.f32.mrf.mxu0
  %v591 = vpop.f32.mrf.mxu0
  %v592 = vadd.f32 %v504, %v591
  %v593 = vpop.f32.mrf.mxu0
  %594 = vmatprep.mubr.bf16.mxu0 %v209
  %595 = vmatmul.mubr.bf16.gmra.mxu0 %v208
  %v596 = vpop.f32.mrf.mxu0
  %v597 = vadd.f32 %v509, %v596
  %v598 = vpop.f32.mrf.mxu0
  %v599 = vpop.f32.mrf.mxu0
  %v600 = vadd.f32 %v512, %v599
  %v601 = vpop.f32.mrf.mxu0
  %602 = vmatprep.mubr.bf16.mxu0 %v213
  %603 = vmatmul.mubr.bf16.gmra.mxu0 %v212
  %v604 = vpop.f32.mrf.mxu0
  %v605 = vadd.f32 %v517, %v604
  %v606 = vpop.f32.mrf.mxu0
  %v607 = vpop.f32.mrf.mxu0
  %v608 = vpop.f32.mrf.mxu0
  %609 = vdwg.mxu0
  %v610 = vadd.f32 %v557, %v560
  %v611 = vadd.f32 %v610, %v565
  %v612 = vadd.f32 %v611, %v568
  %v613 = vadd.f32 %v612, %v573
  %v614 = vadd.f32 %v613, %v576
  %v615 = vadd.f32 %v614, %v581
  %v616 = vadd.f32 %v615, %v584
  %v617 = vadd.f32 %v616, %v589
  %v618 = vadd.f32 %v617, %v592
  %v619 = vadd.f32 %v618, %v597
  %v620 = vadd.f32 %v619, %v600
  %vm621 = vcmask 1041408
  %v622 = vsel %vm621, %v605, 0.0
  %v623 = vadd.f32 %v620, %v622
  %v624 = vrot.slane %v623, 4
  %v625 = vadd.f32 %v623, %v624
  %v626 = vrot.slane %v625, 2
  %v627 = vadd.f32 %v625, %v626
  %v628 = vrot.slane %v627, 1
  %v629 = vadd.f32 %v627, %v628
  %v630 = vrcp.pop 98.0
  %v631 = vmul.f32 %v629, %v630
  %v632 = vmul.f32 %v557, %v557
  %v633 = vmul.f32 %v560, %v560
  %v634 = vmul.f32 %v565, %v565
  %v635 = vmul.f32 %v568, %v568
  %v636 = vmul.f32 %v573, %v573
  %v637 = vmul.f32 %v576, %v576
  %v638 = vmul.f32 %v581, %v581
  %v639 = vmul.f32 %v584, %v584
  %v640 = vmul.f32 %v589, %v589
  %v641 = vmul.f32 %v592, %v592
  %v642 = vmul.f32 %v597, %v597
  %v643 = vmul.f32 %v600, %v600
  %v644 = vmul.f32 %v605, %v605
  %v645 = vadd.f32 %v632, %v633
  %v646 = vadd.f32 %v645, %v634
  %v647 = vadd.f32 %v646, %v635
  %v648 = vadd.f32 %v647, %v636
  %v649 = vadd.f32 %v648, %v637
  %v650 = vadd.f32 %v649, %v638
  %v651 = vadd.f32 %v650, %v639
  %v652 = vadd.f32 %v651, %v640
  %v653 = vadd.f32 %v652, %v641
  %v654 = vadd.f32 %v653, %v642
  %v655 = vadd.f32 %v654, %v643
  %v656 = vsel %vm621, %v644, 0.0
  %v657 = vadd.f32 %v655, %v656
  %v658 = vrot.slane %v657, 4
  %v659 = vadd.f32 %v657, %v658
  %v660 = vrot.slane %v659, 2
  %v661 = vadd.f32 %v659, %v660
  %v662 = vrot.slane %v661, 1
  %v663 = vadd.f32 %v661, %v662
  %v664 = vmul.f32 %v663, %v630
  %v665 = vmul.f32 %v631, %v631
  %v666 = vsub.f32 %v664, %v665
  %v667 = vmax.f32 %v666, 0.0
  %v668 = vld [vmem:[%s2] sm:$0x1]
  %v669 = vadd.f32 %v667, 1e-05
  %v670 = vrsqrt.pop %v669
  %v671 = vmul.f32 %v668, %v670
  %v672 = vld [vmem:[%s3] sm:$0x1]
  %v673 = vmul.f32 %v631, %v671
  %v674 = vsub.f32 %v672, %v673
  %v676 = vlaneseq
  %v677 = vshrl.u32 %v676, 7
  %v678 = vsub.s32 0, %v677
  %v679 = vrot.slane %v671, %v678
  %v681 = vmul.f32 %v557, %v679
  %v682 = vmul.f32 %v560, %v679
  %v683 = vmul.f32 %v565, %v679
  %v684 = vmul.f32 %v568, %v679
  %v685 = vmul.f32 %v573, %v679
  %v686 = vmul.f32 %v576, %v679
  %v687 = vmul.f32 %v581, %v679
  %v688 = vmul.f32 %v584, %v679
  %v689 = vmul.f32 %v589, %v679
  %v690 = vmul.f32 %v592, %v679
  %v691 = vmul.f32 %v597, %v679
  %v692 = vmul.f32 %v600, %v679
  %v693 = vmul.f32 %v605, %v679
  %v695 = vlaneseq
  %v696 = vshrl.u32 %v695, 7
  %v697 = vsub.s32 0, %v696
  %v698 = vrot.slane %v674, %v697
  %v700 = vadd.f32 %v681, %v698
  %v701 = vadd.f32 %v682, %v698
  %v702 = vadd.f32 %v683, %v698
  %v703 = vadd.f32 %v684, %v698
  %v704 = vadd.f32 %v685, %v698
  %v705 = vadd.f32 %v686, %v698
  %v706 = vadd.f32 %v687, %v698
  %v707 = vadd.f32 %v688, %v698
  %v708 = vadd.f32 %v689, %v698
  %v709 = vadd.f32 %v690, %v698
  %v710 = vadd.f32 %v691, %v698
  %v711 = vadd.f32 %v692, %v698
  %v712 = vadd.f32 %v693, %v698
  %v713 = vmax.f32 %v700, 0.0
  %v714 = vmax.f32 %v701, 0.0
  %v715 = vmax.f32 %v702, 0.0
  %v716 = vmax.f32 %v703, 0.0
  %v717 = vmax.f32 %v704, 0.0
  %v718 = vmax.f32 %v705, 0.0
  %v719 = vmax.f32 %v706, 0.0
  %v720 = vmax.f32 %v707, 0.0
  %v721 = vmax.f32 %v708, 0.0
  %v722 = vmax.f32 %v709, 0.0
  %v723 = vmax.f32 %v710, 0.0
  %v724 = vmax.f32 %v711, 0.0
  %v725 = vmax.f32 %v712, 0.0
  %v726 = vpack.c.bf16 %v714, %v713
  %v727 = vpack.c.bf16 %v716, %v715
  %v728 = vpack.c.bf16 %v718, %v717
  %v729 = vpack.c.bf16 %v720, %v719
  %v730 = vpack.c.bf16 %v722, %v721
  %v731 = vpack.c.bf16 %v724, %v723
  %v732 = vpack.c.bf16 %v725, %v725
  %v740 = vunpack.c.l.b16 %v726
  %v741 = vunpack.c.h.b16 %v726
  %v742 = vunpack.c.l.b16 %v727
  %v743 = vunpack.c.h.b16 %v727
  %v744 = vunpack.c.l.b16 %v728
  %v745 = vunpack.c.h.b16 %v728
  %v746 = vunpack.c.l.b16 %v729
  %v747 = vunpack.c.h.b16 %v729
  %v748 = vunpack.c.l.b16 %v730
  %v749 = vunpack.c.h.b16 %v730
  %v750 = vunpack.c.l.b16 %v731
  %v751 = vunpack.c.h.b16 %v731
  %v752 = vunpack.c.l.b16 %v732
  %v753 = vpack.c.b16 %v740, %v740
  %v754 = vpack.c.b16 %v741, %v741
  %v755 = vpack.c.b16 %v742, %v742
  %v756 = vpack.c.b16 %v743, %v743
  %v757 = vpack.c.b16 %v744, %v744
  %v758 = vpack.c.b16 %v745, %v745
  %v759 = vpack.c.b16 %v746, %v746
  %v760 = vpack.c.b16 %v747, %v747
  %v761 = vpack.c.b16 %v748, %v748
  %v762 = vpack.c.b16 %v749, %v749
  %v763 = vpack.c.b16 %v750, %v750
  %v764 = vpack.c.b16 %v751, %v751
  %v765 = vpack.c.b16 %v752, %v752
  %779 = vst [vmem:[%s4] sm:$0xf] %v753
  %780 = vst [vmem:[%s4 + $0x4] sm:$0xf] %v754
  %781 = vst [vmem:[%s4 + $0x8] sm:$0xf] %v755
  %782 = vst [vmem:[%s4 + $0xc] sm:$0xf] %v756
  %783 = vst [vmem:[%s4 + $0x10] sm:$0xf] %v757
  %784 = vst [vmem:[%s4 + $0x14] sm:$0xf] %v758
  %785 = vst [vmem:[%s4 + $0x18] sm:$0xf] %v759
  %786 = vst [vmem:[%s4 + $0x1c] sm:$0xf] %v760
  %787 = vst [vmem:[%s4 + $0x20] sm:$0xf] %v761
  %788 = vst [vmem:[%s4 + $0x24] sm:$0xf] %v762
  %789 = vst [vmem:[%s4 + $0x28] sm:$0xf] %v763
  %790 = vst [vmem:[%s4 + $0x2c] sm:$0xf] %v764
  %791 = vst [vmem:[%s4 + $0x30] sm:$0x1] %v765
  // Predicated region
  $region18: #{dqn_forward.4} parent=0 // pred_check
    _
  $region19: #{dqn_forward.4} parent=0 // pred_check_branch
    %793 = sbr.rel (0) target = $region21
  $region20: #{dqn_forward.4} parent=0 // pred_region
    _
  $region21: #{dqn_forward.4} parent=0 // pred_fallthru
    _
  // Predicated region
  $region22: #{dqn_forward.4} parent=0 // pred_check
    _
  $region23: #{dqn_forward.4} parent=0 // pred_check_branch
    %795 = sbr.rel (0) target = $region25
  $region24: #{dqn_forward.4} parent=0 // pred_region
    _
  $region25: #{dqn_forward.4} parent=0 // pred_fallthru
    _

// kernel: dqn_forward.5
$region0: #{dqn_forward.5}
  #allocation0 [shape = 'u32[]', space=smem, size = 0x4, offset = 0x4, fixed_abs, tag = 'smem constant byte address 0x4 - core index']
  #allocation1 [shape = 'u32[144,128]{1,0:T(1,128)}', space=vmem, size = 0x12000, scoped, tag = 'internal scratch']
  %s0 = inlined_call_operand.vmem [shape: bf16[8,896], index: 0, kind: input, shape index: {}]
  %s1 = inlined_call_operand.vmem [shape: bf16[896,128], index: 1, kind: input, shape index: {}]
  %s2 = inlined_call_operand.vmem [shape: f32[1,128], index: 2, kind: input, shape index: {}]
  %s3 = inlined_call_operand.vmem [shape: f32[1,128], index: 3, kind: input, shape index: {}]
  %s4 = inlined_call_operand.vmem [shape: bf16[4,128,128], index: 4, kind: input, shape index: {}]
  %s5 = inlined_call_operand.vmem [shape: f32[1,128], index: 5, kind: input, shape index: {}]
  %s6 = inlined_call_operand.hbm [shape: f32[2,128], index: 6, kind: output, shape index: {}]
  %s7 = sld [smem:[#allocation0]]
  $region34: #{dqn_forward.5} parent=0
    _
  %s9 = ssub.s32 1, %s7
  %s10 = scalar_select 0, %s9, %s7
  $region1: #{dqn_forward.5} parent=0
    #allocation2 [shape = 'u8[1024]{0}', space=vmem, size = 0x400, scoped, tag = 'output window, operand 0, single buffered']
    #allocation3 [shape = 's32[1]{0}', space=sflag, size = 0x4, scoped, tag = 'scoped memory for dqn_forward.5']
    %11 = vsyncpa [#allocation3], 0
    // Predicated region
    $region2: #{dqn_forward.5} parent=1 // pred_check
      _
    $region3: #{dqn_forward.5} parent=1 // pred_check_branch
      %13 = sbr.rel (0) target = $region5
    $region4: #{dqn_forward.5} parent=1 // pred_region
      _
    $region5: #{dqn_forward.5} parent=1 // pred_fallthru
      _
    // Predicated region
    $region6: #{dqn_forward.5} parent=1 // pred_check
      _
    $region7: #{dqn_forward.5} parent=1 // pred_check_branch
      %15 = sbr.rel (0) target = $region9
    $region8: #{dqn_forward.5} parent=1 // pred_region
      _
    $region9: #{dqn_forward.5} parent=1 // pred_fallthru
      _
    // Predicated region
    $region10: #{dqn_forward.5} parent=1 // pred_check
      _
    $region11: #{dqn_forward.5} parent=1 // pred_check_branch
      %17 = sbr.rel (0) target = $region13
    $region12: #{dqn_forward.5} parent=1 // pred_region
      _
    $region13: #{dqn_forward.5} parent=1 // pred_fallthru
      _
    // Predicated region
    $region14: #{dqn_forward.5} parent=1 // pred_check
      _
    $region15: #{dqn_forward.5} parent=1 // pred_check_branch
      %19 = sbr.rel (0) target = $region17
    $region16: #{dqn_forward.5} parent=1 // pred_region
      _
    $region17: #{dqn_forward.5} parent=1 // pred_fallthru
      _
    // Predicated region
    $region18: #{dqn_forward.5} parent=1 // pred_check
      _
    $region19: #{dqn_forward.5} parent=1 // pred_check_branch
      %21 = sbr.rel (0) target = $region21
    $region20: #{dqn_forward.5} parent=1 // pred_region
      _
    $region21: #{dqn_forward.5} parent=1 // pred_fallthru
      _
    // Predicated region
    $region22: #{dqn_forward.5} parent=1 // pred_check
      _
    $region23: #{dqn_forward.5} parent=1 // pred_check_branch
      %23 = sbr.rel (0) target = $region25
    $region24: #{dqn_forward.5} parent=1 // pred_region
      _
    $region25: #{dqn_forward.5} parent=1 // pred_fallthru
      _
    %v25 = vld [vmem:[%s0] sm:$0xff]
    %v26 = vld [vmem:[%s0 + $0x8] sm:$0xff]
    %v27 = vld [vmem:[%s0 + $0x10] sm:$0xff]
    %v28 = vld [vmem:[%s0 + $0x18] sm:$0xf]
    %v29 = vld [vmem:[%s1] sm:$0xf]
    %v30 = vld [vmem:[%s1 + $0x4] sm:$0xf]
    %v31 = vld [vmem:[%s1 + $0x8] sm:$0xf]
    %v32 = vld [vmem:[%s1 + $0xc] sm:$0xf]
    %v33 = vld [vmem:[%s1 + $0x10] sm:$0xf]
    %v34 = vld [vmem:[%s1 + $0x14] sm:$0xf]
    %v35 = vld [vmem:[%s1 + $0x18] sm:$0xf]
    %v36 = vld [vmem:[%s1 + $0x1c] sm:$0xf]
    %v37 = vld [vmem:[%s1 + $0x20] sm:$0xf]
    %v38 = vld [vmem:[%s1 + $0x24] sm:$0xf]
    %v39 = vld [vmem:[%s1 + $0x28] sm:$0xf]
    %v40 = vld [vmem:[%s1 + $0x2c] sm:$0xf]
    %v41 = vld [vmem:[%s1 + $0x30] sm:$0xf]
    %v42 = vld [vmem:[%s1 + $0x34] sm:$0xf]
    %v43 = vld [vmem:[%s1 + $0x38] sm:$0xf]
    %v44 = vld [vmem:[%s1 + $0x3c] sm:$0xf]
    %v45 = vld [vmem:[%s1 + $0x40] sm:$0xf]
    %v46 = vld [vmem:[%s1 + $0x44] sm:$0xf]
    %v47 = vld [vmem:[%s1 + $0x48] sm:$0xf]
    %v48 = vld [vmem:[%s1 + $0x4c] sm:$0xf]
    %v49 = vld [vmem:[%s1 + $0x50] sm:$0xf]
    %v50 = vld [vmem:[%s1 + $0x54] sm:$0xf]
    %v51 = vld [vmem:[%s1 + $0x58] sm:$0xf]
    %v52 = vld [vmem:[%s1 + $0x5c] sm:$0xf]
    %v53 = vld [vmem:[%s1 + $0x60] sm:$0xf]
    %v54 = vld [vmem:[%s1 + $0x64] sm:$0xf]
    %v55 = vld [vmem:[%s1 + $0x68] sm:$0xf]
    %v56 = vld [vmem:[%s1 + $0x6c] sm:$0xf]
    %v57 = vld [vmem:[%s1 + $0x70] sm:$0xf]
    %v58 = vld [vmem:[%s1 + $0x74] sm:$0xf]
    %v59 = vld [vmem:[%s1 + $0x78] sm:$0xf]
    %v60 = vld [vmem:[%s1 + $0x7c] sm:$0xf]
    %v61 = vld [vmem:[%s1 + $0x80] sm:$0xf]
    %v62 = vld [vmem:[%s1 + $0x84] sm:$0xf]
    %v63 = vld [vmem:[%s1 + $0x88] sm:$0xf]
    %v64 = vld [vmem:[%s1 + $0x8c] sm:$0xf]
    %v65 = vld [vmem:[%s1 + $0x90] sm:$0xf]
    %v66 = vld [vmem:[%s1 + $0x94] sm:$0xf]
    %v67 = vld [vmem:[%s1 + $0x98] sm:$0xf]
    %v68 = vld [vmem:[%s1 + $0x9c] sm:$0xf]
    %v69 = vld [vmem:[%s1 + $0xa0] sm:$0xf]
    %v70 = vld [vmem:[%s1 + $0xa4] sm:$0xf]
    %v71 = vld [vmem:[%s1 + $0xa8] sm:$0xf]
    %v72 = vld [vmem:[%s1 + $0xac] sm:$0xf]
    %v73 = vld [vmem:[%s1 + $0xb0] sm:$0xf]
    %v74 = vld [vmem:[%s1 + $0xb4] sm:$0xf]
    %v75 = vld [vmem:[%s1 + $0xb8] sm:$0xf]
    %v76 = vld [vmem:[%s1 + $0xbc] sm:$0xf]
    %v77 = vld [vmem:[%s1 + $0xc0] sm:$0xf]
    %v78 = vld [vmem:[%s1 + $0xc4] sm:$0xf]
    %v79 = vld [vmem:[%s1 + $0xc8] sm:$0xf]
    %v80 = vld [vmem:[%s1 + $0xcc] sm:$0xf]
    %v81 = vld [vmem:[%s1 + $0xd0] sm:$0xf]
    %v82 = vld [vmem:[%s1 + $0xd4] sm:$0xf]
    %v83 = vld [vmem:[%s1 + $0xd8] sm:$0xf]
    %v84 = vld [vmem:[%s1 + $0xdc] sm:$0xf]
    %v85 = vld [vmem:[%s1 + $0xe0] sm:$0xf]
    %v86 = vld [vmem:[%s1 + $0xe4] sm:$0xf]
    %v87 = vld [vmem:[%s1 + $0xe8] sm:$0xf]
    %v88 = vld [vmem:[%s1 + $0xec] sm:$0xf]
    %v89 = vld [vmem:[%s1 + $0xf0] sm:$0xf]
    %v90 = vld [vmem:[%s1 + $0xf4] sm:$0xf]
    %v91 = vld [vmem:[%s1 + $0xf8] sm:$0xf]
    %v92 = vld [vmem:[%s1 + $0xfc] sm:$0xf]
    %v93 = vld [vmem:[%s1 + $0x100] sm:$0xf]
    %v94 = vld [vmem:[%s1 + $0x104] sm:$0xf]
    %v95 = vld [vmem:[%s1 + $0x108] sm:$0xf]
    %v96 = vld [vmem:[%s1 + $0x10c] sm:$0xf]
    %v97 = vld [vmem:[%s1 + $0x110] sm:$0xf]
    %v98 = vld [vmem:[%s1 + $0x114] sm:$0xf]
    %v99 = vld [vmem:[%s1 + $0x118] sm:$0xf]
    %v100 = vld [vmem:[%s1 + $0x11c] sm:$0xf]
    %v101 = vld [vmem:[%s1 + $0x120] sm:$0xf]
    %v102 = vld [vmem:[%s1 + $0x124] sm:$0xf]
    %v103 = vld [vmem:[%s1 + $0x128] sm:$0xf]
    %v104 = vld [vmem:[%s1 + $0x12c] sm:$0xf]
    %v105 = vld [vmem:[%s1 + $0x130] sm:$0xf]
    %v106 = vld [vmem:[%s1 + $0x134] sm:$0xf]
    %v107 = vld [vmem:[%s1 + $0x138] sm:$0xf]
    %v108 = vld [vmem:[%s1 + $0x13c] sm:$0xf]
    %v109 = vld [vmem:[%s1 + $0x140] sm:$0xf]
    %v110 = vld [vmem:[%s1 + $0x144] sm:$0xf]
    %v111 = vld [vmem:[%s1 + $0x148] sm:$0xf]
    %v112 = vld [vmem:[%s1 + $0x14c] sm:$0xf]
    %v113 = vld [vmem:[%s1 + $0x150] sm:$0xf]
    %v114 = vld [vmem:[%s1 + $0x154] sm:$0xf]
    %v115 = vld [vmem:[%s1 + $0x158] sm:$0xf]
    %v116 = vld [vmem:[%s1 + $0x15c] sm:$0xf]
    %v117 = vld [vmem:[%s1 + $0x160] sm:$0xf]
    %v118 = vld [vmem:[%s1 + $0x164] sm:$0xf]
    %v119 = vld [vmem:[%s1 + $0x168] sm:$0xf]
    %v120 = vld [vmem:[%s1 + $0x16c] sm:$0xf]
    %v121 = vld [vmem:[%s1 + $0x170] sm:$0xf]
    %v122 = vld [vmem:[%s1 + $0x174] sm:$0xf]
    %v123 = vld [vmem:[%s1 + $0x178] sm:$0xf]
    %v124 = vld [vmem:[%s1 + $0x17c] sm:$0xf]
    %v125 = vld [vmem:[%s1 + $0x180] sm:$0xf]
    %v126 = vld [vmem:[%s1 + $0x184] sm:$0xf]
    %v127 = vld [vmem:[%s1 + $0x188] sm:$0xf]
    %v128 = vld [vmem:[%s1 + $0x18c] sm:$0xf]
    %v129 = vld [vmem:[%s1 + $0x190] sm:$0xf]
    %v130 = vld [vmem:[%s1 + $0x194] sm:$0xf]
    %v131 = vld [vmem:[%s1 + $0x198] sm:$0xf]
    %v132 = vld [vmem:[%s1 + $0x19c] sm:$0xf]
    %v133 = vld [vmem:[%s1 + $0x1a0] sm:$0xf]
    %v134 = vld [vmem:[%s1 + $0x1a4] sm:$0xf]
    %v135 = vld [vmem:[%s1 + $0x1a8] sm:$0xf]
    %v136 = vld [vmem:[%s1 + $0x1ac] sm:$0xf]
    %v137 = vld [vmem:[%s1 + $0x1b0] sm:$0xf]
    %v138 = vld [vmem:[%s1 + $0x1b4] sm:$0xf]
    %v139 = vld [vmem:[%s1 + $0x1b8] sm:$0xf]
    %v140 = vld [vmem:[%s1 + $0x1bc] sm:$0xf]
    %v145 = vunpack.c.l.b16 %v25
    %v146 = vunpack.c.h.b16 %v25
    %v147 = vunpack.c.l.b16 %v26
    %v148 = vunpack.c.h.b16 %v26
    %v149 = vunpack.c.l.b16 %v27
    %v150 = vunpack.c.h.b16 %v27
    %v151 = vunpack.c.l.b16 %v28
    %v152 = vpack.c.b16 %v145, %v145
    %v153 = vpack.c.b16 %v146, %v146
    %v154 = vpack.c.b16 %v147, %v147
    %v155 = vpack.c.b16 %v148, %v148
    %v156 = vpack.c.b16 %v149, %v149
    %v157 = vpack.c.b16 %v150, %v150
    %v158 = vpack.c.b16 %v151, %v151
    %v278 = vunpack.c.l.b16 %v29
    %v279 = vunpack.c.l.b16 %v30
    %v280 = vunpack.c.l.b16 %v31
    %v281 = vunpack.c.l.b16 %v32
    %v282 = vunpack.c.l.b16 %v33
    %v283 = vunpack.c.l.b16 %v34
    %v284 = vunpack.c.l.b16 %v35
    %v285 = vunpack.c.l.b16 %v36
    %v286 = vunpack.c.l.b16 %v37
    %v287 = vunpack.c.l.b16 %v38
    %v288 = vunpack.c.l.b16 %v39
    %v289 = vunpack.c.l.b16 %v40
    %v290 = vunpack.c.l.b16 %v41
    %v291 = vunpack.c.l.b16 %v42
    %v292 = vunpack.c.l.b16 %v43
    %v293 = vunpack.c.l.b16 %v44
    %v294 = vunpack.c.l.b16 %v45
    %v295 = vunpack.c.l.b16 %v46
    %v296 = vunpack.c.l.b16 %v47
    %v297 = vunpack.c.l.b16 %v48
    %v298 = vunpack.c.l.b16 %v49
    %v299 = vunpack.c.l.b16 %v50
    %v300 = vunpack.c.l.b16 %v51
    %v301 = vunpack.c.l.b16 %v52
    %v302 = vunpack.c.l.b16 %v53
    %v303 = vunpack.c.l.b16 %v54
    %v304 = vunpack.c.l.b16 %v55
    %v305 = vunpack.c.l.b16 %v56
    %v306 = vunpack.c.l.b16 %v57
    %v307 = vunpack.c.l.b16 %v58
    %v308 = vunpack.c.l.b16 %v59
    %v309 = vunpack.c.l.b16 %v60
    %v310 = vunpack.c.l.b16 %v61
    %v311 = vunpack.c.l.b16 %v62
    %v312 = vunpack.c.l.b16 %v63
    %v313 = vunpack.c.l.b16 %v64
    %v314 = vunpack.c.l.b16 %v65
    %v315 = vunpack.c.l.b16 %v66
    %v316 = vunpack.c.l.b16 %v67
    %v317 = vunpack.c.l.b16 %v68
    %v318 = vunpack.c.l.b16 %v69
    %v319 = vunpack.c.l.b16 %v70
    %v320 = vunpack.c.l.b16 %v71
    %v321 = vunpack.c.l.b16 %v72
    %v322 = vunpack.c.l.b16 %v73
    %v323 = vunpack.c.l.b16 %v74
    %v324 = vunpack.c.l.b16 %v75
    %v325 = vunpack.c.l.b16 %v76
    %v326 = vunpack.c.l.b16 %v77
    %v327 = vunpack.c.l.b16 %v78
    %v328 = vunpack.c.l.b16 %v79
    %v329 = vunpack.c.l.b16 %v80
    %v330 = vunpack.c.l.b16 %v81
    %v331 = vunpack.c.l.b16 %v82
    %v332 = vunpack.c.l.b16 %v83
    %v333 = vunpack.c.l.b16 %v84
    %v334 = vunpack.c.l.b16 %v85
    %v335 = vunpack.c.l.b16 %v86
    %v336 = vunpack.c.l.b16 %v87
    %v337 = vunpack.c.l.b16 %v88
    %v338 = vunpack.c.l.b16 %v89
    %v339 = vunpack.c.l.b16 %v90
    %v340 = vunpack.c.l.b16 %v91
    %v341 = vunpack.c.l.b16 %v92
    %v342 = vunpack.c.l.b16 %v93
    %v343 = vunpack.c.l.b16 %v94
    %v344 = vunpack.c.l.b16 %v95
    %v345 = vunpack.c.l.b16 %v96
    %v346 = vunpack.c.l.b16 %v97
    %v347 = vunpack.c.l.b16 %v98
    %v348 = vunpack.c.l.b16 %v99
    %v349 = vunpack.c.l.b16 %v100
    %v350 = vunpack.c.l.b16 %v101
    %v351 = vunpack.c.l.b16 %v102
    %v352 = vunpack.c.l.b16 %v103
    %v353 = vunpack.c.l.b16 %v104
    %v354 = vunpack.c.l.b16 %v105
    %v355 = vunpack.c.l.b16 %v106
    %v356 = vunpack.c.l.b16 %v107
    %v357 = vunpack.c.l.b16 %v108
    %v358 = vunpack.c.l.b16 %v109
    %v359 = vunpack.c.l.b16 %v110
    %v360 = vunpack.c.l.b16 %v111
    %v361 = vunpack.c.l.b16 %v112
    %v362 = vunpack.c.l.b16 %v113
    %v363 = vunpack.c.l.b16 %v114
    %v364 = vunpack.c.l.b16 %v115
    %v365 = vunpack.c.l.b16 %v116
    %v366 = vunpack.c.l.b16 %v117
    %v367 = vunpack.c.l.b16 %v118
    %v368 = vunpack.c.l.b16 %v119
    %v369 = vunpack.c.l.b16 %v120
    %v370 = vunpack.c.l.b16 %v121
    %v371 = vunpack.c.l.b16 %v122
    %v372 = vunpack.c.l.b16 %v123
    %v373 = vunpack.c.l.b16 %v124
    %v374 = vunpack.c.l.b16 %v125
    %v375 = vunpack.c.l.b16 %v126
    %v376 = vunpack.c.l.b16 %v127
    %v377 = vunpack.c.l.b16 %v128
    %v378 = vunpack.c.l.b16 %v129
    %v379 = vunpack.c.l.b16 %v130
    %v380 = vunpack.c.l.b16 %v131
    %v381 = vunpack.c.l.b16 %v132
    %v382 = vunpack.c.l.b16 %v133
    %v383 = vunpack.c.l.b16 %v134
    %v384 = vunpack.c.l.b16 %v135
    %v385 = vunpack.c.l.b16 %v136
    %v386 = vunpack.c.l.b16 %v137
    %v387 = vunpack.c.l.b16 %v138
    %v388 = vunpack.c.l.b16 %v139
    %v389 = vunpack.c.l.b16 %v140
    %v390 = vpack.c.b16 %v279, %v278
    %v391 = vpack.c.b16 %v281, %v280
    %v392 = vpack.c.b16 %v283, %v282
    %v393 = vpack.c.b16 %v285, %v284
    %v394 = vpack.c.b16 %v287, %v286
    %v395 = vpack.c.b16 %v289, %v288
    %v396 = vpack.c.b16 %v291, %v290
    %v397 = vpack.c.b16 %v293, %v292
    %v398 = vpack.c.b16 %v295, %v294
    %v399 = vpack.c.b16 %v297, %v296
    %v400 = vpack.c.b16 %v299, %v298
    %v401 = vpack.c.b16 %v301, %v300
    %v402 = vpack.c.b16 %v303, %v302
    %v403 = vpack.c.b16 %v305, %v304
    %v404 = vpack.c.b16 %v307, %v306
    %v405 = vpack.c.b16 %v309, %v308
    %v406 = vpack.c.b16 %v311, %v310
    %v407 = vpack.c.b16 %v313, %v312
    %v408 = vpack.c.b16 %v315, %v314
    %v409 = vpack.c.b16 %v317, %v316
    %v410 = vpack.c.b16 %v319, %v318
    %v411 = vpack.c.b16 %v321, %v320
    %v412 = vpack.c.b16 %v323, %v322
    %v413 = vpack.c.b16 %v325, %v324
    %v414 = vpack.c.b16 %v327, %v326
    %v415 = vpack.c.b16 %v329, %v328
    %v416 = vpack.c.b16 %v331, %v330
    %v417 = vpack.c.b16 %v333, %v332
    %v418 = vpack.c.b16 %v335, %v334
    %v419 = vpack.c.b16 %v337, %v336
    %v420 = vpack.c.b16 %v339, %v338
    %v421 = vpack.c.b16 %v341, %v340
    %v422 = vpack.c.b16 %v343, %v342
    %v423 = vpack.c.b16 %v345, %v344
    %v424 = vpack.c.b16 %v347, %v346
    %v425 = vpack.c.b16 %v349, %v348
    %v426 = vpack.c.b16 %v351, %v350
    %v427 = vpack.c.b16 %v353, %v352
    %v428 = vpack.c.b16 %v355, %v354
    %v429 = vpack.c.b16 %v357, %v356
    %v430 = vpack.c.b16 %v359, %v358
    %v431 = vpack.c.b16 %v361, %v360
    %v432 = vpack.c.b16 %v363, %v362
    %v433 = vpack.c.b16 %v365, %v364
    %v434 = vpack.c.b16 %v367, %v366
    %v435 = vpack.c.b16 %v369, %v368
    %v436 = vpack.c.b16 %v371, %v370
    %v437 = vpack.c.b16 %v373, %v372
    %v438 = vpack.c.b16 %v375, %v374
    %v439 = vpack.c.b16 %v377, %v376
    %v440 = vpack.c.b16 %v379, %v378
    %v441 = vpack.c.b16 %v381, %v380
    %v442 = vpack.c.b16 %v383, %v382
    %v443 = vpack.c.b16 %v385, %v384
    %v444 = vpack.c.b16 %v387, %v386
    %v445 = vpack.c.b16 %v389, %v388
    %502 = vmatprep.subr.bf16.mxu0 0
    %503 = vmatpush1.bf16.msra.mxu0 %v397
    %504 = vmatprep.subr.bf16.mxu0 0
    %505 = vmatpush1.bf16.msra.mxu0 %v396
    %506 = vmatprep.subr.bf16.mxu0 0
    %507 = vmatpush1.bf16.msra.mxu0 %v395
    %508 = vmatprep.subr.bf16.mxu0 0
    %509 = vmatpush1.bf16.msra.mxu0 %v394
    %510 = vmatprep.subr.bf16.mxu0 0
    %511 = vmatpush1.bf16.msra.mxu0 %v393
    %512 = vmatprep.subr.bf16.mxu0 0
    %513 = vmatpush1.bf16.msra.mxu0 %v392
    %514 = vmatprep.subr.bf16.mxu0 0
    %515 = vmatpush1.bf16.msra.mxu0 %v391
    %516 = vmatprep.subr.bf16.mxu0 0
    %517 = vmatpush1.bf16.msra.mxu0 %v390
    %518 = vmatprep.subr.bf16.mxu0 0
    %519 = vmatpush2.bf16.msra.mxu0 %v405
    %520 = vmatprep.subr.bf16.mxu0 0
    %521 = vmatpush2.bf16.msra.mxu0 %v404
    %522 = vmatprep.subr.bf16.mxu0 0
    %523 = vmatpush2.bf16.msra.mxu0 %v403
    %524 = vmatprep.subr.bf16.mxu0 0
    %525 = vmatpush2.bf16.msra.mxu0 %v402
    %526 = vmatprep.subr.bf16.mxu0 0
    %527 = vmatpush2.bf16.msra.mxu0 %v401
    %528 = vmatprep.subr.bf16.mxu0 0
    %529 = vmatpush2.bf16.msra.mxu0 %v400
    %530 = vmatprep.subr.bf16.mxu0 0
    %531 = vmatpush2.bf16.msra.mxu0 %v399
    %532 = vmatprep.subr.bf16.mxu0 0
    %533 = vmatpush2.bf16.msra.mxu0 %v398
    %534 = vmatprep.mubr.bf16.mxu0 %v153
    %535 = vmatmul.mubr.bf16.gmra.mxu0 %v152
    %v536 = vpop.f32.mrf.mxu0
    %v537 = vadd.f32 0.0, %v536
    %v538 = vpop.f32.mrf.mxu0
    %v539 = vpop.f32.mrf.mxu0
    %v540 = vpop.f32.mrf.mxu0
    %541 = vdwg.mxu0
    %542 = vmatprep.subr.bf16.mxu0 0
    %543 = vmatpush1.bf16.msra.mxu0 %v413
    %544 = vmatprep.subr.bf16.mxu0 0
    %545 = vmatpush1.bf16.msra.mxu0 %v412
    %546 = vmatprep.subr.bf16.mxu0 0
    %547 = vmatpush1.bf16.msra.mxu0 %v411
    %548 = vmatprep.subr.bf16.mxu0 0
    %549 = vmatpush1.bf16.msra.mxu0 %v410
    %550 = vmatprep.subr.bf16.mxu0 0
    %551 = vmatpush1.bf16.msra.mxu0 %v409
    %552 = vmatprep.subr.bf16.mxu0 0
    %553 = vmatpush1.bf16.msra.mxu0 %v408
    %554 = vmatprep.subr.bf16.mxu0 0
    %555 = vmatpush1.bf16.msra.mxu0 %v407
    %556 = vmatprep.subr.bf16.mxu0 0
    %557 = vmatpush1.bf16.msra.mxu0 %v406
    %558 = vmatprep.subr.bf16.mxu0 0
    %559 = vmatpush2.bf16.msra.mxu0 %v421
    %560 = vmatprep.subr.bf16.mxu0 0
    %561 = vmatpush2.bf16.msra.mxu0 %v420
    %562 = vmatprep.subr.bf16.mxu0 0
    %563 = vmatpush2.bf16.msra.mxu0 %v419
    %564 = vmatprep.subr.bf16.mxu0 0
    %565 = vmatpush2.bf16.msra.mxu0 %v418
    %566 = vmatprep.subr.bf16.mxu0 0
    %567 = vmatpush2.bf16.msra.mxu0 %v417
    %568 = vmatprep.subr.bf16.mxu0 0
    %569 = vmatpush2.bf16.msra.mxu0 %v416
    %570 = vmatprep.subr.bf16.mxu0 0
    %571 = vmatpush2.bf16.msra.mxu0 %v415
    %572 = vmatprep.subr.bf16.mxu0 0
    %573 = vmatpush2.bf16.msra.mxu0 %v414
    %574 = vmatprep.mubr.bf16.mxu0 %v155
    %575 = vmatmul.mubr.bf16.gmra.mxu0 %v154
    %v576 = vpop.f32.mrf.mxu0
    %v577 = vadd.f32 %v537, %v576
    %v578 = vpop.f32.mrf.mxu0
    %v579 = vpop.f32.mrf.mxu0
    %v580 = vpop.f32.mrf.mxu0
    %581 = vdwg.mxu0
    %582 = vmatprep.subr.bf16.mxu0 0
    %583 = vmatpush1.bf16.msra.mxu0 %v429
    %584 = vmatprep.subr.bf16.mxu0 0
    %585 = vmatpush1.bf16.msra.mxu0 %v428
    %586 = vmatprep.subr.bf16.mxu0 0
    %587 = vmatpush1.bf16.msra.mxu0 %v427
    %588 = vmatprep.subr.bf16.mxu0 0
    %589 = vmatpush1.bf16.msra.mxu0 %v426
    %590 = vmatprep.subr.bf16.mxu0 0
    %591 = vmatpush1.bf16.msra.mxu0 %v425
    %592 = vmatprep.subr.bf16.mxu0 0
    %593 = vmatpush1.bf16.msra.mxu0 %v424
    %594 = vmatprep.subr.bf16.mxu0 0
    %595 = vmatpush1.bf16.msra.mxu0 %v423
    %596 = vmatprep.subr.bf16.mxu0 0
    %597 = vmatpush1.bf16.msra.mxu0 %v422
    %598 = vmatprep.subr.bf16.mxu0 0
    %599 = vmatpush2.bf16.msra.mxu0 %v437
    %600 = vmatprep.subr.bf16.mxu0 0
    %601 = vmatpush2.bf16.msra.mxu0 %v436
    %602 = vmatprep.subr.bf16.mxu0 0
    %603 = vmatpush2.bf16.msra.mxu0 %v435
    %604 = vmatprep.subr.bf16.mxu0 0
    %605 = vmatpush2.bf16.msra.mxu0 %v434
    %606 = vmatprep.subr.bf16.mxu0 0
    %607 = vmatpush2.bf16.msra.mxu0 %v433
    %608 = vmatprep.subr.bf16.mxu0 0
    %609 = vmatpush2.bf16.msra.mxu0 %v432
    %610 = vmatprep.subr.bf16.mxu0 0
    %611 = vmatpush2.bf16.msra.mxu0 %v431
    %612 = vmatprep.subr.bf16.mxu0 0
    %613 = vmatpush2.bf16.msra.mxu0 %v430
    %614 = vmatprep.mubr.bf16.mxu0 %v157
    %615 = vmatmul.mubr.bf16.gmra.mxu0 %v156
    %v616 = vpop.f32.mrf.mxu0
    %v617 = vadd.f32 %v577, %v616
    %v618 = vpop.f32.mrf.mxu0
    %v619 = vpop.f32.mrf.mxu0
    %v620 = vpop.f32.mrf.mxu0
    %621 = vdwg.mxu0
    %622 = vmatprep.subr.bf16.mxu0 0
    %623 = vmatpush1.bf16.msra.mxu0 %v445
    %624 = vmatprep.subr.bf16.mxu0 0
    %625 = vmatpush1.bf16.msra.mxu0 %v444
    %626 = vmatprep.subr.bf16.mxu0 0
    %627 = vmatpush1.bf16.msra.mxu0 %v443
    %628 = vmatprep.subr.bf16.mxu0 0
    %629 = vmatpush1.bf16.msra.mxu0 %v442
    %630 = vmatprep.subr.bf16.mxu0 0
    %631 = vmatpush1.bf16.msra.mxu0 %v441
    %632 = vmatprep.subr.bf16.mxu0 0
    %633 = vmatpush1.bf16.msra.mxu0 %v440
    %634 = vmatprep.subr.bf16.mxu0 0
    %635 = vmatpush1.bf16.msra.mxu0 %v439
    %636 = vmatprep.subr.bf16.mxu0 0
    %637 = vmatpush1.bf16.msra.mxu0 %v438
    %638 = vmatprep.subr.bf16.mxu0 0
    %639 = vmatpush2.bf16.msra.mxu0 0
    %640 = vmatprep.subr.bf16.mxu0 0
    %641 = vmatpush2.bf16.msra.mxu0 0
    %642 = vmatprep.subr.bf16.mxu0 0
    %643 = vmatpush2.bf16.msra.mxu0 0
    %644 = vmatprep.subr.bf16.mxu0 0
    %645 = vmatpush2.bf16.msra.mxu0 0
    %646 = vmatprep.subr.bf16.mxu0 0
    %647 = vmatpush2.bf16.msra.mxu0 0
    %648 = vmatprep.subr.bf16.mxu0 0
    %649 = vmatpush2.bf16.msra.mxu0 0
    %650 = vmatprep.subr.bf16.mxu0 0
    %651 = vmatpush2.bf16.msra.mxu0 0
    %652 = vmatprep.subr.bf16.mxu0 0
    %653 = vmatpush2.bf16.msra.mxu0 0
    %654 = vmatprep.mubr.bf16.mxu0 0
    %655 = vmatmul.mubr.bf16.gmra.mxu0 %v158
    %v656 = vpop.f32.mrf.mxu0
    %v657 = vadd.f32 %v617, %v656
    %v658 = vpop.f32.mrf.mxu0
    %v659 = vpop.f32.mrf.mxu0
    %v660 = vpop.f32.mrf.mxu0
    %661 = vdwg.mxu0
    %v662 = vrot.slane %v657, 4
    %v663 = vadd.f32 %v657, %v662
    %v664 = vrot.slane %v663, 2
    %v665 = vadd.f32 %v663, %v664
    %v666 = vrot.slane %v665, 1
    %v667 = vadd.f32 %v665, %v666
    %v668 = vrcp.pop 8.0
    %v669 = vmul.f32 %v667, %v668
    %v670 = vmul.f32 %v657, %v657
    %v671 = vrot.slane %v670, 4
    %v672 = vadd.f32 %v670, %v671
    %v673 = vrot.slane %v672, 2
    %v674 = vadd.f32 %v672, %v673
    %v675 = vrot.slane %v674, 1
    %v676 = vadd.f32 %v674, %v675
    %v677 = vmul.f32 %v676, %v668
    %v678 = vmul.f32 %v669, %v669
    %v679 = vsub.f32 %v677, %v678
    %v680 = vmax.f32 %v679, 0.0
    %v681 = vld [vmem:[%s2] sm:$0x1]
    %v682 = vadd.f32 %v680, 1e-05
    %v683 = vrsqrt.pop %v682
    %v684 = vmul.f32 %v681, %v683
    %v685 = vld [vmem:[%s3] sm:$0x1]
    %v686 = vmul.f32 %v669, %v684
    %v687 = vsub.f32 %v685, %v686
    %v689 = vlaneseq
    %v690 = vshrl.u32 %v689, 7
    %v691 = vsub.s32 0, %v690
    %v692 = vrot.slane %v684, %v691
    %v694 = vmul.f32 %v657, %v692
    %v696 = vlaneseq
    %v697 = vshrl.u32 %v696, 7
    %v698 = vsub.s32 0, %v697
    %v699 = vrot.slane %v687, %v698
    %v701 = vadd.f32 %v694, %v699
    %v702 = vmax.f32 %v701, 0.0
    %v703 = vpack.c.bf16 %v702, %v702
    %v704 = vld [vmem:[%s4] sm:$0xf]
    %v705 = vld [vmem:[%s4 + $0x4] sm:$0xf]
    %v706 = vld [vmem:[%s4 + $0x8] sm:$0xf]
    %v707 = vld [vmem:[%s4 + $0xc] sm:$0xf]
    %v708 = vld [vmem:[%s4 + $0x10] sm:$0xf]
    %v709 = vld [vmem:[%s4 + $0x14] sm:$0xf]
    %v710 = vld [vmem:[%s4 + $0x18] sm:$0xf]
    %v711 = vld [vmem:[%s4 + $0x1c] sm:$0xf]
    %v712 = vld [vmem:[%s4 + $0x20] sm:$0xf]
    %v713 = vld [vmem:[%s4 + $0x24] sm:$0xf]
    %v714 = vld [vmem:[%s4 + $0x28] sm:$0xf]
    %v715 = vld [vmem:[%s4 + $0x2c] sm:$0xf]
    %v716 = vld [vmem:[%s4 + $0x30] sm:$0xf]
    %v717 = vld [vmem:[%s4 + $0x34] sm:$0xf]
    %v718 = vld [vmem:[%s4 + $0x38] sm:$0xf]
    %v719 = vld [vmem:[%s4 + $0x3c] sm:$0xf]
    %s720 = scalar_lea.vmem %s4, 64
    %v721 = vld [vmem:[%s720] sm:$0xf]
    %v722 = vld [vmem:[%s720 + $0x4] sm:$0xf]
    %v723 = vld [vmem:[%s720 + $0x8] sm:$0xf]
    %v724 = vld [vmem:[%s720 + $0xc] sm:$0xf]
    %v725 = vld [vmem:[%s720 + $0x10] sm:$0xf]
    %v726 = vld [vmem:[%s720 + $0x14] sm:$0xf]
    %v727 = vld [vmem:[%s720 + $0x18] sm:$0xf]
    %v728 = vld [vmem:[%s720 + $0x1c] sm:$0xf]
    %v729 = vld [vmem:[%s720 + $0x20] sm:$0xf]
    %v730 = vld [vmem:[%s720 + $0x24] sm:$0xf]
    %v731 = vld [vmem:[%s720 + $0x28] sm:$0xf]
    %v732 = vld [vmem:[%s720 + $0x2c] sm:$0xf]
    %v733 = vld [vmem:[%s720 + $0x30] sm:$0xf]
    %v734 = vld [vmem:[%s720 + $0x34] sm:$0xf]
    %v735 = vld [vmem:[%s720 + $0x38] sm:$0xf]
    %v736 = vld [vmem:[%s720 + $0x3c] sm:$0xf]
    %v738 = vrot.slane %v703, 1
    %v756 = vunpack.c.l.b16 %v721
    %v757 = vunpack.c.l.b16 %v722
    %v758 = vunpack.c.l.b16 %v723
    %v759 = vunpack.c.l.b16 %v724
    %v760 = vunpack.c.l.b16 %v725
    %v761 = vunpack.c.l.b16 %v726
    %v762 = vunpack.c.l.b16 %v727
    %v763 = vunpack.c.l.b16 %v728
    %v764 = vunpack.c.l.b16 %v729
    %v765 = vunpack.c.l.b16 %v730
    %v766 = vunpack.c.l.b16 %v731
    %v767 = vunpack.c.l.b16 %v732
    %v768 = vunpack.c.l.b16 %v733
    %v769 = vunpack.c.l.b16 %v734
    %v770 = vunpack.c.l.b16 %v735
    %v771 = vunpack.c.l.b16 %v736
    %v772 = vpack.c.b16 %v757, %v756
    %v773 = vpack.c.b16 %v759, %v758
    %v774 = vpack.c.b16 %v761, %v760
    %v775 = vpack.c.b16 %v763, %v762
    %v776 = vpack.c.b16 %v765, %v764
    %v777 = vpack.c.b16 %v767, %v766
    %v778 = vpack.c.b16 %v769, %v768
    %v779 = vpack.c.b16 %v771, %v770
    %788 = vmatprep.subr.bf16.mxu0 0
    %789 = vmatpush1.bf16.msra.mxu0 %v779
    %790 = vmatprep.subr.bf16.mxu0 0
    %791 = vmatpush1.bf16.msra.mxu0 %v778
    %792 = vmatprep.subr.bf16.mxu0 0
    %793 = vmatpush1.bf16.msra.mxu0 %v777
    %794 = vmatprep.subr.bf16.mxu0 0
    %795 = vmatpush1.bf16.msra.mxu0 %v776
    %796 = vmatprep.subr.bf16.mxu0 0
    %797 = vmatpush1.bf16.msra.mxu0 %v775
    %798 = vmatprep.subr.bf16.mxu0 0
    %799 = vmatpush1.bf16.msra.mxu0 %v774
    %800 = vmatprep.subr.bf16.mxu0 0
    %801 = vmatpush1.bf16.msra.mxu0 %v773
    %802 = vmatprep.subr.bf16.mxu0 0
    %803 = vmatpush1.bf16.msra.mxu0 %v772
    %804 = vmatprep.subr.bf16.mxu0 0
    %805 = vmatpush2.bf16.msra.mxu0 0
    %806 = vmatprep.subr.bf16.mxu0 0
    %807 = vmatpush2.bf16.msra.mxu0 0
    %808 = vmatprep.subr.bf16.mxu0 0
    %809 = vmatpush2.bf16.msra.mxu0 0
    %810 = vmatprep.subr.bf16.mxu0 0
    %811 = vmatpush2.bf16.msra.mxu0 0
    %812 = vmatprep.subr.bf16.mxu0 0
    %813 = vmatpush2.bf16.msra.mxu0 0
    %814 = vmatprep.subr.bf16.mxu0 0
    %815 = vmatpush2.bf16.msra.mxu0 0
    %816 = vmatprep.subr.bf16.mxu0 0
    %817 = vmatpush2.bf16.msra.mxu0 0
    %818 = vmatprep.subr.bf16.mxu0 0
    %819 = vmatpush2.bf16.msra.mxu0 0
    %820 = vmatprep.mubr.bf16.mxu0 0
    %821 = vmatmul.mubr.bf16.gmra.mxu0 %v738
    %v822 = vpop.f32.mrf.mxu0
    %v823 = vadd.f32 0.0, %v822
    %v824 = vpop.f32.mrf.mxu0
    %v825 = vpop.f32.mrf.mxu0
    %v826 = vpop.f32.mrf.mxu0
    %827 = vdwg.mxu0
    %v844 = vunpack.c.l.b16 %v704
    %v845 = vunpack.c.l.b16 %v705
    %v846 = vunpack.c.l.b16 %v706
    %v847 = vunpack.c.l.b16 %v707
    %v848 = vunpack.c.l.b16 %v708
    %v849 = vunpack.c.l.b16 %v709
    %v850 = vunpack.c.l.b16 %v710
    %v851 = vunpack.c.l.b16 %v711
    %v852 = vunpack.c.l.b16 %v712
    %v853 = vunpack.c.l.b16 %v713
    %v854 = vunpack.c.l.b16 %v714
    %v855 = vunpack.c.l.b16 %v715
    %v856 = vunpack.c.l.b16 %v716
    %v857 = vunpack.c.l.b16 %v717
    %v858 = vunpack.c.l.b16 %v718
    %v859 = vunpack.c.l.b16 %v719
    %v860 = vpack.c.b16 %v845, %v844
    %v861 = vpack.c.b16 %v847, %v846
    %v862 = vpack.c.b16 %v849, %v848
    %v863 = vpack.c.b16 %v851, %v850
    %v864 = vpack.c.b16 %v853, %v852
    %v865 = vpack.c.b16 %v855, %v854
    %v866 = vpack.c.b16 %v857, %v856
    %v867 = vpack.c.b16 %v859, %v858
    %876 = vmatprep.subr.bf16.mxu0 0
    %877 = vmatpush1.bf16.msra.mxu0 %v867
    %878 = vmatprep.subr.bf16.mxu0 0
    %879 = vmatpush1.bf16.msra.mxu0 %v866
    %880 = vmatprep.subr.bf16.mxu0 0
    %881 = vmatpush1.bf16.msra.mxu0 %v865
    %882 = vmatprep.subr.bf16.mxu0 0
    %883 = vmatpush1.bf16.msra.mxu0 %v864
    %884 = vmatprep.subr.bf16.mxu0 0
    %885 = vmatpush1.bf16.msra.mxu0 %v863
    %886 = vmatprep.subr.bf16.mxu0 0
    %887 = vmatpush1.bf16.msra.mxu0 %v862
    %888 = vmatprep.subr.bf16.mxu0 0
    %889 = vmatpush1.bf16.msra.mxu0 %v861
    %890 = vmatprep.subr.bf16.mxu0 0
    %891 = vmatpush1.bf16.msra.mxu0 %v860
    %892 = vmatprep.subr.bf16.mxu0 0
    %893 = vmatpush2.bf16.msra.mxu0 0
    %894 = vmatprep.subr.bf16.mxu0 0
    %895 = vmatpush2.bf16.msra.mxu0 0
    %896 = vmatprep.subr.bf16.mxu0 0
    %897 = vmatpush2.bf16.msra.mxu0 0
    %898 = vmatprep.subr.bf16.mxu0 0
    %899 = vmatpush2.bf16.msra.mxu0 0
    %900 = vmatprep.subr.bf16.mxu0 0
    %901 = vmatpush2.bf16.msra.mxu0 0
    %902 = vmatprep.subr.bf16.mxu0 0
    %903 = vmatpush2.bf16.msra.mxu0 0
    %904 = vmatprep.subr.bf16.mxu0 0
    %905 = vmatpush2.bf16.msra.mxu0 0
    %906 = vmatprep.subr.bf16.mxu0 0
    %907 = vmatpush2.bf16.msra.mxu0 0
    %908 = vmatprep.mubr.bf16.mxu0 0
    %909 = vmatmul.mubr.bf16.gmra.mxu0 %v703
    %v910 = vpop.f32.mrf.mxu0
    %v911 = vadd.f32 %v823, %v910
    %v912 = vpop.f32.mrf.mxu0
    %v913 = vpop.f32.mrf.mxu0
    %v914 = vpop.f32.mrf.mxu0
    %915 = vdwg.mxu0
    %s916 = scalar_lea.vmem %s4, 128
    %v917 = vld [vmem:[%s916] sm:$0xf]
    %v918 = vld [vmem:[%s916 + $0x4] sm:$0xf]
    %v919 = vld [vmem:[%s916 + $0x8] sm:$0xf]
    %v920 = vld [vmem:[%s916 + $0xc] sm:$0xf]
    %v921 = vld [vmem:[%s916 + $0x10] sm:$0xf]
    %v922 = vld [vmem:[%s916 + $0x14] sm:$0xf]
    %v923 = vld [vmem:[%s916 + $0x18] sm:$0xf]
    %v924 = vld [vmem:[%s916 + $0x1c] sm:$0xf]
    %v925 = vld [vmem:[%s916 + $0x20] sm:$0xf]
    %v926 = vld [vmem:[%s916 + $0x24] sm:$0xf]
    %v927 = vld [vmem:[%s916 + $0x28] sm:$0xf]
    %v928 = vld [vmem:[%s916 + $0x2c] sm:$0xf]
    %v929 = vld [vmem:[%s916 + $0x30] sm:$0xf]
    %v930 = vld [vmem:[%s916 + $0x34] sm:$0xf]
    %v931 = vld [vmem:[%s916 + $0x38] sm:$0xf]
    %v932 = vld [vmem:[%s916 + $0x3c] sm:$0xf]
    %v933 = vrot.slane %v703, 2
    %v951 = vunpack.c.l.b16 %v917
    %v952 = vunpack.c.l.b16 %v918
    %v953 = vunpack.c.l.b16 %v919
    %v954 = vunpack.c.l.b16 %v920
    %v955 = vunpack.c.l.b16 %v921
    %v956 = vunpack.c.l.b16 %v922
    %v957 = vunpack.c.l.b16 %v923
    %v958 = vunpack.c.l.b16 %v924
    %v959 = vunpack.c.l.b16 %v925
    %v960 = vunpack.c.l.b16 %v926
    %v961 = vunpack.c.l.b16 %v927
    %v962 = vunpack.c.l.b16 %v928
    %v963 = vunpack.c.l.b16 %v929
    %v964 = vunpack.c.l.b16 %v930
    %v965 = vunpack.c.l.b16 %v931
    %v966 = vunpack.c.l.b16 %v932
    %v967 = vpack.c.b16 %v952, %v951
    %v968 = vpack.c.b16 %v954, %v953
    %v969 = vpack.c.b16 %v956, %v955
    %v970 = vpack.c.b16 %v958, %v957
    %v971 = vpack.c.b16 %v960, %v959
    %v972 = vpack.c.b16 %v962, %v961
    %v973 = vpack.c.b16 %v964, %v963
    %v974 = vpack.c.b16 %v966, %v965
    %983 = vmatprep.subr.bf16.mxu0 0
    %984 = vmatpush1.bf16.msra.mxu0 %v974
    %985 = vmatprep.subr.bf16.mxu0 0
    %986 = vmatpush1.bf16.msra.mxu0 %v973
    %987 = vmatprep.subr.bf16.mxu0 0
    %988 = vmatpush1.bf16.msra.mxu0 %v972
    %989 = vmatprep.subr.bf16.mxu0 0
    %990 = vmatpush1.bf16.msra.mxu0 %v971
    %991 = vmatprep.subr.bf16.mxu0 0
    %992 = vmatpush1.bf16.msra.mxu0 %v970
    %993 = vmatprep.subr.bf16.mxu0 0
    %994 = vmatpush1.bf16.msra.mxu0 %v969
    %995 = vmatprep.subr.bf16.mxu0 0
    %996 = vmatpush1.bf16.msra.mxu0 %v968
    %997 = vmatprep.subr.bf16.mxu0 0
    %998 = vmatpush1.bf16.msra.mxu0 %v967
    %999 = vmatprep.subr.bf16.mxu0 0
    %1000 = vmatpush2.bf16.msra.mxu0 0
    %1001 = vmatprep.subr.bf16.mxu0 0
    %1002 = vmatpush2.bf16.msra.mxu0 0
    %1003 = vmatprep.subr.bf16.mxu0 0
    %1004 = vmatpush2.bf16.msra.mxu0 0
    %1005 = vmatprep.subr.bf16.mxu0 0
    %1006 = vmatpush2.bf16.msra.mxu0 0
    %1007 = vmatprep.subr.bf16.mxu0 0
    %1008 = vmatpush2.bf16.msra.mxu0 0
    %1009 = vmatprep.subr.bf16.mxu0 0
    %1010 = vmatpush2.bf16.msra.mxu0 0
    %1011 = vmatprep.subr.bf16.mxu0 0
    %1012 = vmatpush2.bf16.msra.mxu0 0
    %1013 = vmatprep.subr.bf16.mxu0 0
    %1014 = vmatpush2.bf16.msra.mxu0 0
    %1015 = vmatprep.mubr.bf16.mxu0 0
    %1016 = vmatmul.mubr.bf16.gmra.mxu0 %v933
    %v1017 = vpop.f32.mrf.mxu0
    %v1018 = vadd.f32 0.0, %v1017
    %v1019 = vpop.f32.mrf.mxu0
    %v1020 = vpop.f32.mrf.mxu0
    %v1021 = vpop.f32.mrf.mxu0
    %1022 = vdwg.mxu0
    %v1023 = vadd.f32 %v911, %v1018
    %s1024 = scalar_lea.vmem %s4, 192
    %v1025 = vld [vmem:[%s1024] sm:$0xf]
    %v1026 = vld [vmem:[%s1024 + $0x4] sm:$0xf]
    %v1027 = vld [vmem:[%s1024 + $0x8] sm:$0xf]
    %v1028 = vld [vmem:[%s1024 + $0xc] sm:$0xf]
    %v1029 = vld [vmem:[%s1024 + $0x10] sm:$0xf]
    %v1030 = vld [vmem:[%s1024 + $0x14] sm:$0xf]
    %v1031 = vld [vmem:[%s1024 + $0x18] sm:$0xf]
    %v1032 = vld [vmem:[%s1024 + $0x1c] sm:$0xf]
    %v1033 = vld [vmem:[%s1024 + $0x20] sm:$0xf]
    %v1034 = vld [vmem:[%s1024 + $0x24] sm:$0xf]
    %v1035 = vld [vmem:[%s1024 + $0x28] sm:$0xf]
    %v1036 = vld [vmem:[%s1024 + $0x2c] sm:$0xf]
    %v1037 = vld [vmem:[%s1024 + $0x30] sm:$0xf]
    %v1038 = vld [vmem:[%s1024 + $0x34] sm:$0xf]
    %v1039 = vld [vmem:[%s1024 + $0x38] sm:$0xf]
    %v1040 = vld [vmem:[%s1024 + $0x3c] sm:$0xf]
    %v1041 = vrot.slane %v703, 3
    %v1059 = vunpack.c.l.b16 %v1025
    %v1060 = vunpack.c.l.b16 %v1026
    %v1061 = vunpack.c.l.b16 %v1027
    %v1062 = vunpack.c.l.b16 %v1028
    %v1063 = vunpack.c.l.b16 %v1029
    %v1064 = vunpack.c.l.b16 %v1030
    %v1065 = vunpack.c.l.b16 %v1031
    %v1066 = vunpack.c.l.b16 %v1032
    %v1067 = vunpack.c.l.b16 %v1033
    %v1068 = vunpack.c.l.b16 %v1034
    %v1069 = vunpack.c.l.b16 %v1035
    %v1070 = vunpack.c.l.b16 %v1036
    %v1071 = vunpack.c.l.b16 %v1037
    %v1072 = vunpack.c.l.b16 %v1038
    %v1073 = vunpack.c.l.b16 %v1039
    %v1074 = vunpack.c.l.b16 %v1040
    %v1075 = vpack.c.b16 %v1060, %v1059
    %v1076 = vpack.c.b16 %v1062, %v1061
    %v1077 = vpack.c.b16 %v1064, %v1063
    %v1078 = vpack.c.b16 %v1066, %v1065
    %v1079 = vpack.c.b16 %v1068, %v1067
    %v1080 = vpack.c.b16 %v1070, %v1069
    %v1081 = vpack.c.b16 %v1072, %v1071
    %v1082 = vpack.c.b16 %v1074, %v1073
    %1091 = vmatprep.subr.bf16.mxu0 0
    %1092 = vmatpush1.bf16.msra.mxu0 %v1082
    %1093 = vmatprep.subr.bf16.mxu0 0
    %1094 = vmatpush1.bf16.msra.mxu0 %v1081
    %1095 = vmatprep.subr.bf16.mxu0 0
    %1096 = vmatpush1.bf16.msra.mxu0 %v1080
    %1097 = vmatprep.subr.bf16.mxu0 0
    %1098 = vmatpush1.bf16.msra.mxu0 %v1079
    %1099 = vmatprep.subr.bf16.mxu0 0
    %1100 = vmatpush1.bf16.msra.mxu0 %v1078
    %1101 = vmatprep.subr.bf16.mxu0 0
    %1102 = vmatpush1.bf16.msra.mxu0 %v1077
    %1103 = vmatprep.subr.bf16.mxu0 0
    %1104 = vmatpush1.bf16.msra.mxu0 %v1076
    %1105 = vmatprep.subr.bf16.mxu0 0
    %1106 = vmatpush1.bf16.msra.mxu0 %v1075
    %1107 = vmatprep.subr.bf16.mxu0 0
    %1108 = vmatpush2.bf16.msra.mxu0 0
    %1109 = vmatprep.subr.bf16.mxu0 0
    %1110 = vmatpush2.bf16.msra.mxu0 0
    %1111 = vmatprep.subr.bf16.mxu0 0
    %1112 = vmatpush2.bf16.msra.mxu0 0
    %1113 = vmatprep.subr.bf16.mxu0 0
    %1114 = vmatpush2.bf16.msra.mxu0 0
    %1115 = vmatprep.subr.bf16.mxu0 0
    %1116 = vmatpush2.bf16.msra.mxu0 0
    %1117 = vmatprep.subr.bf16.mxu0 0
    %1118 = vmatpush2.bf16.msra.mxu0 0
    %1119 = vmatprep.subr.bf16.mxu0 0
    %1120 = vmatpush2.bf16.msra.mxu0 0
    %1121 = vmatprep.subr.bf16.mxu0 0
    %1122 = vmatpush2.bf16.msra.mxu0 0
    %1123 = vmatprep.mubr.bf16.mxu0 0
    %1124 = vmatmul.mubr.bf16.gmra.mxu0 %v1041
    %v1125 = vpop.f32.mrf.mxu0
    %v1126 = vadd.f32 0.0, %v1125
    %v1127 = vpop.f32.mrf.mxu0
    %v1128 = vpop.f32.mrf.mxu0
    %v1129 = vpop.f32.mrf.mxu0
    %1130 = vdwg.mxu0
    %v1131 = vadd.f32 %v1023, %v1126
    %v1132 = vld [vmem:[%s5] sm:$0x1]
    %v1134 = vlaneseq
    %v1135 = vshrl.u32 %v1134, 7
    %v1136 = vsub.s32 0, %v1135
    %v1137 = vrot.slane %v1132, %v1136
    %v1139 = vadd.f32 %v1131, %v1137
    %1140 = vst [vmem:[#allocation2] sm:$0x3] %v1139
    // Predicated region
    $region26: #{dqn_forward.5} parent=1 // pred_check
      _
    $region27: #{dqn_forward.5} parent=1 // pred_check_branch
      %1142 = sbr.rel (0) target = $region29
    $region28: #{dqn_forward.5} parent=1 // pred_region
      %s1144 = ssub.s32 32, 32
      %1145 = vsyncadd [#allocation3], %s1144
      %s1147 = sshll.u32 [#allocation2], 4
      %s1148 = int_to_ptr.vmem [resolvable:$true] %s1147
      %1150 = dma.vmem_to_hbm [thread:$0]  %s1148, 32, %s6, [#allocation3]
    $region29: #{dqn_forward.5} parent=1 // pred_fallthru
      _
    // Predicated region
    $region30: #{dqn_forward.5} parent=1 // pred_check
      _
    $region31: #{dqn_forward.5} parent=1 // pred_check_branch
      %1152 = sbr.rel (0) target = $region33
    $region32: #{dqn_forward.5} parent=1 // pred_region
      %1153 = dma.done [#allocation3], 32
    $region33: #{dqn_forward.5} parent=1 // pred_fallthru
      _
    %1154 = vsyncpa [#allocation3], 1

</llo_original>
